<compile_context>
chip_gen: v5e
topology: v5e:2x2
jax: 0.10.0
libtpu: 0.0.40
codegen_flags: <defaults>
</compile_context>

<pallas_src>
import jax
import jax.numpy as jnp
from jax import lax
from jax.experimental import pallas as pl
from jax.experimental.pallas import tpu as pltpu

EPS = 1e-5     # nn.LayerNorm default eps
LANE = 128     # TPU lane width; preds are written as a lane-dense block


# ----------------------------- helpers (in-kernel) -----------------------------
def _layernorm(x, gamma, beta):
    mu = jnp.mean(x, axis=-1, keepdims=True)
    var = jnp.mean(jnp.square(x - mu), axis=-1, keepdims=True)
    return (x - mu) * lax.rsqrt(var + EPS) * gamma + beta


def _gelu_exact(x):
    # nn.GELU() default = exact erf-based GELU
    return 0.5 * x * (1.0 + lax.erf(x * 0.7071067811865475))


# ------------------------------ fused forward kernel ------------------------------
def fused_forward_kernel(
        flat_ref, imgw_ref,                        # K-pipelined image_proj matmul (bf16)
        imgb_ref, imgg_ref, imgbe_ref,             # image_proj bias + LayerNorm (f32)
        emb_ref, mask_ref,                         # padded text embeds + combined mask (f32)
        wqkv_ref, bqkv_ref, wo_ref, bo_ref,        # attention (fused QKV)
        g1_ref, be1_ref,                           # LN after attention
        w1_ref, b1_ref, w2_ref, b2_ref,            # FFN
        g2_ref, be2_ref,                           # LN after FFN
        rw1_ref, rb1_ref, rg_ref, rbe_ref,         # regressor linear1 + LN
        rw2_ref, rb2_ref,                          # regressor linear2 as (1,H) vector
        pred_ref,                                  # out: (B, LANE) f32, column 0 = preds
        acc_ref):                                  # scratch: (B, H) f32 image_proj acc
    k = pl.program_id(0)

    @pl.when(k == 0)
    def _():
        acc_ref[...] = jnp.zeros_like(acc_ref)

    # image_proj matmul chunk: bf16 operands, f32 accumulation on the MXU.
    acc_ref[...] += jnp.dot(flat_ref[...], imgw_ref[...],
                            preferred_element_type=jnp.float32)

    @pl.when(k == pl.num_programs(0) - 1)
    def _():
        B, H = acc_ref.shape
        Tp = emb_ref.shape[1]
        scale = 1.0 / (float(H) ** 0.5)

        # ---- image_proj epilogue: bias + LayerNorm + GELU (f32 elementwise) ----
        img = acc_ref[...] + imgb_ref[...]
        img = _gelu_exact(_layernorm(img, imgg_ref[...], imgbe_ref[...]))   # (B,H)

        # ---- inputs_embeds: row 0 <- image embed, rows 1..S text, rest padding ----
        row = lax.broadcasted_iota(jnp.int32, (1, Tp, 1), 1)
        e = emb_ref[...] + jnp.where(row == 0, img[:, None, :], 0.0)        # (B,Tp,H)
        mask = mask_ref[...]                                                # (B,Tp)

        # ---- synthetic single-layer transformer "vlm" ----
        x2 = e.reshape(B * Tp, H).astype(jnp.bfloat16)
        qkv = jnp.dot(x2, wqkv_ref[...], preferred_element_type=jnp.float32)
        qkv = qkv.reshape(B, Tp, 3 * H) + bqkv_ref[...]
        q = qkv[:, :, :H]
        kk = qkv[:, :, H:2 * H]
        v = qkv[:, :, 2 * H:]

        s = jnp.einsum('bqd,bkd->bqk', q.astype(jnp.bfloat16),
                       kk.astype(jnp.bfloat16),
                       preferred_element_type=jnp.float32) * scale
        s = s + (1.0 - mask[:, None, :]) * (-1e9)
        s_max = jnp.max(s, axis=-1, keepdims=True)
        p = jnp.exp(s - s_max)
        p = p * pl.reciprocal(jnp.sum(p, axis=-1, keepdims=True), approx=True)

        attn = jnp.einsum('bqk,bkd->bqd', p.astype(jnp.bfloat16),
                          v.astype(jnp.bfloat16),
                          preferred_element_type=jnp.float32)
        attn = jnp.dot(attn.reshape(B * Tp, H).astype(jnp.bfloat16),
                       wo_ref[...], preferred_element_type=jnp.float32)
        attn = attn.reshape(B, Tp, H) + bo_ref[...]

        h = _layernorm(e + attn, g1_ref[...], be1_ref[...])                 # (B,Tp,H)

        ff = jnp.dot(h.reshape(B * Tp, H).astype(jnp.bfloat16), w1_ref[...],
                     preferred_element_type=jnp.float32) + b1_ref[...]
        ff = _gelu_exact(ff)
        ff = jnp.dot(ff.astype(jnp.bfloat16), w2_ref[...],
                     preferred_element_type=jnp.float32)
        ff = ff.reshape(B, Tp, H) + b2_ref[...]

        out = _layernorm(h + ff, g2_ref[...], be2_ref[...])                 # (B,Tp,H)

        # ---- regressor fused on the cls (image) row ----
        cls = out[:, 0, :]                                                  # (B,H)
        r = jnp.dot(cls.astype(jnp.bfloat16), rw1_ref[...],
                    preferred_element_type=jnp.float32) + rb1_ref[...]
        r = jnp.maximum(_layernorm(r, rg_ref[...], rbe_ref[...]), 0.0)
        # H -> 1 projection on VPU (mul) + XLU (lane reduce), not an N=1 MXU matmul.
        preds = jnp.sum(r * rw2_ref[...], axis=-1, keepdims=True) + rb2_ref[...]
        # Lane-dense output store; wrapper slices column 0.
        pred_ref[...] = jnp.broadcast_to(preds, pred_ref.shape)


def _pick_tk(flat_size, max_tk=2048):
    """Largest multiple-of-128 divisor of flat_size (<= max_tk), or the full dim."""
    if flat_size <= max_tk:
        return flat_size            # single K block: no reduction grid needed
    best = 0
    for cand in range(128, max_tk + 1, 128):
        if flat_size % cand == 0:
            best = cand
    if best == 0:
        raise ValueError("flat_size must have a multiple-of-128 divisor <= max_tk")
    return best


def fused_forward(flat, emb, mask, params, *, max_tk=2048):
    B, F = flat.shape
    Tp = emb.shape[1]
    H = params['img_w'].shape[1]
    FFN = params['ffn_w1'].shape[1]
    tk = _pick_tk(F, max_tk)
    nk = F // tk

    # Deeper buffering on the weight stream only pays when the K grid is long.
    if nk >= 3:
        w_spec = pl.BlockSpec((tk, H), lambda k: (k, 0),
                              pipeline_mode=pl.Buffered(3))
    else:
        w_spec = pl.BlockSpec((tk, H), lambda k: (k, 0))

    const2 = lambda shape: pl.BlockSpec(shape, lambda k: (0, 0))
    const3 = lambda shape: pl.BlockSpec(shape, lambda k: (0, 0, 0))

    # TODO(synk): for v7x (2 TCs) a batch-parallel grid axis would help once B
    # grows; at B=2 it would just re-stream the image_proj weights per core.
    return pl.pallas_call(
        fused_forward_kernel,
        out_shape=jax.ShapeDtypeStruct((B, LANE), jnp.float32),
        grid_spec=pltpu.PrefetchScalarGridSpec(
            num_scalar_prefetch=0,
            grid=(nk,),
            in_specs=[
                pl.BlockSpec((B, tk), lambda k: (0, k)),    # flat images (bf16)
                w_spec,                                     # img_w (bf16)
                const2((1, H)), const2((1, H)), const2((1, H)),
                const3((B, Tp, H)),                         # padded embeds (f32)
                const2((B, Tp)),                            # padded mask (f32)
                const2((H, 3 * H)), const2((1, 3 * H)),     # wqkv, bqkv
                const2((H, H)), const2((1, H)),             # wo, bo
                const2((1, H)), const2((1, H)),             # ln1
                const2((H, FFN)), const2((1, FFN)),         # ffn_w1, ffn_b1
                const2((FFN, H)), const2((1, H)),           # ffn_w2, ffn_b2
                const2((1, H)), const2((1, H)),             # ln2
                const2((H, H)), const2((1, H)),             # reg_w1, reg_b1
                const2((1, H)), const2((1, H)),             # reg_ln
                const2((1, H)), const2((1, 1)),             # reg_w2 (vec), reg_b2
            ],
            out_specs=pl.BlockSpec((B, LANE), lambda k: (0, 0)),
            scratch_shapes=[pltpu.VMEM((B, H), jnp.float32)],
        ),
        compiler_params=pltpu.CompilerParams(
            dimension_semantics=("arbitrary",)),
    )(flat, params['img_w'],
      params['img_b'], params['img_ln_g'], params['img_ln_b'],
      emb, mask,
      params['wqkv'], params['bqkv'], params['wo'], params['bo'],
      params['ln1_g'], params['ln1_b'],
      params['ffn_w1'], params['ffn_b1'], params['ffn_w2'], params['ffn_b2'],
      params['ln2_g'], params['ln2_b'],
      params['reg_w1'], params['reg_b1'], params['reg_ln_g'], params['reg_ln_b'],
      params['reg_w2'], params['reg_b2'])


# ------------------------------- parameter setup -------------------------------
def init_params(key, *, hidden, flat_size, vocab, ffn):
    keys = jax.random.split(key, 12)
    H = hidden

    def lin(k, fi, fo, dtype=jnp.bfloat16):
        w = jax.random.normal(k, (fi, fo), jnp.float32) / jnp.sqrt(fi)
        return w.astype(dtype)                       # bf16 MXU operand weights

    return {
        # image_proj: Linear(flat, H) + LayerNorm(H) + GELU
        'img_w': lin(keys[0], flat_size, H),
        'img_b': jnp.zeros((1, H), jnp.float32),
        'img_ln_g': jnp.ones((1, H), jnp.float32),
        'img_ln_b': jnp.zeros((1, H), jnp.float32),
        # text embedding table (stand-in for vlm.get_input_embeddings())
        'embed': jax.random.normal(keys[1], (vocab, H), jnp.float32) * 0.02,
        # synthetic single-layer transformer "vlm" (fused QKV)
        'wqkv': lin(keys[2], H, 3 * H),
        'bqkv': jnp.zeros((1, 3 * H), jnp.float32),
        'wo': lin(keys[3], H, H),
        'bo': jnp.zeros((1, H), jnp.float32),
        'ln1_g': jnp.ones((1, H), jnp.float32),
        'ln1_b': jnp.zeros((1, H), jnp.float32),
        'ffn_w1': lin(keys[4], H, ffn),
        'ffn_b1': jnp.zeros((1, ffn), jnp.float32),
        'ffn_w2': lin(keys[5], ffn, H),
        'ffn_b2': jnp.zeros((1, H), jnp.float32),
        'ln2_g': jnp.ones((1, H), jnp.float32),
        'ln2_b': jnp.zeros((1, H), jnp.float32),
        # regressor: Linear(H,H) + LayerNorm + ReLU + Linear(H,1)
        'reg_w1': lin(keys[6], H, H),
        'reg_b1': jnp.zeros((1, H), jnp.float32),
        'reg_ln_g': jnp.ones((1, H), jnp.float32),
        'reg_ln_b': jnp.zeros((1, H), jnp.float32),
        'reg_w2': jax.random.normal(keys[7], (1, H), jnp.float32) / jnp.sqrt(H),
        'reg_b2': jnp.zeros((1, 1), jnp.float32),
    }


# ---------------------------------- forward ----------------------------------
def forward(params, pixel_values, input_ids, attention_mask, labels=None):
    B, S = input_ids.shape
    H = params['img_w'].shape[1]

    # flat_images = pixel_values.view(B, -1).half()  -> shipped as bf16
    flat = pixel_values.reshape(B, -1).astype(jnp.bfloat16)

    # embedding lookup is glue (gather), kept in plain JAX
    text = jnp.take(params['embed'], input_ids, axis=0).astype(jnp.float32)  # (B,S,H)

    # combined sequence length (image token + text), padded to a sublane-friendly
    # length; padded positions are masked out of the attention.
    T = S + 1
    Tp = max(8, -(-T // 8) * 8)
    emb = jnp.pad(text, ((0, 0), (1, Tp - T), (0, 0)))       # row 0 = image slot
    combined = jnp.concatenate(
        [jnp.ones((B, 1), attention_mask.dtype), attention_mask], axis=1)
    mask = jnp.pad(combined.astype(jnp.float32), ((0, 0), (0, Tp - T)))

    preds = fused_forward(flat, emb, mask, params)[:, 0]     # (B,)

    loss = None
    if labels is not None:
        d = preds - labels.astype(jnp.float32)
        ad = jnp.abs(d)
        # nn.HuberLoss() default: delta=1.0, mean reduction
        loss = jnp.mean(jnp.where(ad <= 1.0, 0.5 * d * d, ad - 0.5))
    return {'loss': loss, 'preds': preds}


# ------------------------------------ main ------------------------------------
if __name__ == "__main__":
    # Small shapes consistent with the module's forward.
    # Real module: image_resolution=112, num_channels=6 -> flat_size=75264
    # (= 588*128, handled by _pick_tk). Demo: res=16 -> flat_size=1536.
    B, S = 2, 8
    C, R = 6, 16
    HIDDEN, FFN, VOCAB = 128, 512, 256
    FLAT = C * R * R

    key = jax.random.PRNGKey(0)
    k_px, k_ids, k_lab, k_par = jax.random.split(key, 4)

    pixel_values = jax.random.normal(k_px, (B, C, R, R), jnp.float32)
    input_ids = jax.random.randint(k_ids, (B, S), 0, VOCAB, jnp.int32)
    attention_mask = jnp.ones((B, S), jnp.int32).at[1, S - 1].set(0)
    labels = jax.random.normal(k_lab, (B,), jnp.float32)

    params = init_params(k_par, hidden=HIDDEN, flat_size=FLAT,
                         vocab=VOCAB, ffn=FFN)

    out = forward(params, pixel_values, input_ids, attention_mask, labels)
    preds = jax.block_until_ready(out['preds'])
    loss = jax.block_until_ready(out['loss'])

    assert preds.shape == (B,) and preds.dtype == jnp.float32
    assert loss.shape == () and bool(jnp.isfinite(loss))
    print("KERNEL_OK")
</pallas_src>

<mosaic_0001>
module attributes {stable_mosaic.version = 11 : i64} {
  func.func @fused_forward_kernel(%arg0: i32, %arg1: memref<2x1536xbf16, #tpu.memory_space<vmem>>, %arg2: memref<1536x128xbf16, #tpu.memory_space<vmem>>, %arg3: memref<1x128xf32, #tpu.memory_space<vmem>>, %arg4: memref<1x128xf32, #tpu.memory_space<vmem>>, %arg5: memref<1x128xf32, #tpu.memory_space<vmem>>, %arg6: memref<2x16x128xf32, #tpu.memory_space<vmem>>, %arg7: memref<2x16xf32, #tpu.memory_space<vmem>>, %arg8: memref<128x384xbf16, #tpu.memory_space<vmem>>, %arg9: memref<1x384xf32, #tpu.memory_space<vmem>>, %arg10: memref<128x128xbf16, #tpu.memory_space<vmem>>, %arg11: memref<1x128xf32, #tpu.memory_space<vmem>>, %arg12: memref<1x128xf32, #tpu.memory_space<vmem>>, %arg13: memref<1x128xf32, #tpu.memory_space<vmem>>, %arg14: memref<128x512xbf16, #tpu.memory_space<vmem>>, %arg15: memref<1x512xf32, #tpu.memory_space<vmem>>, %arg16: memref<512x128xbf16, #tpu.memory_space<vmem>>, %arg17: memref<1x128xf32, #tpu.memory_space<vmem>>, %arg18: memref<1x128xf32, #tpu.memory_space<vmem>>, %arg19: memref<1x128xf32, #tpu.memory_space<vmem>>, %arg20: memref<128x128xbf16, #tpu.memory_space<vmem>>, %arg21: memref<1x128xf32, #tpu.memory_space<vmem>>, %arg22: memref<1x128xf32, #tpu.memory_space<vmem>>, %arg23: memref<1x128xf32, #tpu.memory_space<vmem>>, %arg24: memref<1x128xf32, #tpu.memory_space<vmem>>, %arg25: memref<1x1xf32, #tpu.memory_space<vmem>>, %arg26: memref<2x128xf32, #tpu.memory_space<vmem>>, %arg27: memref<2x128xf32, #tpu.memory_space<vmem>>) attributes {dimension_semantics = [#tpu.dimension_semantics<arbitrary>], iteration_bounds = array<i64: 1>, scalar_prefetch = 0 : i64, scratch_operands = 1 : i64, tpu.core_type = #tpu.core_type<tc>, window_params = [{transform_indices = @transform_0, window_bounds = array<i64: 2, 1536>}, {transform_indices = @transform_1, window_bounds = array<i64: 1536, 128>}, {pipeline_mode = #tpu.pipeline_mode<synchronous>, transform_indices = @transform_2, window_bounds = array<i64: 1, 128>}, {pipeline_mode = #tpu.pipeline_mode<synchronous>, transform_indices = @transform_3, window_bounds = array<i64: 1, 128>}, {pipeline_mode = #tpu.pipeline_mode<synchronous>, transform_indices = @transform_4, window_bounds = array<i64: 1, 128>}, {pipeline_mode = #tpu.pipeline_mode<synchronous>, transform_indices = @transform_5, window_bounds = array<i64: 2, 16, 128>}, {pipeline_mode = #tpu.pipeline_mode<synchronous>, transform_indices = @transform_6, window_bounds = array<i64: 2, 16>}, {pipeline_mode = #tpu.pipeline_mode<synchronous>, transform_indices = @transform_7, window_bounds = array<i64: 128, 384>}, {pipeline_mode = #tpu.pipeline_mode<synchronous>, transform_indices = @transform_8, window_bounds = array<i64: 1, 384>}, {pipeline_mode = #tpu.pipeline_mode<synchronous>, transform_indices = @transform_9, window_bounds = array<i64: 128, 128>}, {pipeline_mode = #tpu.pipeline_mode<synchronous>, transform_indices = @transform_10, window_bounds = array<i64: 1, 128>}, {pipeline_mode = #tpu.pipeline_mode<synchronous>, transform_indices = @transform_11, window_bounds = array<i64: 1, 128>}, {pipeline_mode = #tpu.pipeline_mode<synchronous>, transform_indices = @transform_12, window_bounds = array<i64: 1, 128>}, {pipeline_mode = #tpu.pipeline_mode<synchronous>, transform_indices = @transform_13, window_bounds = array<i64: 128, 512>}, {pipeline_mode = #tpu.pipeline_mode<synchronous>, transform_indices = @transform_14, window_bounds = array<i64: 1, 512>}, {pipeline_mode = #tpu.pipeline_mode<synchronous>, transform_indices = @transform_15, window_bounds = array<i64: 512, 128>}, {pipeline_mode = #tpu.pipeline_mode<synchronous>, transform_indices = @transform_16, window_bounds = array<i64: 1, 128>}, {pipeline_mode = #tpu.pipeline_mode<synchronous>, transform_indices = @transform_17, window_bounds = array<i64: 1, 128>}, {pipeline_mode = #tpu.pipeline_mode<synchronous>, transform_indices = @transform_18, window_bounds = array<i64: 1, 128>}, {pipeline_mode = #tpu.pipeline_mode<synchronous>, transform_indices = @transform_19, window_bounds = array<i64: 128, 128>}, {pipeline_mode = #tpu.pipeline_mode<synchronous>, transform_indices = @transform_20, window_bounds = array<i64: 1, 128>}, {pipeline_mode = #tpu.pipeline_mode<synchronous>, transform_indices = @transform_21, window_bounds = array<i64: 1, 128>}, {pipeline_mode = #tpu.pipeline_mode<synchronous>, transform_indices = @transform_22, window_bounds = array<i64: 1, 128>}, {pipeline_mode = #tpu.pipeline_mode<synchronous>, transform_indices = @transform_23, window_bounds = array<i64: 1, 128>}, {pipeline_mode = #tpu.pipeline_mode<synchronous>, transform_indices = @transform_24, window_bounds = array<i64: 1, 1>}, {pipeline_mode = #tpu.pipeline_mode<synchronous>, transform_indices = @transform_25, window_bounds = array<i64: 2, 128>}]} {
    %c0_i32 = arith.constant 0 : i32
    %0 = arith.cmpi eq, %arg0, %c0_i32 : i32
    %1 = arith.extui %0 : i1 to i32
    %c0_i32_0 = arith.constant 0 : i32
    %2 = arith.cmpi ne, %1, %c0_i32_0 : i32
    scf.if %2 {
      %cst_10 = arith.constant 0.000000e+00 : f32
      %12 = vector.broadcast %cst_10 : f32 to vector<2x128xf32>
      %c0_11 = arith.constant 0 : index
      %c0_12 = arith.constant 0 : index
      %13 = vector.load %arg27[%c0_11, %c0_12] : memref<2x128xf32, #tpu.memory_space<vmem>>, vector<2x128xf32>
      tpu.vector_store %arg27[%c0_11, %c0_12], %12 {strides = array<i32>} : memref<2x128xf32, #tpu.memory_space<vmem>>, vector<2x128xf32>,
    } else {
    }
    %c0 = arith.constant 0 : index
    %c0_1 = arith.constant 0 : index
    %3 = vector.load %arg27[%c0, %c0_1] : memref<2x128xf32, #tpu.memory_space<vmem>>, vector<2x128xf32>
    %c0_2 = arith.constant 0 : index
    %c0_3 = arith.constant 0 : index
    %4 = vector.load %arg1[%c0_2, %c0_3] : memref<2x1536xbf16, #tpu.memory_space<vmem>>, vector<2x1536xbf16>
    %c0_4 = arith.constant 0 : index
    %c0_5 = arith.constant 0 : index
    %5 = vector.load %arg2[%c0_4, %c0_5] : memref<1536x128xbf16, #tpu.memory_space<vmem>>, vector<1536x128xbf16>
    %cst = arith.constant dense<0.000000e+00> : vector<2x128xf32>
    %6 = tpu.matmul %4, %5, %cst {dimension_numbers = #tpu.dot_dimension_numbers<[1], [0], [0], [1], [0, 0, 1, 1], [], []>} : vector<2x1536xbf16>, vector<1536x128xbf16>, vector<2x128xf32> -> vector<2x128xf32>
    %7 = arith.addf %3, %6 : vector<2x128xf32>
    %c0_6 = arith.constant 0 : index
    %c0_7 = arith.constant 0 : index
    %8 = vector.load %arg27[%c0_6, %c0_7] : memref<2x128xf32, #tpu.memory_space<vmem>>, vector<2x128xf32>
    tpu.vector_store %arg27[%c0_6, %c0_7], %7 {strides = array<i32>} : memref<2x128xf32, #tpu.memory_space<vmem>>, vector<2x128xf32>,
    %c0_i32_8 = arith.constant 0 : i32
    %9 = arith.cmpi eq, %arg0, %c0_i32_8 : i32
    %10 = arith.extui %9 : i1 to i32
    %c0_i32_9 = arith.constant 0 : i32
    %11 = arith.cmpi ne, %10, %c0_i32_9 : i32
    scf.if %11 {
      %c0_10 = arith.constant 0 : index
      %c0_11 = arith.constant 0 : index
      %12 = vector.load %arg27[%c0_10, %c0_11] : memref<2x128xf32, #tpu.memory_space<vmem>>, vector<2x128xf32>
      %c0_12 = arith.constant 0 : index
      %c0_13 = arith.constant 0 : index
      %13 = vector.load %arg3[%c0_12, %c0_13] : memref<1x128xf32, #tpu.memory_space<vmem>>, vector<1x128xf32>
      %14 = vector.broadcast %13 : vector<1x128xf32> to vector<2x128xf32>
      %15 = arith.addf %12, %14 : vector<2x128xf32>
      %c0_14 = arith.constant 0 : index
      %c0_15 = arith.constant 0 : index
      %16 = vector.load %arg4[%c0_14, %c0_15] : memref<1x128xf32, #tpu.memory_space<vmem>>, vector<1x128xf32>
      %c0_16 = arith.constant 0 : index
      %c0_17 = arith.constant 0 : index
      %17 = vector.load %arg5[%c0_16, %c0_17] : memref<1x128xf32, #tpu.memory_space<vmem>>, vector<1x128xf32>
      %cst_18 = arith.constant dense<0.000000e+00> : vector<2xf32>
      %18 = vector.multi_reduction <add>, %15, %cst_18 [1] : vector<2x128xf32> to vector<2xf32>
      %19 = vector.shape_cast %18 : vector<2xf32> to vector<2x1xf32>
      %cst_19 = arith.constant 1.280000e+02 : f32
      %20 = vector.broadcast %cst_19 : f32 to vector<2x1xf32>
      %21 = arith.divf %19, %20 : vector<2x1xf32>
      %22 = vector.broadcast %21 : vector<2x1xf32> to vector<2x128xf32>
      %23 = arith.subf %15, %22 : vector<2x128xf32>
      %24 = arith.mulf %23, %23 : vector<2x128xf32>
      %cst_20 = arith.constant dense<0.000000e+00> : vector<2xf32>
      %25 = vector.multi_reduction <add>, %24, %cst_20 [1] : vector<2x128xf32> to vector<2xf32>
      %26 = vector.shape_cast %25 : vector<2xf32> to vector<2x1xf32>
      %cst_21 = arith.constant 1.280000e+02 : f32
      %27 = vector.broadcast %cst_21 : f32 to vector<2x1xf32>
      %28 = arith.divf %26, %27 : vector<2x1xf32>
      %29 = vector.broadcast %21 : vector<2x1xf32> to vector<2x128xf32>
      %30 = arith.subf %15, %29 : vector<2x128xf32>
      %cst_22 = arith.constant 9.99999974E-6 : f32
      %31 = vector.broadcast %cst_22 : f32 to vector<2x1xf32>
      %32 = arith.addf %28, %31 : vector<2x1xf32>
      %33 = math.rsqrt %32 : vector<2x1xf32>
      %34 = vector.broadcast %33 : vector<2x1xf32> to vector<2x128xf32>
      %35 = arith.mulf %30, %34 : vector<2x128xf32>
      %36 = vector.broadcast %16 : vector<1x128xf32> to vector<2x128xf32>
      %37 = arith.mulf %35, %36 : vector<2x128xf32>
      %38 = vector.broadcast %17 : vector<1x128xf32> to vector<2x128xf32>
      %39 = arith.addf %37, %38 : vector<2x128xf32>
      %cst_23 = arith.constant 5.000000e-01 : f32
      %40 = vector.broadcast %cst_23 : f32 to vector<2x128xf32>
      %41 = arith.mulf %40, %39 : vector<2x128xf32>
      %cst_24 = arith.constant 0.707106769 : f32
      %42 = vector.broadcast %cst_24 : f32 to vector<2x128xf32>
      %43 = arith.mulf %39, %42 : vector<2x128xf32>
      %44 = math.erf %43 : vector<2x128xf32>
      %cst_25 = arith.constant 1.000000e+00 : f32
      %45 = vector.broadcast %cst_25 : f32 to vector<2x128xf32>
      %46 = arith.addf %45, %44 : vector<2x128xf32>
      %47 = arith.mulf %41, %46 : vector<2x128xf32>
      %48 = tpu.iota {dimensions = array<i32: 1>} : vector<1x16x1xi32>
      %c0_26 = arith.constant 0 : index
      %c0_27 = arith.constant 0 : index
      %c0_28 = arith.constant 0 : index
      %49 = vector.load %arg6[%c0_26, %c0_27, %c0_28] : memref<2x16x128xf32, #tpu.memory_space<vmem>>, vector<2x16x128xf32>
      %c0_i32_29 = arith.constant 0 : i32
      %50 = vector.broadcast %c0_i32_29 : i32 to vector<1x16x1xi32>
      %51 = arith.cmpi eq, %48, %50 : vector<1x16x1xi32>
      %52 = vector.shape_cast %47 : vector<2x128xf32> to vector<2x1x128xf32>
      %cst_30 = arith.constant 0.000000e+00 : f32
      %53 = vector.shape_cast %51 : vector<1x16x1xi1> to vector<1x16x1xi1>
      %54 = vector.broadcast %53 : vector<1x16x1xi1> to vector<2x16x128xi1>
      %55 = vector.shape_cast %52 : vector<2x1x128xf32> to vector<2x1x128xf32>
      %56 = vector.broadcast %55 : vector<2x1x128xf32> to vector<2x16x128xf32>
      %57 = vector.broadcast %cst_30 : f32 to vector<2x16x128xf32>
      %58 = arith.select %54, %56, %57 : vector<2x16x128xi1>, vector<2x16x128xf32>
      %59 = arith.addf %49, %58 : vector<2x16x128xf32>
      %c0_31 = arith.constant 0 : index
      %c0_32 = arith.constant 0 : index
      %60 = vector.load %arg7[%c0_31, %c0_32] : memref<2x16xf32, #tpu.memory_space<vmem>>, vector<2x16xf32>
      %61 = vector.shape_cast %59 : vector<2x16x128xf32> to vector<32x128xf32>
      %62 = arith.truncf %61 : vector<32x128xf32> to vector<32x128xbf16>
      %c0_33 = arith.constant 0 : index
      %c0_34 = arith.constant 0 : index
      %63 = vector.load %arg8[%c0_33, %c0_34] : memref<128x384xbf16, #tpu.memory_space<vmem>>, vector<128x384xbf16>
      %cst_35 = arith.constant dense<0.000000e+00> : vector<32x384xf32>
      %64 = tpu.matmul %62, %63, %cst_35 {dimension_numbers = #tpu.dot_dimension_numbers<[1], [0], [0], [1], [0, 0, 1, 1], [], []>} : vector<32x128xbf16>, vector<128x384xbf16>, vector<32x384xf32> -> vector<32x384xf32>
      %65 = vector.shape_cast %64 : vector<32x384xf32> to vector<2x16x384xf32>
      %c0_36 = arith.constant 0 : index
      %c0_37 = arith.constant 0 : index
      %66 = vector.load %arg9[%c0_36, %c0_37] : memref<1x384xf32, #tpu.memory_space<vmem>>, vector<1x384xf32>
      %67 = vector.shape_cast %66 : vector<1x384xf32> to vector<1x1x384xf32>
      %68 = vector.broadcast %67 : vector<1x1x384xf32> to vector<2x16x384xf32>
      %69 = arith.addf %65, %68 : vector<2x16x384xf32>
      %70 = vector.extract_strided_slice %69 {offsets = [0, 0, 0], sizes = [2, 16, 128], strides = [1, 1, 1]} : vector<2x16x384xf32> to vector<2x16x128xf32>
      %71 = vector.extract_strided_slice %69 {offsets = [0, 0, 128], sizes = [2, 16, 128], strides = [1, 1, 1]} : vector<2x16x384xf32> to vector<2x16x128xf32>
      %72 = vector.extract_strided_slice %69 {offsets = [0, 0, 256], sizes = [2, 16, 128], strides = [1, 1, 1]} : vector<2x16x384xf32> to vector<2x16x128xf32>
      %73 = arith.truncf %70 : vector<2x16x128xf32> to vector<2x16x128xbf16>
      %74 = arith.truncf %71 : vector<2x16x128xf32> to vector<2x16x128xbf16>
      "tpu.trace_start"() <{level = 10 : i32, message = "bqd,bkd->bqk"}> : () -> ()
      %cst_38 = arith.constant dense<0.000000e+00> : vector<2x16x16xf32>
      %75 = tpu.matmul %73, %74, %cst_38 {dimension_numbers = #tpu.dot_dimension_numbers<[2], [2], [1], [1], [0, 0, 0, 1, 1, 1], [0], [0]>} : vector<2x16x128xbf16>, vector<2x16x128xbf16>, vector<2x16x16xf32> -> vector<2x16x16xf32>
      "tpu.trace_stop"() : () -> ()
      %cst_39 = arith.constant 0.0883883461 : f32
      %76 = vector.broadcast %cst_39 : f32 to vector<2x16x16xf32>
      %77 = arith.mulf %75, %76 : vector<2x16x16xf32>
      %78 = vector.shape_cast %60 : vector<2x16xf32> to vector<2x1x16xf32>
      %cst_40 = arith.constant 1.000000e+00 : f32
      %79 = vector.broadcast %cst_40 : f32 to vector<2x1x16xf32>
      %80 = arith.subf %79, %78 : vector<2x1x16xf32>
      %cst_41 = arith.constant -1.000000e+09 : f32
      %81 = vector.broadcast %cst_41 : f32 to vector<2x1x16xf32>
      %82 = arith.mulf %80, %81 : vector<2x1x16xf32>
      %83 = vector.broadcast %82 : vector<2x1x16xf32> to vector<2x16x16xf32>
      %84 = arith.addf %77, %83 : vector<2x16x16xf32>
      %cst_42 = arith.constant dense<0xFF800000> : vector<2x16xf32>
      %85 = vector.multi_reduction <maximumf>, %84, %cst_42 [2] : vector<2x16x16xf32> to vector<2x16xf32>
      %86 = vector.shape_cast %85 : vector<2x16xf32> to vector<2x16x1xf32>
      %87 = vector.broadcast %86 : vector<2x16x1xf32> to vector<2x16x16xf32>
      %88 = arith.subf %84, %87 : vector<2x16x16xf32>
      %89 = math.exp %88 : vector<2x16x16xf32>
      %cst_43 = arith.constant dense<0.000000e+00> : vector<2x16xf32>
      %90 = vector.multi_reduction <add>, %89, %cst_43 [2] : vector<2x16x16xf32> to vector<2x16xf32>
      %91 = vector.shape_cast %90 : vector<2x16xf32> to vector<2x16x1xf32>
      %92 = tpu.reciprocal %91 {approx = true} : vector<2x16x1xf32> -> vector<2x16x1xf32>
      %93 = vector.broadcast %92 : vector<2x16x1xf32> to vector<2x16x16xf32>
      %94 = arith.mulf %89, %93 : vector<2x16x16xf32>
      %95 = arith.truncf %94 : vector<2x16x16xf32> to vector<2x16x16xbf16>
      %96 = arith.truncf %72 : vector<2x16x128xf32> to vector<2x16x128xbf16>
      "tpu.trace_start"() <{level = 10 : i32, message = "bqk,bkd->bqd"}> : () -> ()
      %cst_44 = arith.constant dense<0.000000e+00> : vector<2x16x128xf32>
      %97 = tpu.matmul %95, %96, %cst_44 {dimension_numbers = #tpu.dot_dimension_numbers<[2], [1], [1], [2], [0, 0, 0, 1, 1, 2], [0], [0]>} : vector<2x16x16xbf16>, vector<2x16x128xbf16>, vector<2x16x128xf32> -> vector<2x16x128xf32>
      "tpu.trace_stop"() : () -> ()
      %98 = vector.shape_cast %97 : vector<2x16x128xf32> to vector<32x128xf32>
      %99 = arith.truncf %98 : vector<32x128xf32> to vector<32x128xbf16>
      %c0_45 = arith.constant 0 : index
      %c0_46 = arith.constant 0 : index
      %100 = vector.load %arg10[%c0_45, %c0_46] : memref<128x128xbf16, #tpu.memory_space<vmem>>, vector<128x128xbf16>
      %cst_47 = arith.constant dense<0.000000e+00> : vector<32x128xf32>
      %101 = tpu.matmul %99, %100, %cst_47 {dimension_numbers = #tpu.dot_dimension_numbers<[1], [0], [0], [1], [0, 0, 1, 1], [], []>} : vector<32x128xbf16>, vector<128x128xbf16>, vector<32x128xf32> -> vector<32x128xf32>
      %102 = vector.shape_cast %101 : vector<32x128xf32> to vector<2x16x128xf32>
      %c0_48 = arith.constant 0 : index
      %c0_49 = arith.constant 0 : index
      %103 = vector.load %arg11[%c0_48, %c0_49] : memref<1x128xf32, #tpu.memory_space<vmem>>, vector<1x128xf32>
      %104 = vector.shape_cast %103 : vector<1x128xf32> to vector<1x1x128xf32>
      %105 = vector.broadcast %104 : vector<1x1x128xf32> to vector<2x16x128xf32>
      %106 = arith.addf %102, %105 : vector<2x16x128xf32>
      %107 = arith.addf %59, %106 : vector<2x16x128xf32>
      %c0_50 = arith.constant 0 : index
      %c0_51 = arith.constant 0 : index
      %108 = vector.load %arg12[%c0_50, %c0_51] : memref<1x128xf32, #tpu.memory_space<vmem>>, vector<1x128xf32>
      %c0_52 = arith.constant 0 : index
      %c0_53 = arith.constant 0 : index
      %109 = vector.load %arg13[%c0_52, %c0_53] : memref<1x128xf32, #tpu.memory_space<vmem>>, vector<1x128xf32>
      %cst_54 = arith.constant dense<0.000000e+00> : vector<2x16xf32>
      %110 = vector.multi_reduction <add>, %107, %cst_54 [2] : vector<2x16x128xf32> to vector<2x16xf32>
      %111 = vector.shape_cast %110 : vector<2x16xf32> to vector<2x16x1xf32>
      %cst_55 = arith.constant 1.280000e+02 : f32
      %112 = vector.broadcast %cst_55 : f32 to vector<2x16x1xf32>
      %113 = arith.divf %111, %112 : vector<2x16x1xf32>
      %114 = vector.broadcast %113 : vector<2x16x1xf32> to vector<2x16x128xf32>
      %115 = arith.subf %107, %114 : vector<2x16x128xf32>
      %116 = arith.mulf %115, %115 : vector<2x16x128xf32>
      %cst_56 = arith.constant dense<0.000000e+00> : vector<2x16xf32>
      %117 = vector.multi_reduction <add>, %116, %cst_56 [2] : vector<2x16x128xf32> to vector<2x16xf32>
      %118 = vector.shape_cast %117 : vector<2x16xf32> to vector<2x16x1xf32>
      %cst_57 = arith.constant 1.280000e+02 : f32
      %119 = vector.broadcast %cst_57 : f32 to vector<2x16x1xf32>
      %120 = arith.divf %118, %119 : vector<2x16x1xf32>
      %121 = vector.broadcast %113 : vector<2x16x1xf32> to vector<2x16x128xf32>
      %122 = arith.subf %107, %121 : vector<2x16x128xf32>
      %cst_58 = arith.constant 9.99999974E-6 : f32
      %123 = vector.broadcast %cst_58 : f32 to vector<2x16x1xf32>
      %124 = arith.addf %120, %123 : vector<2x16x1xf32>
      %125 = math.rsqrt %124 : vector<2x16x1xf32>
      %126 = vector.broadcast %125 : vector<2x16x1xf32> to vector<2x16x128xf32>
      %127 = arith.mulf %122, %126 : vector<2x16x128xf32>
      %128 = vector.shape_cast %108 : vector<1x128xf32> to vector<1x1x128xf32>
      %129 = vector.broadcast %128 : vector<1x1x128xf32> to vector<2x16x128xf32>
      %130 = arith.mulf %127, %129 : vector<2x16x128xf32>
      %131 = vector.shape_cast %109 : vector<1x128xf32> to vector<1x1x128xf32>
      %132 = vector.broadcast %131 : vector<1x1x128xf32> to vector<2x16x128xf32>
      %133 = arith.addf %130, %132 : vector<2x16x128xf32>
      %134 = vector.shape_cast %133 : vector<2x16x128xf32> to vector<32x128xf32>
      %135 = arith.truncf %134 : vector<32x128xf32> to vector<32x128xbf16>
      %c0_59 = arith.constant 0 : index
      %c0_60 = arith.constant 0 : index
      %136 = vector.load %arg14[%c0_59, %c0_60] : memref<128x512xbf16, #tpu.memory_space<vmem>>, vector<128x512xbf16>
      %cst_61 = arith.constant dense<0.000000e+00> : vector<32x512xf32>
      %137 = tpu.matmul %135, %136, %cst_61 {dimension_numbers = #tpu.dot_dimension_numbers<[1], [0], [0], [1], [0, 0, 1, 1], [], []>} : vector<32x128xbf16>, vector<128x512xbf16>, vector<32x512xf32> -> vector<32x512xf32>
      %c0_62 = arith.constant 0 : index
      %c0_63 = arith.constant 0 : index
      %138 = vector.load %arg15[%c0_62, %c0_63] : memref<1x512xf32, #tpu.memory_space<vmem>>, vector<1x512xf32>
      %139 = vector.broadcast %138 : vector<1x512xf32> to vector<32x512xf32>
      %140 = arith.addf %137, %139 : vector<32x512xf32>
      %cst_64 = arith.constant 5.000000e-01 : f32
      %141 = vector.broadcast %cst_64 : f32 to vector<32x512xf32>
      %142 = arith.mulf %141, %140 : vector<32x512xf32>
      %cst_65 = arith.constant 0.707106769 : f32
      %143 = vector.broadcast %cst_65 : f32 to vector<32x512xf32>
      %144 = arith.mulf %140, %143 : vector<32x512xf32>
      %145 = math.erf %144 : vector<32x512xf32>
      %cst_66 = arith.constant 1.000000e+00 : f32
      %146 = vector.broadcast %cst_66 : f32 to vector<32x512xf32>
      %147 = arith.addf %146, %145 : vector<32x512xf32>
      %148 = arith.mulf %142, %147 : vector<32x512xf32>
      %149 = arith.truncf %148 : vector<32x512xf32> to vector<32x512xbf16>
      %c0_67 = arith.constant 0 : index
      %c0_68 = arith.constant 0 : index
      %150 = vector.load %arg16[%c0_67, %c0_68] : memref<512x128xbf16, #tpu.memory_space<vmem>>, vector<512x128xbf16>
      %cst_69 = arith.constant dense<0.000000e+00> : vector<32x128xf32>
      %151 = tpu.matmul %149, %150, %cst_69 {dimension_numbers = #tpu.dot_dimension_numbers<[1], [0], [0], [1], [0, 0, 1, 1], [], []>} : vector<32x512xbf16>, vector<512x128xbf16>, vector<32x128xf32> -> vector<32x128xf32>
      %152 = vector.shape_cast %151 : vector<32x128xf32> to vector<2x16x128xf32>
      %c0_70 = arith.constant 0 : index
      %c0_71 = arith.constant 0 : index
      %153 = vector.load %arg17[%c0_70, %c0_71] : memref<1x128xf32, #tpu.memory_space<vmem>>, vector<1x128xf32>
      %154 = vector.shape_cast %153 : vector<1x128xf32> to vector<1x1x128xf32>
      %155 = vector.broadcast %154 : vector<1x1x128xf32> to vector<2x16x128xf32>
      %156 = arith.addf %152, %155 : vector<2x16x128xf32>
      %157 = arith.addf %133, %156 : vector<2x16x128xf32>
      %c0_72 = arith.constant 0 : index
      %c0_73 = arith.constant 0 : index
      %158 = vector.load %arg18[%c0_72, %c0_73] : memref<1x128xf32, #tpu.memory_space<vmem>>, vector<1x128xf32>
      %c0_74 = arith.constant 0 : index
      %c0_75 = arith.constant 0 : index
      %159 = vector.load %arg19[%c0_74, %c0_75] : memref<1x128xf32, #tpu.memory_space<vmem>>, vector<1x128xf32>
      %cst_76 = arith.constant dense<0.000000e+00> : vector<2x16xf32>
      %160 = vector.multi_reduction <add>, %157, %cst_76 [2] : vector<2x16x128xf32> to vector<2x16xf32>
      %161 = vector.shape_cast %160 : vector<2x16xf32> to vector<2x16x1xf32>
      %cst_77 = arith.constant 1.280000e+02 : f32
      %162 = vector.broadcast %cst_77 : f32 to vector<2x16x1xf32>
      %163 = arith.divf %161, %162 : vector<2x16x1xf32>
      %164 = vector.broadcast %163 : vector<2x16x1xf32> to vector<2x16x128xf32>
      %165 = arith.subf %157, %164 : vector<2x16x128xf32>
      %166 = arith.mulf %165, %165 : vector<2x16x128xf32>
      %cst_78 = arith.constant dense<0.000000e+00> : vector<2x16xf32>
      %167 = vector.multi_reduction <add>, %166, %cst_78 [2] : vector<2x16x128xf32> to vector<2x16xf32>
      %168 = vector.shape_cast %167 : vector<2x16xf32> to vector<2x16x1xf32>
      %cst_79 = arith.constant 1.280000e+02 : f32
      %169 = vector.broadcast %cst_79 : f32 to vector<2x16x1xf32>
      %170 = arith.divf %168, %169 : vector<2x16x1xf32>
      %171 = vector.broadcast %163 : vector<2x16x1xf32> to vector<2x16x128xf32>
      %172 = arith.subf %157, %171 : vector<2x16x128xf32>
      %cst_80 = arith.constant 9.99999974E-6 : f32
      %173 = vector.broadcast %cst_80 : f32 to vector<2x16x1xf32>
      %174 = arith.addf %170, %173 : vector<2x16x1xf32>
      %175 = math.rsqrt %174 : vector<2x16x1xf32>
      %176 = vector.broadcast %175 : vector<2x16x1xf32> to vector<2x16x128xf32>
      %177 = arith.mulf %172, %176 : vector<2x16x128xf32>
      %178 = vector.shape_cast %158 : vector<1x128xf32> to vector<1x1x128xf32>
      %179 = vector.broadcast %178 : vector<1x1x128xf32> to vector<2x16x128xf32>
      %180 = arith.mulf %177, %179 : vector<2x16x128xf32>
      %181 = vector.shape_cast %159 : vector<1x128xf32> to vector<1x1x128xf32>
      %182 = vector.broadcast %181 : vector<1x1x128xf32> to vector<2x16x128xf32>
      %183 = arith.addf %180, %182 : vector<2x16x128xf32>
      %184 = vector.extract_strided_slice %183 {offsets = [0, 0, 0], sizes = [2, 1, 128], strides = [1, 1, 1]} : vector<2x16x128xf32> to vector<2x1x128xf32>
      %185 = vector.shape_cast %184 : vector<2x1x128xf32> to vector<2x128xf32>
      %186 = arith.truncf %185 : vector<2x128xf32> to vector<2x128xbf16>
      %c0_81 = arith.constant 0 : index
      %c0_82 = arith.constant 0 : index
      %187 = vector.load %arg20[%c0_81, %c0_82] : memref<128x128xbf16, #tpu.memory_space<vmem>>, vector<128x128xbf16>
      %cst_83 = arith.constant dense<0.000000e+00> : vector<2x128xf32>
      %188 = tpu.matmul %186, %187, %cst_83 {dimension_numbers = #tpu.dot_dimension_numbers<[1], [0], [0], [1], [0, 0, 1, 1], [], []>} : vector<2x128xbf16>, vector<128x128xbf16>, vector<2x128xf32> -> vector<2x128xf32>
      %c0_84 = arith.constant 0 : index
      %c0_85 = arith.constant 0 : index
      %189 = vector.load %arg21[%c0_84, %c0_85] : memref<1x128xf32, #tpu.memory_space<vmem>>, vector<1x128xf32>
      %190 = vector.broadcast %189 : vector<1x128xf32> to vector<2x128xf32>
      %191 = arith.addf %188, %190 : vector<2x128xf32>
      %c0_86 = arith.constant 0 : index
      %c0_87 = arith.constant 0 : index
      %192 = vector.load %arg22[%c0_86, %c0_87] : memref<1x128xf32, #tpu.memory_space<vmem>>, vector<1x128xf32>
      %c0_88 = arith.constant 0 : index
      %c0_89 = arith.constant 0 : index
      %193 = vector.load %arg23[%c0_88, %c0_89] : memref<1x128xf32, #tpu.memory_space<vmem>>, vector<1x128xf32>
      %cst_90 = arith.constant dense<0.000000e+00> : vector<2xf32>
      %194 = vector.multi_reduction <add>, %191, %cst_90 [1] : vector<2x128xf32> to vector<2xf32>
      %195 = vector.shape_cast %194 : vector<2xf32> to vector<2x1xf32>
      %cst_91 = arith.constant 1.280000e+02 : f32
      %196 = vector.broadcast %cst_91 : f32 to vector<2x1xf32>
      %197 = arith.divf %195, %196 : vector<2x1xf32>
      %198 = vector.broadcast %197 : vector<2x1xf32> to vector<2x128xf32>
      %199 = arith.subf %191, %198 : vector<2x128xf32>
      %200 = arith.mulf %199, %199 : vector<2x128xf32>
      %cst_92 = arith.constant dense<0.000000e+00> : vector<2xf32>
      %201 = vector.multi_reduction <add>, %200, %cst_92 [1] : vector<2x128xf32> to vector<2xf32>
      %202 = vector.shape_cast %201 : vector<2xf32> to vector<2x1xf32>
      %cst_93 = arith.constant 1.280000e+02 : f32
      %203 = vector.broadcast %cst_93 : f32 to vector<2x1xf32>
      %204 = arith.divf %202, %203 : vector<2x1xf32>
      %205 = vector.broadcast %197 : vector<2x1xf32> to vector<2x128xf32>
      %206 = arith.subf %191, %205 : vector<2x128xf32>
      %cst_94 = arith.constant 9.99999974E-6 : f32
      %207 = vector.broadcast %cst_94 : f32 to vector<2x1xf32>
      %208 = arith.addf %204, %207 : vector<2x1xf32>
      %209 = math.rsqrt %208 : vector<2x1xf32>
      %210 = vector.broadcast %209 : vector<2x1xf32> to vector<2x128xf32>
      %211 = arith.mulf %206, %210 : vector<2x128xf32>
      %212 = vector.broadcast %192 : vector<1x128xf32> to vector<2x128xf32>
      %213 = arith.mulf %211, %212 : vector<2x128xf32>
      %214 = vector.broadcast %193 : vector<1x128xf32> to vector<2x128xf32>
      %215 = arith.addf %213, %214 : vector<2x128xf32>
      %cst_95 = arith.constant 0.000000e+00 : f32
      %216 = vector.broadcast %cst_95 : f32 to vector<2x128xf32>
      %217 = arith.maximumf %215, %216 : vector<2x128xf32>
      %c0_96 = arith.constant 0 : index
      %c0_97 = arith.constant 0 : index
      %218 = vector.load %arg24[%c0_96, %c0_97] : memref<1x128xf32, #tpu.memory_space<vmem>>, vector<1x128xf32>
      %219 = vector.broadcast %218 : vector<1x128xf32> to vector<2x128xf32>
      %220 = arith.mulf %217, %219 : vector<2x128xf32>
      %cst_98 = arith.constant dense<0.000000e+00> : vector<2xf32>
      %221 = vector.multi_reduction <add>, %220, %cst_98 [1] : vector<2x128xf32> to vector<2xf32>
      %222 = vector.shape_cast %221 : vector<2xf32> to vector<2x1xf32>
      %c0_99 = arith.constant 0 : index
      %c0_100 = arith.constant 0 : index
      %223 = vector.load %arg25[%c0_99, %c0_100] : memref<1x1xf32, #tpu.memory_space<vmem>>, vector<1x1xf32>
      %224 = vector.broadcast %223 : vector<1x1xf32> to vector<2x1xf32>
      %225 = arith.addf %222, %224 : vector<2x1xf32>
      %226 = vector.shape_cast %225 : vector<2x1xf32> to vector<2x1xf32>
      %227 = vector.broadcast %226 : vector<2x1xf32> to vector<2x128xf32>
      %c0_101 = arith.constant 0 : index
      %c0_102 = arith.constant 0 : index
      %228 = vector.load %arg26[%c0_101, %c0_102] : memref<2x128xf32, #tpu.memory_space<vmem>>, vector<2x128xf32>
      tpu.vector_store %arg26[%c0_101, %c0_102], %227 {strides = array<i32>} : memref<2x128xf32, #tpu.memory_space<vmem>>, vector<2x128xf32>,
    } else {
    }
    return
  }
  func.func @transform_0(%arg0: i32) -> (i32, i32) {
    %c0_i32 = arith.constant 0 : i32
    %c0_i32_0 = arith.constant 0 : i32
    return %c0_i32, %arg0 : i32, i32
  }
  func.func @transform_1(%arg0: i32) -> (i32, i32) {
    %c0_i32 = arith.constant 0 : i32
    %c0_i32_0 = arith.constant 0 : i32
    return %arg0, %c0_i32 : i32, i32
  }
  func.func @transform_2(%arg0: i32) -> (i32, i32) {
    %c0_i32 = arith.constant 0 : i32
    %c0_i32_0 = arith.constant 0 : i32
    %c0_i32_1 = arith.constant 0 : i32
    return %c0_i32, %c0_i32_0 : i32, i32
  }
  func.func @transform_3(%arg0: i32) -> (i32, i32) {
    %c0_i32 = arith.constant 0 : i32
    %c0_i32_0 = arith.constant 0 : i32
    %c0_i32_1 = arith.constant 0 : i32
    return %c0_i32, %c0_i32_0 : i32, i32
  }
  func.func @transform_4(%arg0: i32) -> (i32, i32) {
    %c0_i32 = arith.constant 0 : i32
    %c0_i32_0 = arith.constant 0 : i32
    %c0_i32_1 = arith.constant 0 : i32
    return %c0_i32, %c0_i32_0 : i32, i32
  }
  func.func @transform_5(%arg0: i32) -> (i32, i32, i32) {
    %c0_i32 = arith.constant 0 : i32
    %c0_i32_0 = arith.constant 0 : i32
    %c0_i32_1 = arith.constant 0 : i32
    %c0_i32_2 = arith.constant 0 : i32
    return %c0_i32, %c0_i32_0, %c0_i32_1 : i32, i32, i32
  }
  func.func @transform_6(%arg0: i32) -> (i32, i32) {
    %c0_i32 = arith.constant 0 : i32
    %c0_i32_0 = arith.constant 0 : i32
    %c0_i32_1 = arith.constant 0 : i32
    return %c0_i32, %c0_i32_0 : i32, i32
  }
  func.func @transform_7(%arg0: i32) -> (i32, i32) {
    %c0_i32 = arith.constant 0 : i32
    %c0_i32_0 = arith.constant 0 : i32
    %c0_i32_1 = arith.constant 0 : i32
    return %c0_i32, %c0_i32_0 : i32, i32
  }
  func.func @transform_8(%arg0: i32) -> (i32, i32) {
    %c0_i32 = arith.constant 0 : i32
    %c0_i32_0 = arith.constant 0 : i32
    %c0_i32_1 = arith.constant 0 : i32
    return %c0_i32, %c0_i32_0 : i32, i32
  }
  func.func @transform_9(%arg0: i32) -> (i32, i32) {
    %c0_i32 = arith.constant 0 : i32
    %c0_i32_0 = arith.constant 0 : i32
    %c0_i32_1 = arith.constant 0 : i32
    return %c0_i32, %c0_i32_0 : i32, i32
  }
  func.func @transform_10(%arg0: i32) -> (i32, i32) {
    %c0_i32 = arith.constant 0 : i32
    %c0_i32_0 = arith.constant 0 : i32
    %c0_i32_1 = arith.constant 0 : i32
    return %c0_i32, %c0_i32_0 : i32, i32
  }
  func.func @transform_11(%arg0: i32) -> (i32, i32) {
    %c0_i32 = arith.constant 0 : i32
    %c0_i32_0 = arith.constant 0 : i32
    %c0_i32_1 = arith.constant 0 : i32
    return %c0_i32, %c0_i32_0 : i32, i32
  }
  func.func @transform_12(%arg0: i32) -> (i32, i32) {
    %c0_i32 = arith.constant 0 : i32
    %c0_i32_0 = arith.constant 0 : i32
    %c0_i32_1 = arith.constant 0 : i32
    return %c0_i32, %c0_i32_0 : i32, i32
  }
  func.func @transform_13(%arg0: i32) -> (i32, i32) {
    %c0_i32 = arith.constant 0 : i32
    %c0_i32_0 = arith.constant 0 : i32
    %c0_i32_1 = arith.constant 0 : i32
    return %c0_i32, %c0_i32_0 : i32, i32
  }
  func.func @transform_14(%arg0: i32) -> (i32, i32) {
    %c0_i32 = arith.constant 0 : i32
    %c0_i32_0 = arith.constant 0 : i32
    %c0_i32_1 = arith.constant 0 : i32
    return %c0_i32, %c0_i32_0 : i32, i32
  }
  func.func @transform_15(%arg0: i32) -> (i32, i32) {
    %c0_i32 = arith.constant 0 : i32
    %c0_i32_0 = arith.constant 0 : i32
    %c0_i32_1 = arith.constant 0 : i32
    return %c0_i32, %c0_i32_0 : i32, i32
  }
  func.func @transform_16(%arg0: i32) -> (i32, i32) {
    %c0_i32 = arith.constant 0 : i32
    %c0_i32_0 = arith.constant 0 : i32
    %c0_i32_1 = arith.constant 0 : i32
    return %c0_i32, %c0_i32_0 : i32, i32
  }
  func.func @transform_17(%arg0: i32) -> (i32, i32) {
    %c0_i32 = arith.constant 0 : i32
    %c0_i32_0 = arith.constant 0 : i32
    %c0_i32_1 = arith.constant 0 : i32
    return %c0_i32, %c0_i32_0 : i32, i32
  }
  func.func @transform_18(%arg0: i32) -> (i32, i32) {
    %c0_i32 = arith.constant 0 : i32
    %c0_i32_0 = arith.constant 0 : i32
    %c0_i32_1 = arith.constant 0 : i32
    return %c0_i32, %c0_i32_0 : i32, i32
  }
  func.func @transform_19(%arg0: i32) -> (i32, i32) {
    %c0_i32 = arith.constant 0 : i32
    %c0_i32_0 = arith.constant 0 : i32
    %c0_i32_1 = arith.constant 0 : i32
    return %c0_i32, %c0_i32_0 : i32, i32
  }
  func.func @transform_20(%arg0: i32) -> (i32, i32) {
    %c0_i32 = arith.constant 0 : i32
    %c0_i32_0 = arith.constant 0 : i32
    %c0_i32_1 = arith.constant 0 : i32
    return %c0_i32, %c0_i32_0 : i32, i32
  }
  func.func @transform_21(%arg0: i32) -> (i32, i32) {
    %c0_i32 = arith.constant 0 : i32
    %c0_i32_0 = arith.constant 0 : i32
    %c0_i32_1 = arith.constant 0 : i32
    return %c0_i32, %c0_i32_0 : i32, i32
  }
  func.func @transform_22(%arg0: i32) -> (i32, i32) {
    %c0_i32 = arith.constant 0 : i32
    %c0_i32_0 = arith.constant 0 : i32
    %c0_i32_1 = arith.constant 0 : i32
    return %c0_i32, %c0_i32_0 : i32, i32
  }
  func.func @transform_23(%arg0: i32) -> (i32, i32) {
    %c0_i32 = arith.constant 0 : i32
    %c0_i32_0 = arith.constant 0 : i32
    %c0_i32_1 = arith.constant 0 : i32
    return %c0_i32, %c0_i32_0 : i32, i32
  }
  func.func @transform_24(%arg0: i32) -> (i32, i32) {
    %c0_i32 = arith.constant 0 : i32
    %c0_i32_0 = arith.constant 0 : i32
    %c0_i32_1 = arith.constant 0 : i32
    return %c0_i32, %c0_i32_0 : i32, i32
  }
  func.func @transform_25(%arg0: i32) -> (i32, i32) {
    %c0_i32 = arith.constant 0 : i32
    %c0_i32_0 = arith.constant 0 : i32
    %c0_i32_1 = arith.constant 0 : i32
    return %c0_i32, %c0_i32_0 : i32, i32
  }
}

</mosaic_0001>

<llo_original>
// kernel: tpu_custom_call.1
$region0: #{tpu_custom_call.1}
  #allocation0 [shape = 'u32[]', space=smem, size = 0x4, offset = 0x4, fixed_abs, tag = 'smem constant byte address 0x4 - core index']
  #allocation1 [shape = 'u32[72,128]{1,0:T(1,128)}', space=vmem, size = 0x9000, scoped, tag = 'internal scratch']
  #allocation2 [shape = 'f32[2,128]{1,0:T(2,128)}', space=vmem, size = 0x400, scoped, tag = 'scratch operand']
  #allocation3 [shape = 'f32[1,1]{1,0:T(1,128)S(1)}', space=vmem, size = 0x200, scoped, tag = 'scoped memory for tpu_custom_call.1']
  %s0 = inlined_call_operand.hbm [shape: bf16[2,1536], index: 0, kind: input, shape index: {}]
  %s1 = inlined_call_operand.hbm [shape: bf16[1536,128], index: 1, kind: input, shape index: {}]
  %s2 = inlined_call_operand.hbm [shape: f32[1,128], index: 2, kind: input, shape index: {}]
  %s3 = inlined_call_operand.hbm [shape: f32[1,128], index: 3, kind: input, shape index: {}]
  %s4 = inlined_call_operand.hbm [shape: f32[1,128], index: 4, kind: input, shape index: {}]
  %s5 = inlined_call_operand.hbm [shape: f32[2,16,128], index: 5, kind: input, shape index: {}]
  %s6 = inlined_call_operand.hbm [shape: f32[2,16], index: 6, kind: input, shape index: {}]
  %s7 = inlined_call_operand.hbm [shape: bf16[128,384], index: 7, kind: input, shape index: {}]
  %s8 = inlined_call_operand.vmem [shape: f32[1,384], index: 8, kind: input, shape index: {}]
  %s9 = inlined_call_operand.hbm [shape: bf16[128,128], index: 9, kind: input, shape index: {}]
  %s10 = inlined_call_operand.vmem [shape: f32[1,128], index: 10, kind: input, shape index: {}]
  %s11 = inlined_call_operand.vmem [shape: f32[1,128], index: 11, kind: input, shape index: {}]
  %s12 = inlined_call_operand.vmem [shape: f32[1,128], index: 12, kind: input, shape index: {}]
  %s13 = inlined_call_operand.hbm [shape: bf16[128,512], index: 13, kind: input, shape index: {}]
  %s14 = inlined_call_operand.vmem [shape: f32[1,512], index: 14, kind: input, shape index: {}]
  %s15 = inlined_call_operand.hbm [shape: bf16[512,128], index: 15, kind: input, shape index: {}]
  %s16 = inlined_call_operand.vmem [shape: f32[1,128], index: 16, kind: input, shape index: {}]
  %s17 = inlined_call_operand.vmem [shape: f32[1,128], index: 17, kind: input, shape index: {}]
  %s18 = inlined_call_operand.vmem [shape: f32[1,128], index: 18, kind: input, shape index: {}]
  %s19 = inlined_call_operand.hbm [shape: bf16[128,128], index: 19, kind: input, shape index: {}]
  %s20 = inlined_call_operand.vmem [shape: f32[1,128], index: 20, kind: input, shape index: {}]
  %s21 = inlined_call_operand.vmem [shape: f32[1,128], index: 21, kind: input, shape index: {}]
  %s22 = inlined_call_operand.vmem [shape: f32[1,128], index: 22, kind: input, shape index: {}]
  %s23 = inlined_call_operand.vmem [shape: f32[1,128], index: 23, kind: input, shape index: {}]
  %s24 = inlined_call_operand.<no memory space> [shape: f32[1,1], index: 24, kind: input, shape index: {}]
  %s25 = inlined_call_operand.hbm [shape: f32[2,128], index: 25, kind: output, shape index: {}]
  %s26 = sld [smem:[#allocation0]]
  $region166: #{tpu_custom_call.1} parent=0
    _
  %s28 = ssub.s32 1, %s26
  %s29 = scalar_select 0, %s28, %s26
  %v30 = vstv %s24
  %31 = vst [vmem:[#allocation3] sm:$0x1] %v30
  $region1: #{tpu_custom_call.1} parent=0
    #allocation4 [shape = 'u8[6144]{0}', space=vmem, size = 0x1800, scoped, tag = 'input window, operand 0, single buffered']
    #allocation5 [shape = 's32[1]{0}', space=sflag, size = 0x4, scoped, tag = 'scoped memory for tpu_custom_call.1']
    #allocation6 [shape = 's32[1]{0}', space=sflag, size = 0x4, scoped, tag = 'scoped memory for tpu_custom_call.1']
    #allocation7 [shape = 'u8[393216]{0}', space=vmem, size = 0x60000, scoped, tag = 'input window, operand 1, single buffered']
    #allocation8 [shape = 's32[1]{0}', space=sflag, size = 0x4, scoped, tag = 'scoped memory for tpu_custom_call.1']
    #allocation9 [shape = 'u8[512]{0}', space=vmem, size = 0x400, scoped, tag = 'input window, operand 2, single buffered']
    #allocation10 [shape = 'u8[512]{0}', space=vmem, size = 0x400, scoped, tag = 'input window, operand 3, single buffered']
    #allocation11 [shape = 's32[1]{0}', space=sflag, size = 0x4, scoped, tag = 'scoped memory for tpu_custom_call.1']
    #allocation12 [shape = 'u8[512]{0}', space=vmem, size = 0x400, scoped, tag = 'input window, operand 4, single buffered']
    #allocation13 [shape = 'u8[16384]{0}', space=vmem, size = 0x4000, scoped, tag = 'input window, operand 5, single buffered']
    #allocation14 [shape = 's32[1]{0}', space=sflag, size = 0x4, scoped, tag = 'scoped memory for tpu_custom_call.1']
    #allocation15 [shape = 'u8[1024]{0}', space=vmem, size = 0x400, scoped, tag = 'input window, operand 6, single buffered']
    #allocation16 [shape = 'u8[98304]{0}', space=vmem, size = 0x18000, scoped, tag = 'input window, operand 7, single buffered']
    #allocation17 [shape = 's32[1]{0}', space=sflag, size = 0x4, scoped, tag = 'scoped memory for tpu_custom_call.1']
    #allocation18 [shape = 'u8[32768]{0}', space=vmem, size = 0x8000, scoped, tag = 'input window, operand 9, single buffered']
    #allocation19 [shape = 'u8[131072]{0}', space=vmem, size = 0x20000, scoped, tag = 'input window, operand 13, single buffered']
    #allocation20 [shape = 's32[1]{0}', space=sflag, size = 0x4, scoped, tag = 'scoped memory for tpu_custom_call.1']
    #allocation21 [shape = 'u8[131072]{0}', space=vmem, size = 0x20000, scoped, tag = 'input window, operand 15, single buffered']
    #allocation22 [shape = 'u8[32768]{0}', space=vmem, size = 0x8000, scoped, tag = 'input window, operand 19, single buffered']
    #allocation23 [shape = 's32[1]{0}', space=sflag, size = 0x4, scoped, tag = 'scoped memory for tpu_custom_call.1']
    #allocation24 [shape = 'u8[1024]{0}', space=vmem, size = 0x400, scoped, tag = 'output window, operand 0, single buffered']
    %32 = vsyncpa [#allocation5], 0
    %33 = vsyncpa [#allocation8], 0
    %34 = vsyncpa [#allocation11], 0
    %35 = vsyncpa [#allocation14], 0
    %36 = vsyncpa [#allocation17], 0
    %37 = vsyncpa [#allocation20], 0
    %38 = vsyncpa [#allocation23], 0
    %39 = vsyncpa [#allocation6], 0
    // Predicated region
    $region2: #{tpu_custom_call.1} parent=1 // pred_check
      _
    $region3: #{tpu_custom_call.1} parent=1 // pred_check_branch
      %41 = sbr.rel (0) target = $region5
    $region4: #{tpu_custom_call.1} parent=1 // pred_region
      %43 = vsyncadd [#allocation5], 0
      %s45 = sshll.u32 %s0, 4
      %s46 = int_to_ptr.hbm [resolvable:$true] %s45
      %s47 = sshll.u32 [#allocation4], 4
      %s48 = int_to_ptr.vmem [resolvable:$true] %s47
      %50 = dma.hbm_to_vmem [thread:$0]  %s46, 192, %s48, [#allocation5]
    $region5: #{tpu_custom_call.1} parent=1 // pred_fallthru
      _
    // Predicated region
    $region6: #{tpu_custom_call.1} parent=1 // pred_check
      _
    $region7: #{tpu_custom_call.1} parent=1 // pred_check_branch
      %52 = sbr.rel (0) target = $region9
    $region8: #{tpu_custom_call.1} parent=1 // pred_region
      %54 = vsyncadd [#allocation8], 0
      %s55 = sshll.u32 %s1, 4
      %s56 = int_to_ptr.hbm [resolvable:$true] %s55
      %s57 = sshll.u32 [#allocation7], 4
      %s58 = int_to_ptr.vmem [resolvable:$true] %s57
      %63 = dma.hbm_to_vmem [thread:$0]  %s56, 12288, %s58, [#allocation8], 64, 64, 4
    $region9: #{tpu_custom_call.1} parent=1 // pred_fallthru
      _
    // Predicated region
    $region10: #{tpu_custom_call.1} parent=1 // pred_check
      _
    $region11: #{tpu_custom_call.1} parent=1 // pred_check_branch
      %65 = sbr.rel (0) target = $region13
    $region12: #{tpu_custom_call.1} parent=1 // pred_region
      %67 = vsyncadd [#allocation8], 0
      %s69 = sshll.u32 %s2, 4
      %s70 = int_to_ptr.hbm [resolvable:$true] %s69
      %s71 = sshll.u32 [#allocation9], 4
      %s72 = int_to_ptr.vmem [resolvable:$true] %s71
      %74 = dma.hbm_to_vmem [thread:$0]  %s70, 16, %s72, [#allocation8]
    $region13: #{tpu_custom_call.1} parent=1 // pred_fallthru
      _
    // Predicated region
    $region14: #{tpu_custom_call.1} parent=1 // pred_check
      _
    $region15: #{tpu_custom_call.1} parent=1 // pred_check_branch
      %76 = sbr.rel (0) target = $region17
    $region16: #{tpu_custom_call.1} parent=1 // pred_region
      %78 = vsyncadd [#allocation11], 0
      %s80 = sshll.u32 %s3, 4
      %s81 = int_to_ptr.hbm [resolvable:$true] %s80
      %s82 = sshll.u32 [#allocation10], 4
      %s83 = int_to_ptr.vmem [resolvable:$true] %s82
      %85 = dma.hbm_to_vmem [thread:$0]  %s81, 16, %s83, [#allocation11]
    $region17: #{tpu_custom_call.1} parent=1 // pred_fallthru
      _
    // Predicated region
    $region18: #{tpu_custom_call.1} parent=1 // pred_check
      _
    $region19: #{tpu_custom_call.1} parent=1 // pred_check_branch
      %87 = sbr.rel (0) target = $region21
    $region20: #{tpu_custom_call.1} parent=1 // pred_region
      %89 = vsyncadd [#allocation11], 0
      %s91 = sshll.u32 %s4, 4
      %s92 = int_to_ptr.hbm [resolvable:$true] %s91
      %s93 = sshll.u32 [#allocation12], 4
      %s94 = int_to_ptr.vmem [resolvable:$true] %s93
      %96 = dma.hbm_to_vmem [thread:$0]  %s92, 16, %s94, [#allocation11]
    $region21: #{tpu_custom_call.1} parent=1 // pred_fallthru
      _
    // Predicated region
    $region22: #{tpu_custom_call.1} parent=1 // pred_check
      _
    $region23: #{tpu_custom_call.1} parent=1 // pred_check_branch
      %98 = sbr.rel (0) target = $region25
    $region24: #{tpu_custom_call.1} parent=1 // pred_region
      %100 = vsyncadd [#allocation14], 0
      %s101 = sshll.u32 %s5, 4
      %s102 = int_to_ptr.hbm [resolvable:$true] %s101
      %s103 = sshll.u32 [#allocation13], 4
      %s104 = int_to_ptr.vmem [resolvable:$true] %s103
      %109 = dma.hbm_to_vmem [thread:$0]  %s102, 512, %s104, [#allocation14], 128, 128, 8
    $region25: #{tpu_custom_call.1} parent=1 // pred_fallthru
      _
    // Predicated region
    $region26: #{tpu_custom_call.1} parent=1 // pred_check
      _
    $region27: #{tpu_custom_call.1} parent=1 // pred_check_branch
      %111 = sbr.rel (0) target = $region29
    $region28: #{tpu_custom_call.1} parent=1 // pred_region
      %113 = vsyncadd [#allocation14], 0
      %s115 = sshll.u32 %s6, 4
      %s116 = int_to_ptr.hbm [resolvable:$true] %s115
      %s117 = sshll.u32 [#allocation15], 4
      %s118 = int_to_ptr.vmem [resolvable:$true] %s117
      %120 = dma.hbm_to_vmem [thread:$0]  %s116, 32, %s118, [#allocation14]
    $region29: #{tpu_custom_call.1} parent=1 // pred_fallthru
      _
    // Predicated region
    $region30: #{tpu_custom_call.1} parent=1 // pred_check
      _
    $region31: #{tpu_custom_call.1} parent=1 // pred_check_branch
      %122 = sbr.rel (0) target = $region33
    $region32: #{tpu_custom_call.1} parent=1 // pred_region
      %124 = vsyncadd [#allocation17], 0
      %s125 = sshll.u32 %s7, 4
      %s126 = int_to_ptr.hbm [resolvable:$true] %s125
      %s127 = sshll.u32 [#allocation16], 4
      %s128 = int_to_ptr.vmem [resolvable:$true] %s127
      %133 = dma.hbm_to_vmem [thread:$0]  %s126, 3072, %s128, [#allocation17], 192, 192, 12
    $region33: #{tpu_custom_call.1} parent=1 // pred_fallthru
      _
    // Predicated region
    $region34: #{tpu_custom_call.1} parent=1 // pred_check
      _
    $region35: #{tpu_custom_call.1} parent=1 // pred_check_branch
      %135 = sbr.rel (0) target = $region37
    $region36: #{tpu_custom_call.1} parent=1 // pred_region
      _
    $region37: #{tpu_custom_call.1} parent=1 // pred_fallthru
      _
    // Predicated region
    $region38: #{tpu_custom_call.1} parent=1 // pred_check
      _
    $region39: #{tpu_custom_call.1} parent=1 // pred_check_branch
      %137 = sbr.rel (0) target = $region41
    $region40: #{tpu_custom_call.1} parent=1 // pred_region
      %139 = vsyncadd [#allocation17], 0
      %s140 = sshll.u32 %s9, 4
      %s141 = int_to_ptr.hbm [resolvable:$true] %s140
      %s142 = sshll.u32 [#allocation18], 4
      %s143 = int_to_ptr.vmem [resolvable:$true] %s142
      %148 = dma.hbm_to_vmem [thread:$0]  %s141, 1024, %s143, [#allocation17], 64, 64, 4
    $region41: #{tpu_custom_call.1} parent=1 // pred_fallthru
      _
    // Predicated region
    $region42: #{tpu_custom_call.1} parent=1 // pred_check
      _
    $region43: #{tpu_custom_call.1} parent=1 // pred_check_branch
      %150 = sbr.rel (0) target = $region45
    $region44: #{tpu_custom_call.1} parent=1 // pred_region
      _
    $region45: #{tpu_custom_call.1} parent=1 // pred_fallthru
      _
    // Predicated region
    $region46: #{tpu_custom_call.1} parent=1 // pred_check
      _
    $region47: #{tpu_custom_call.1} parent=1 // pred_check_branch
      %152 = sbr.rel (0) target = $region49
    $region48: #{tpu_custom_call.1} parent=1 // pred_region
      _
    $region49: #{tpu_custom_call.1} parent=1 // pred_fallthru
      _
    // Predicated region
    $region50: #{tpu_custom_call.1} parent=1 // pred_check
      _
    $region51: #{tpu_custom_call.1} parent=1 // pred_check_branch
      %154 = sbr.rel (0) target = $region53
    $region52: #{tpu_custom_call.1} parent=1 // pred_region
      _
    $region53: #{tpu_custom_call.1} parent=1 // pred_fallthru
      _
    // Predicated region
    $region54: #{tpu_custom_call.1} parent=1 // pred_check
      _
    $region55: #{tpu_custom_call.1} parent=1 // pred_check_branch
      %156 = sbr.rel (0) target = $region57
    $region56: #{tpu_custom_call.1} parent=1 // pred_region
      %158 = vsyncadd [#allocation20], 0
      %s159 = sshll.u32 %s13, 4
      %s160 = int_to_ptr.hbm [resolvable:$true] %s159
      %s161 = sshll.u32 [#allocation19], 4
      %s162 = int_to_ptr.vmem [resolvable:$true] %s161
      %167 = dma.hbm_to_vmem [thread:$0]  %s160, 4096, %s162, [#allocation20], 256, 256, 16
    $region57: #{tpu_custom_call.1} parent=1 // pred_fallthru
      _
    // Predicated region
    $region58: #{tpu_custom_call.1} parent=1 // pred_check
      _
    $region59: #{tpu_custom_call.1} parent=1 // pred_check_branch
      %169 = sbr.rel (0) target = $region61
    $region60: #{tpu_custom_call.1} parent=1 // pred_region
      _
    $region61: #{tpu_custom_call.1} parent=1 // pred_fallthru
      _
    // Predicated region
    $region62: #{tpu_custom_call.1} parent=1 // pred_check
      _
    $region63: #{tpu_custom_call.1} parent=1 // pred_check_branch
      %171 = sbr.rel (0) target = $region65
    $region64: #{tpu_custom_call.1} parent=1 // pred_region
      %173 = vsyncadd [#allocation20], 0
      %s174 = sshll.u32 %s15, 4
      %s175 = int_to_ptr.hbm [resolvable:$true] %s174
      %s176 = sshll.u32 [#allocation21], 4
      %s177 = int_to_ptr.vmem [resolvable:$true] %s176
      %182 = dma.hbm_to_vmem [thread:$0]  %s175, 4096, %s177, [#allocation20], 64, 64, 4
    $region65: #{tpu_custom_call.1} parent=1 // pred_fallthru
      _
    // Predicated region
    $region66: #{tpu_custom_call.1} parent=1 // pred_check
      _
    $region67: #{tpu_custom_call.1} parent=1 // pred_check_branch
      %184 = sbr.rel (0) target = $region69
    $region68: #{tpu_custom_call.1} parent=1 // pred_region
      _
    $region69: #{tpu_custom_call.1} parent=1 // pred_fallthru
      _
    // Predicated region
    $region70: #{tpu_custom_call.1} parent=1 // pred_check
      _
    $region71: #{tpu_custom_call.1} parent=1 // pred_check_branch
      %186 = sbr.rel (0) target = $region73
    $region72: #{tpu_custom_call.1} parent=1 // pred_region
      _
    $region73: #{tpu_custom_call.1} parent=1 // pred_fallthru
      _
    // Predicated region
    $region74: #{tpu_custom_call.1} parent=1 // pred_check
      _
    $region75: #{tpu_custom_call.1} parent=1 // pred_check_branch
      %188 = sbr.rel (0) target = $region77
    $region76: #{tpu_custom_call.1} parent=1 // pred_region
      _
    $region77: #{tpu_custom_call.1} parent=1 // pred_fallthru
      _
    // Predicated region
    $region78: #{tpu_custom_call.1} parent=1 // pred_check
      _
    $region79: #{tpu_custom_call.1} parent=1 // pred_check_branch
      %190 = sbr.rel (0) target = $region81
    $region80: #{tpu_custom_call.1} parent=1 // pred_region
      %192 = vsyncadd [#allocation23], 0
      %s193 = sshll.u32 %s19, 4
      %s194 = int_to_ptr.hbm [resolvable:$true] %s193
      %s195 = sshll.u32 [#allocation22], 4
      %s196 = int_to_ptr.vmem [resolvable:$true] %s195
      %201 = dma.hbm_to_vmem [thread:$0]  %s194, 1024, %s196, [#allocation23], 64, 64, 4
    $region81: #{tpu_custom_call.1} parent=1 // pred_fallthru
      _
    // Predicated region
    $region82: #{tpu_custom_call.1} parent=1 // pred_check
      _
    $region83: #{tpu_custom_call.1} parent=1 // pred_check_branch
      %203 = sbr.rel (0) target = $region85
    $region84: #{tpu_custom_call.1} parent=1 // pred_region
      _
    $region85: #{tpu_custom_call.1} parent=1 // pred_fallthru
      _
    // Predicated region
    $region86: #{tpu_custom_call.1} parent=1 // pred_check
      _
    $region87: #{tpu_custom_call.1} parent=1 // pred_check_branch
      %205 = sbr.rel (0) target = $region89
    $region88: #{tpu_custom_call.1} parent=1 // pred_region
      _
    $region89: #{tpu_custom_call.1} parent=1 // pred_fallthru
      _
    // Predicated region
    $region90: #{tpu_custom_call.1} parent=1 // pred_check
      _
    $region91: #{tpu_custom_call.1} parent=1 // pred_check_branch
      %207 = sbr.rel (0) target = $region93
    $region92: #{tpu_custom_call.1} parent=1 // pred_region
      _
    $region93: #{tpu_custom_call.1} parent=1 // pred_fallthru
      _
    // Predicated region
    $region94: #{tpu_custom_call.1} parent=1 // pred_check
      _
    $region95: #{tpu_custom_call.1} parent=1 // pred_check_branch
      %209 = sbr.rel (0) target = $region97
    $region96: #{tpu_custom_call.1} parent=1 // pred_region
      _
    $region97: #{tpu_custom_call.1} parent=1 // pred_fallthru
      _
    // Predicated region
    $region98: #{tpu_custom_call.1} parent=1 // pred_check
      _
    $region99: #{tpu_custom_call.1} parent=1 // pred_check_branch
      %211 = sbr.rel (0) target = $region101
    $region100: #{tpu_custom_call.1} parent=1 // pred_region
      _
    $region101: #{tpu_custom_call.1} parent=1 // pred_fallthru
      _
    // Predicated region
    $region102: #{tpu_custom_call.1} parent=1 // pred_check
      _
    $region103: #{tpu_custom_call.1} parent=1 // pred_check_branch
      %213 = sbr.rel (0) target = $region105
    $region104: #{tpu_custom_call.1} parent=1 // pred_region
      %215 = dma.done [#allocation5], 192
    $region105: #{tpu_custom_call.1} parent=1 // pred_fallthru
      _
    // Predicated region
    $region106: #{tpu_custom_call.1} parent=1 // pred_check
      _
    $region107: #{tpu_custom_call.1} parent=1 // pred_check_branch
      %217 = sbr.rel (0) target = $region109
    $region108: #{tpu_custom_call.1} parent=1 // pred_region
      %219 = dma.done [#allocation8], 12288
    $region109: #{tpu_custom_call.1} parent=1 // pred_fallthru
      _
    // Predicated region
    $region110: #{tpu_custom_call.1} parent=1 // pred_check
      _
    $region111: #{tpu_custom_call.1} parent=1 // pred_check_branch
      %221 = sbr.rel (0) target = $region113
    $region112: #{tpu_custom_call.1} parent=1 // pred_region
      %223 = dma.done [#allocation8], 16
    $region113: #{tpu_custom_call.1} parent=1 // pred_fallthru
      _
    // Predicated region
    $region114: #{tpu_custom_call.1} parent=1 // pred_check
      _
    $region115: #{tpu_custom_call.1} parent=1 // pred_check_branch
      %225 = sbr.rel (0) target = $region117
    $region116: #{tpu_custom_call.1} parent=1 // pred_region
      %227 = dma.done [#allocation11], 16
    $region117: #{tpu_custom_call.1} parent=1 // pred_fallthru
      _
    // Predicated region
    $region118: #{tpu_custom_call.1} parent=1 // pred_check
      _
    $region119: #{tpu_custom_call.1} parent=1 // pred_check_branch
      %229 = sbr.rel (0) target = $region121
    $region120: #{tpu_custom_call.1} parent=1 // pred_region
      %231 = dma.done [#allocation11], 16
    $region121: #{tpu_custom_call.1} parent=1 // pred_fallthru
      _
    // Predicated region
    $region122: #{tpu_custom_call.1} parent=1 // pred_check
      _
    $region123: #{tpu_custom_call.1} parent=1 // pred_check_branch
      %233 = sbr.rel (0) target = $region125
    $region124: #{tpu_custom_call.1} parent=1 // pred_region
      %235 = dma.done [#allocation14], 512
    $region125: #{tpu_custom_call.1} parent=1 // pred_fallthru
      _
    // Predicated region
    $region126: #{tpu_custom_call.1} parent=1 // pred_check
      _
    $region127: #{tpu_custom_call.1} parent=1 // pred_check_branch
      %237 = sbr.rel (0) target = $region129
    $region128: #{tpu_custom_call.1} parent=1 // pred_region
      %239 = dma.done [#allocation14], 32
    $region129: #{tpu_custom_call.1} parent=1 // pred_fallthru
      _
    // Predicated region
    $region130: #{tpu_custom_call.1} parent=1 // pred_check
      _
    $region131: #{tpu_custom_call.1} parent=1 // pred_check_branch
      %241 = sbr.rel (0) target = $region133
    $region132: #{tpu_custom_call.1} parent=1 // pred_region
      %243 = dma.done [#allocation17], 3072
    $region133: #{tpu_custom_call.1} parent=1 // pred_fallthru
      _
    // Predicated region
    $region134: #{tpu_custom_call.1} parent=1 // pred_check
      _
    $region135: #{tpu_custom_call.1} parent=1 // pred_check_branch
      %245 = sbr.rel (0) target = $region137
    $region136: #{tpu_custom_call.1} parent=1 // pred_region
      %247 = dma.done [#allocation17], 1024
    $region137: #{tpu_custom_call.1} parent=1 // pred_fallthru
      _
    // Predicated region
    $region138: #{tpu_custom_call.1} parent=1 // pred_check
      _
    $region139: #{tpu_custom_call.1} parent=1 // pred_check_branch
      %249 = sbr.rel (0) target = $region141
    $region140: #{tpu_custom_call.1} parent=1 // pred_region
      %251 = dma.done [#allocation20], 4096
    $region141: #{tpu_custom_call.1} parent=1 // pred_fallthru
      _
    // Predicated region
    $region142: #{tpu_custom_call.1} parent=1 // pred_check
      _
    $region143: #{tpu_custom_call.1} parent=1 // pred_check_branch
      %253 = sbr.rel (0) target = $region145
    $region144: #{tpu_custom_call.1} parent=1 // pred_region
      %255 = dma.done [#allocation20], 4096
    $region145: #{tpu_custom_call.1} parent=1 // pred_fallthru
      _
    // Predicated region
    $region146: #{tpu_custom_call.1} parent=1 // pred_check
      _
    $region147: #{tpu_custom_call.1} parent=1 // pred_check_branch
      %257 = sbr.rel (0) target = $region149
    $region148: #{tpu_custom_call.1} parent=1 // pred_region
      %259 = dma.done [#allocation23], 1024
    $region149: #{tpu_custom_call.1} parent=1 // pred_fallthru
      _
    %p261 = scmp.eq.s32.totalorder 0, 0
    // Predicated region
    $region150: #{tpu_custom_call.1} parent=1 // pred_check
      %p262 = pneg %p261
    $region151: #{tpu_custom_call.1} parent=1 // pred_check_branch
      %264 = sbr.rel (%p262) target = $region153
    $region152: #{tpu_custom_call.1} parent=1 // pred_region
      %265 = vst [vmem:[#allocation2] sm:$0x3] 0.0
    $region153: #{tpu_custom_call.1} parent=1 // pred_fallthru
      _
    %v266 = vld [vmem:[#allocation2] sm:$0x3]
    %v267 = vld [vmem:[#allocation4] sm:$0xff]
    %v268 = vld [vmem:[#allocation4 + $0x8] sm:$0xf]
    %v269 = vld [vmem:[#allocation7] sm:$0xf]
    %v270 = vld [vmem:[#allocation7 + $0x4] sm:$0xf]
    %v271 = vld [vmem:[#allocation7 + $0x8] sm:$0xf]
    %v272 = vld [vmem:[#allocation7 + $0xc] sm:$0xf]
    %v273 = vld [vmem:[#allocation7 + $0x10] sm:$0xf]
    %v274 = vld [vmem:[#allocation7 + $0x14] sm:$0xf]
    %v275 = vld [vmem:[#allocation7 + $0x18] sm:$0xf]
    %v276 = vld [vmem:[#allocation7 + $0x1c] sm:$0xf]
    %v277 = vld [vmem:[#allocation7 + $0x20] sm:$0xf]
    %v278 = vld [vmem:[#allocation7 + $0x24] sm:$0xf]
    %v279 = vld [vmem:[#allocation7 + $0x28] sm:$0xf]
    %v280 = vld [vmem:[#allocation7 + $0x2c] sm:$0xf]
    %v281 = vld [vmem:[#allocation7 + $0x30] sm:$0xf]
    %v282 = vld [vmem:[#allocation7 + $0x34] sm:$0xf]
    %v283 = vld [vmem:[#allocation7 + $0x38] sm:$0xf]
    %v284 = vld [vmem:[#allocation7 + $0x3c] sm:$0xf]
    %v285 = vld [vmem:[#allocation7 + $0x40] sm:$0xf]
    %v286 = vld [vmem:[#allocation7 + $0x44] sm:$0xf]
    %v287 = vld [vmem:[#allocation7 + $0x48] sm:$0xf]
    %v288 = vld [vmem:[#allocation7 + $0x4c] sm:$0xf]
    %v289 = vld [vmem:[#allocation7 + $0x50] sm:$0xf]
    %v290 = vld [vmem:[#allocation7 + $0x54] sm:$0xf]
    %v291 = vld [vmem:[#allocation7 + $0x58] sm:$0xf]
    %v292 = vld [vmem:[#allocation7 + $0x5c] sm:$0xf]
    %v293 = vld [vmem:[#allocation7 + $0x60] sm:$0xf]
    %v294 = vld [vmem:[#allocation7 + $0x64] sm:$0xf]
    %v295 = vld [vmem:[#allocation7 + $0x68] sm:$0xf]
    %v296 = vld [vmem:[#allocation7 + $0x6c] sm:$0xf]
    %v297 = vld [vmem:[#allocation7 + $0x70] sm:$0xf]
    %v298 = vld [vmem:[#allocation7 + $0x74] sm:$0xf]
    %v299 = vld [vmem:[#allocation7 + $0x78] sm:$0xf]
    %v300 = vld [vmem:[#allocation7 + $0x7c] sm:$0xf]
    %v301 = vld [vmem:[#allocation7 + $0x80] sm:$0xf]
    %v302 = vld [vmem:[#allocation7 + $0x84] sm:$0xf]
    %v303 = vld [vmem:[#allocation7 + $0x88] sm:$0xf]
    %v304 = vld [vmem:[#allocation7 + $0x8c] sm:$0xf]
    %v305 = vld [vmem:[#allocation7 + $0x90] sm:$0xf]
    %v306 = vld [vmem:[#allocation7 + $0x94] sm:$0xf]
    %v307 = vld [vmem:[#allocation7 + $0x98] sm:$0xf]
    %v308 = vld [vmem:[#allocation7 + $0x9c] sm:$0xf]
    %v309 = vld [vmem:[#allocation7 + $0xa0] sm:$0xf]
    %v310 = vld [vmem:[#allocation7 + $0xa4] sm:$0xf]
    %v311 = vld [vmem:[#allocation7 + $0xa8] sm:$0xf]
    %v312 = vld [vmem:[#allocation7 + $0xac] sm:$0xf]
    %v313 = vld [vmem:[#allocation7 + $0xb0] sm:$0xf]
    %v314 = vld [vmem:[#allocation7 + $0xb4] sm:$0xf]
    %v315 = vld [vmem:[#allocation7 + $0xb8] sm:$0xf]
    %v316 = vld [vmem:[#allocation7 + $0xbc] sm:$0xf]
    %v317 = vld [vmem:[#allocation7 + $0xc0] sm:$0xf]
    %v318 = vld [vmem:[#allocation7 + $0xc4] sm:$0xf]
    %v319 = vld [vmem:[#allocation7 + $0xc8] sm:$0xf]
    %v320 = vld [vmem:[#allocation7 + $0xcc] sm:$0xf]
    %v321 = vld [vmem:[#allocation7 + $0xd0] sm:$0xf]
    %v322 = vld [vmem:[#allocation7 + $0xd4] sm:$0xf]
    %v323 = vld [vmem:[#allocation7 + $0xd8] sm:$0xf]
    %v324 = vld [vmem:[#allocation7 + $0xdc] sm:$0xf]
    %v325 = vld [vmem:[#allocation7 + $0xe0] sm:$0xf]
    %v326 = vld [vmem:[#allocation7 + $0xe4] sm:$0xf]
    %v327 = vld [vmem:[#allocation7 + $0xe8] sm:$0xf]
    %v328 = vld [vmem:[#allocation7 + $0xec] sm:$0xf]
    %v329 = vld [vmem:[#allocation7 + $0xf0] sm:$0xf]
    %v330 = vld [vmem:[#allocation7 + $0xf4] sm:$0xf]
    %v331 = vld [vmem:[#allocation7 + $0xf8] sm:$0xf]
    %v332 = vld [vmem:[#allocation7 + $0xfc] sm:$0xf]
    %v333 = vld [vmem:[#allocation7 + $0x100] sm:$0xf]
    %v334 = vld [vmem:[#allocation7 + $0x104] sm:$0xf]
    %v335 = vld [vmem:[#allocation7 + $0x108] sm:$0xf]
    %v336 = vld [vmem:[#allocation7 + $0x10c] sm:$0xf]
    %v337 = vld [vmem:[#allocation7 + $0x110] sm:$0xf]
    %v338 = vld [vmem:[#allocation7 + $0x114] sm:$0xf]
    %v339 = vld [vmem:[#allocation7 + $0x118] sm:$0xf]
    %v340 = vld [vmem:[#allocation7 + $0x11c] sm:$0xf]
    %v341 = vld [vmem:[#allocation7 + $0x120] sm:$0xf]
    %v342 = vld [vmem:[#allocation7 + $0x124] sm:$0xf]
    %v343 = vld [vmem:[#allocation7 + $0x128] sm:$0xf]
    %v344 = vld [vmem:[#allocation7 + $0x12c] sm:$0xf]
    %v345 = vld [vmem:[#allocation7 + $0x130] sm:$0xf]
    %v346 = vld [vmem:[#allocation7 + $0x134] sm:$0xf]
    %v347 = vld [vmem:[#allocation7 + $0x138] sm:$0xf]
    %v348 = vld [vmem:[#allocation7 + $0x13c] sm:$0xf]
    %v349 = vld [vmem:[#allocation7 + $0x140] sm:$0xf]
    %v350 = vld [vmem:[#allocation7 + $0x144] sm:$0xf]
    %v351 = vld [vmem:[#allocation7 + $0x148] sm:$0xf]
    %v352 = vld [vmem:[#allocation7 + $0x14c] sm:$0xf]
    %v353 = vld [vmem:[#allocation7 + $0x150] sm:$0xf]
    %v354 = vld [vmem:[#allocation7 + $0x154] sm:$0xf]
    %v355 = vld [vmem:[#allocation7 + $0x158] sm:$0xf]
    %v356 = vld [vmem:[#allocation7 + $0x15c] sm:$0xf]
    %v357 = vld [vmem:[#allocation7 + $0x160] sm:$0xf]
    %v358 = vld [vmem:[#allocation7 + $0x164] sm:$0xf]
    %v359 = vld [vmem:[#allocation7 + $0x168] sm:$0xf]
    %v360 = vld [vmem:[#allocation7 + $0x16c] sm:$0xf]
    %v361 = vld [vmem:[#allocation7 + $0x170] sm:$0xf]
    %v362 = vld [vmem:[#allocation7 + $0x174] sm:$0xf]
    %v363 = vld [vmem:[#allocation7 + $0x178] sm:$0xf]
    %v364 = vld [vmem:[#allocation7 + $0x17c] sm:$0xf]
    %v365 = vld [vmem:[#allocation7 + $0x180] sm:$0xf]
    %v366 = vld [vmem:[#allocation7 + $0x184] sm:$0xf]
    %v367 = vld [vmem:[#allocation7 + $0x188] sm:$0xf]
    %v368 = vld [vmem:[#allocation7 + $0x18c] sm:$0xf]
    %v369 = vld [vmem:[#allocation7 + $0x190] sm:$0xf]
    %v370 = vld [vmem:[#allocation7 + $0x194] sm:$0xf]
    %v371 = vld [vmem:[#allocation7 + $0x198] sm:$0xf]
    %v372 = vld [vmem:[#allocation7 + $0x19c] sm:$0xf]
    %v373 = vld [vmem:[#allocation7 + $0x1a0] sm:$0xf]
    %v374 = vld [vmem:[#allocation7 + $0x1a4] sm:$0xf]
    %v375 = vld [vmem:[#allocation7 + $0x1a8] sm:$0xf]
    %v376 = vld [vmem:[#allocation7 + $0x1ac] sm:$0xf]
    %v377 = vld [vmem:[#allocation7 + $0x1b0] sm:$0xf]
    %v378 = vld [vmem:[#allocation7 + $0x1b4] sm:$0xf]
    %v379 = vld [vmem:[#allocation7 + $0x1b8] sm:$0xf]
    %v380 = vld [vmem:[#allocation7 + $0x1bc] sm:$0xf]
    %v381 = vld [vmem:[#allocation7 + $0x1c0] sm:$0xf]
    %v382 = vld [vmem:[#allocation7 + $0x1c4] sm:$0xf]
    %v383 = vld [vmem:[#allocation7 + $0x1c8] sm:$0xf]
    %v384 = vld [vmem:[#allocation7 + $0x1cc] sm:$0xf]
    %v385 = vld [vmem:[#allocation7 + $0x1d0] sm:$0xf]
    %v386 = vld [vmem:[#allocation7 + $0x1d4] sm:$0xf]
    %v387 = vld [vmem:[#allocation7 + $0x1d8] sm:$0xf]
    %v388 = vld [vmem:[#allocation7 + $0x1dc] sm:$0xf]
    %v389 = vld [vmem:[#allocation7 + $0x1e0] sm:$0xf]
    %v390 = vld [vmem:[#allocation7 + $0x1e4] sm:$0xf]
    %v391 = vld [vmem:[#allocation7 + $0x1e8] sm:$0xf]
    %v392 = vld [vmem:[#allocation7 + $0x1ec] sm:$0xf]
    %v393 = vld [vmem:[#allocation7 + $0x1f0] sm:$0xf]
    %v394 = vld [vmem:[#allocation7 + $0x1f4] sm:$0xf]
    %v395 = vld [vmem:[#allocation7 + $0x1f8] sm:$0xf]
    %v396 = vld [vmem:[#allocation7 + $0x1fc] sm:$0xf]
    %v397 = vld [vmem:[#allocation7 + $0x200] sm:$0xf]
    %v398 = vld [vmem:[#allocation7 + $0x204] sm:$0xf]
    %v399 = vld [vmem:[#allocation7 + $0x208] sm:$0xf]
    %v400 = vld [vmem:[#allocation7 + $0x20c] sm:$0xf]
    %v401 = vld [vmem:[#allocation7 + $0x210] sm:$0xf]
    %v402 = vld [vmem:[#allocation7 + $0x214] sm:$0xf]
    %v403 = vld [vmem:[#allocation7 + $0x218] sm:$0xf]
    %v404 = vld [vmem:[#allocation7 + $0x21c] sm:$0xf]
    %v405 = vld [vmem:[#allocation7 + $0x220] sm:$0xf]
    %v406 = vld [vmem:[#allocation7 + $0x224] sm:$0xf]
    %v407 = vld [vmem:[#allocation7 + $0x228] sm:$0xf]
    %v408 = vld [vmem:[#allocation7 + $0x22c] sm:$0xf]
    %v409 = vld [vmem:[#allocation7 + $0x230] sm:$0xf]
    %v410 = vld [vmem:[#allocation7 + $0x234] sm:$0xf]
    %v411 = vld [vmem:[#allocation7 + $0x238] sm:$0xf]
    %v412 = vld [vmem:[#allocation7 + $0x23c] sm:$0xf]
    %v413 = vld [vmem:[#allocation7 + $0x240] sm:$0xf]
    %v414 = vld [vmem:[#allocation7 + $0x244] sm:$0xf]
    %v415 = vld [vmem:[#allocation7 + $0x248] sm:$0xf]
    %v416 = vld [vmem:[#allocation7 + $0x24c] sm:$0xf]
    %v417 = vld [vmem:[#allocation7 + $0x250] sm:$0xf]
    %v418 = vld [vmem:[#allocation7 + $0x254] sm:$0xf]
    %v419 = vld [vmem:[#allocation7 + $0x258] sm:$0xf]
    %v420 = vld [vmem:[#allocation7 + $0x25c] sm:$0xf]
    %v421 = vld [vmem:[#allocation7 + $0x260] sm:$0xf]
    %v422 = vld [vmem:[#allocation7 + $0x264] sm:$0xf]
    %v423 = vld [vmem:[#allocation7 + $0x268] sm:$0xf]
    %v424 = vld [vmem:[#allocation7 + $0x26c] sm:$0xf]
    %v425 = vld [vmem:[#allocation7 + $0x270] sm:$0xf]
    %v426 = vld [vmem:[#allocation7 + $0x274] sm:$0xf]
    %v427 = vld [vmem:[#allocation7 + $0x278] sm:$0xf]
    %v428 = vld [vmem:[#allocation7 + $0x27c] sm:$0xf]
    %v429 = vld [vmem:[#allocation7 + $0x280] sm:$0xf]
    %v430 = vld [vmem:[#allocation7 + $0x284] sm:$0xf]
    %v431 = vld [vmem:[#allocation7 + $0x288] sm:$0xf]
    %v432 = vld [vmem:[#allocation7 + $0x28c] sm:$0xf]
    %v433 = vld [vmem:[#allocation7 + $0x290] sm:$0xf]
    %v434 = vld [vmem:[#allocation7 + $0x294] sm:$0xf]
    %v435 = vld [vmem:[#allocation7 + $0x298] sm:$0xf]
    %v436 = vld [vmem:[#allocation7 + $0x29c] sm:$0xf]
    %v437 = vld [vmem:[#allocation7 + $0x2a0] sm:$0xf]
    %v438 = vld [vmem:[#allocation7 + $0x2a4] sm:$0xf]
    %v439 = vld [vmem:[#allocation7 + $0x2a8] sm:$0xf]
    %v440 = vld [vmem:[#allocation7 + $0x2ac] sm:$0xf]
    %v441 = vld [vmem:[#allocation7 + $0x2b0] sm:$0xf]
    %v442 = vld [vmem:[#allocation7 + $0x2b4] sm:$0xf]
    %v443 = vld [vmem:[#allocation7 + $0x2b8] sm:$0xf]
    %v444 = vld [vmem:[#allocation7 + $0x2bc] sm:$0xf]
    %v445 = vld [vmem:[#allocation7 + $0x2c0] sm:$0xf]
    %v446 = vld [vmem:[#allocation7 + $0x2c4] sm:$0xf]
    %v447 = vld [vmem:[#allocation7 + $0x2c8] sm:$0xf]
    %v448 = vld [vmem:[#allocation7 + $0x2cc] sm:$0xf]
    %v449 = vld [vmem:[#allocation7 + $0x2d0] sm:$0xf]
    %v450 = vld [vmem:[#allocation7 + $0x2d4] sm:$0xf]
    %v451 = vld [vmem:[#allocation7 + $0x2d8] sm:$0xf]
    %v452 = vld [vmem:[#allocation7 + $0x2dc] sm:$0xf]
    %v453 = vld [vmem:[#allocation7 + $0x2e0] sm:$0xf]
    %v454 = vld [vmem:[#allocation7 + $0x2e4] sm:$0xf]
    %v455 = vld [vmem:[#allocation7 + $0x2e8] sm:$0xf]
    %v456 = vld [vmem:[#allocation7 + $0x2ec] sm:$0xf]
    %v457 = vld [vmem:[#allocation7 + $0x2f0] sm:$0xf]
    %v458 = vld [vmem:[#allocation7 + $0x2f4] sm:$0xf]
    %v459 = vld [vmem:[#allocation7 + $0x2f8] sm:$0xf]
    %v460 = vld [vmem:[#allocation7 + $0x2fc] sm:$0xf]
    %462 = vst [vmem:[#allocation1] ss:$9 sm:$0xff] %v267
    %v463 = vld [vmem:[#allocation1] sm:$0xff]
    %v464 = vld [vmem:[#allocation1 + $0x9] sm:$0xff]
    %v465 = vld [vmem:[#allocation1 + $0x12] sm:$0xff]
    %v466 = vld [vmem:[#allocation1 + $0x1b] sm:$0xff]
    %v467 = vld [vmem:[#allocation1 + $0x24] sm:$0xff]
    %v468 = vld [vmem:[#allocation1 + $0x2d] sm:$0xff]
    %v469 = vld [vmem:[#allocation1 + $0x36] sm:$0xff]
    %v470 = vld [vmem:[#allocation1 + $0x3f] sm:$0xff]
    %472 = vst [vmem:[#allocation1] ss:$9 sm:$0xff] %v268
    %v473 = vld [vmem:[#allocation1] sm:$0xff]
    %v474 = vld [vmem:[#allocation1 + $0x9] sm:$0xff]
    %v475 = vld [vmem:[#allocation1 + $0x12] sm:$0xff]
    %v476 = vld [vmem:[#allocation1 + $0x1b] sm:$0xff]
    %v681 = vunpack.c.l.b16 %v269
    %v682 = vunpack.c.l.b16 %v270
    %v683 = vunpack.c.l.b16 %v271
    %v684 = vunpack.c.l.b16 %v272
    %v685 = vunpack.c.l.b16 %v273
    %v686 = vunpack.c.l.b16 %v274
    %v687 = vunpack.c.l.b16 %v275
    %v688 = vunpack.c.l.b16 %v276
    %v689 = vunpack.c.l.b16 %v277
    %v690 = vunpack.c.l.b16 %v278
    %v691 = vunpack.c.l.b16 %v279
    %v692 = vunpack.c.l.b16 %v280
    %v693 = vunpack.c.l.b16 %v281
    %v694 = vunpack.c.l.b16 %v282
    %v695 = vunpack.c.l.b16 %v283
    %v696 = vunpack.c.l.b16 %v284
    %v697 = vunpack.c.l.b16 %v285
    %v698 = vunpack.c.l.b16 %v286
    %v699 = vunpack.c.l.b16 %v287
    %v700 = vunpack.c.l.b16 %v288
    %v701 = vunpack.c.l.b16 %v289
    %v702 = vunpack.c.l.b16 %v290
    %v703 = vunpack.c.l.b16 %v291
    %v704 = vunpack.c.l.b16 %v292
    %v705 = vunpack.c.l.b16 %v293
    %v706 = vunpack.c.l.b16 %v294
    %v707 = vunpack.c.l.b16 %v295
    %v708 = vunpack.c.l.b16 %v296
    %v709 = vunpack.c.l.b16 %v297
    %v710 = vunpack.c.l.b16 %v298
    %v711 = vunpack.c.l.b16 %v299
    %v712 = vunpack.c.l.b16 %v300
    %v713 = vunpack.c.l.b16 %v301
    %v714 = vunpack.c.l.b16 %v302
    %v715 = vunpack.c.l.b16 %v303
    %v716 = vunpack.c.l.b16 %v304
    %v717 = vunpack.c.l.b16 %v305
    %v718 = vunpack.c.l.b16 %v306
    %v719 = vunpack.c.l.b16 %v307
    %v720 = vunpack.c.l.b16 %v308
    %v721 = vunpack.c.l.b16 %v309
    %v722 = vunpack.c.l.b16 %v310
    %v723 = vunpack.c.l.b16 %v311
    %v724 = vunpack.c.l.b16 %v312
    %v725 = vunpack.c.l.b16 %v313
    %v726 = vunpack.c.l.b16 %v314
    %v727 = vunpack.c.l.b16 %v315
    %v728 = vunpack.c.l.b16 %v316
    %v729 = vunpack.c.l.b16 %v317
    %v730 = vunpack.c.l.b16 %v318
    %v731 = vunpack.c.l.b16 %v319
    %v732 = vunpack.c.l.b16 %v320
    %v733 = vunpack.c.l.b16 %v321
    %v734 = vunpack.c.l.b16 %v322
    %v735 = vunpack.c.l.b16 %v323
    %v736 = vunpack.c.l.b16 %v324
    %v737 = vunpack.c.l.b16 %v325
    %v738 = vunpack.c.l.b16 %v326
    %v739 = vunpack.c.l.b16 %v327
    %v740 = vunpack.c.l.b16 %v328
    %v741 = vunpack.c.l.b16 %v329
    %v742 = vunpack.c.l.b16 %v330
    %v743 = vunpack.c.l.b16 %v331
    %v744 = vunpack.c.l.b16 %v332
    %v745 = vunpack.c.l.b16 %v333
    %v746 = vunpack.c.l.b16 %v334
    %v747 = vunpack.c.l.b16 %v335
    %v748 = vunpack.c.l.b16 %v336
    %v749 = vunpack.c.l.b16 %v337
    %v750 = vunpack.c.l.b16 %v338
    %v751 = vunpack.c.l.b16 %v339
    %v752 = vunpack.c.l.b16 %v340
    %v753 = vunpack.c.l.b16 %v341
    %v754 = vunpack.c.l.b16 %v342
    %v755 = vunpack.c.l.b16 %v343
    %v756 = vunpack.c.l.b16 %v344
    %v757 = vunpack.c.l.b16 %v345
    %v758 = vunpack.c.l.b16 %v346
    %v759 = vunpack.c.l.b16 %v347
    %v760 = vunpack.c.l.b16 %v348
    %v761 = vunpack.c.l.b16 %v349
    %v762 = vunpack.c.l.b16 %v350
    %v763 = vunpack.c.l.b16 %v351
    %v764 = vunpack.c.l.b16 %v352
    %v765 = vunpack.c.l.b16 %v353
    %v766 = vunpack.c.l.b16 %v354
    %v767 = vunpack.c.l.b16 %v355
    %v768 = vunpack.c.l.b16 %v356
    %v769 = vunpack.c.l.b16 %v357
    %v770 = vunpack.c.l.b16 %v358
    %v771 = vunpack.c.l.b16 %v359
    %v772 = vunpack.c.l.b16 %v360
    %v773 = vunpack.c.l.b16 %v361
    %v774 = vunpack.c.l.b16 %v362
    %v775 = vunpack.c.l.b16 %v363
    %v776 = vunpack.c.l.b16 %v364
    %v777 = vunpack.c.l.b16 %v365
    %v778 = vunpack.c.l.b16 %v366
    %v779 = vunpack.c.l.b16 %v367
    %v780 = vunpack.c.l.b16 %v368
    %v781 = vunpack.c.l.b16 %v369
    %v782 = vunpack.c.l.b16 %v370
    %v783 = vunpack.c.l.b16 %v371
    %v784 = vunpack.c.l.b16 %v372
    %v785 = vunpack.c.l.b16 %v373
    %v786 = vunpack.c.l.b16 %v374
    %v787 = vunpack.c.l.b16 %v375
    %v788 = vunpack.c.l.b16 %v376
    %v789 = vunpack.c.l.b16 %v377
    %v790 = vunpack.c.l.b16 %v378
    %v791 = vunpack.c.l.b16 %v379
    %v792 = vunpack.c.l.b16 %v380
    %v793 = vunpack.c.l.b16 %v381
    %v794 = vunpack.c.l.b16 %v382
    %v795 = vunpack.c.l.b16 %v383
    %v796 = vunpack.c.l.b16 %v384
    %v797 = vunpack.c.l.b16 %v385
    %v798 = vunpack.c.l.b16 %v386
    %v799 = vunpack.c.l.b16 %v387
    %v800 = vunpack.c.l.b16 %v388
    %v801 = vunpack.c.l.b16 %v389
    %v802 = vunpack.c.l.b16 %v390
    %v803 = vunpack.c.l.b16 %v391
    %v804 = vunpack.c.l.b16 %v392
    %v805 = vunpack.c.l.b16 %v393
    %v806 = vunpack.c.l.b16 %v394
    %v807 = vunpack.c.l.b16 %v395
    %v808 = vunpack.c.l.b16 %v396
    %v809 = vunpack.c.l.b16 %v397
    %v810 = vunpack.c.l.b16 %v398
    %v811 = vunpack.c.l.b16 %v399
    %v812 = vunpack.c.l.b16 %v400
    %v813 = vunpack.c.l.b16 %v401
    %v814 = vunpack.c.l.b16 %v402
    %v815 = vunpack.c.l.b16 %v403
    %v816 = vunpack.c.l.b16 %v404
    %v817 = vunpack.c.l.b16 %v405
    %v818 = vunpack.c.l.b16 %v406
    %v819 = vunpack.c.l.b16 %v407
    %v820 = vunpack.c.l.b16 %v408
    %v821 = vunpack.c.l.b16 %v409
    %v822 = vunpack.c.l.b16 %v410
    %v823 = vunpack.c.l.b16 %v411
    %v824 = vunpack.c.l.b16 %v412
    %v825 = vunpack.c.l.b16 %v413
    %v826 = vunpack.c.l.b16 %v414
    %v827 = vunpack.c.l.b16 %v415
    %v828 = vunpack.c.l.b16 %v416
    %v829 = vunpack.c.l.b16 %v417
    %v830 = vunpack.c.l.b16 %v418
    %v831 = vunpack.c.l.b16 %v419
    %v832 = vunpack.c.l.b16 %v420
    %v833 = vunpack.c.l.b16 %v421
    %v834 = vunpack.c.l.b16 %v422
    %v835 = vunpack.c.l.b16 %v423
    %v836 = vunpack.c.l.b16 %v424
    %v837 = vunpack.c.l.b16 %v425
    %v838 = vunpack.c.l.b16 %v426
    %v839 = vunpack.c.l.b16 %v427
    %v840 = vunpack.c.l.b16 %v428
    %v841 = vunpack.c.l.b16 %v429
    %v842 = vunpack.c.l.b16 %v430
    %v843 = vunpack.c.l.b16 %v431
    %v844 = vunpack.c.l.b16 %v432
    %v845 = vunpack.c.l.b16 %v433
    %v846 = vunpack.c.l.b16 %v434
    %v847 = vunpack.c.l.b16 %v435
    %v848 = vunpack.c.l.b16 %v436
    %v849 = vunpack.c.l.b16 %v437
    %v850 = vunpack.c.l.b16 %v438
    %v851 = vunpack.c.l.b16 %v439
    %v852 = vunpack.c.l.b16 %v440
    %v853 = vunpack.c.l.b16 %v441
    %v854 = vunpack.c.l.b16 %v442
    %v855 = vunpack.c.l.b16 %v443
    %v856 = vunpack.c.l.b16 %v444
    %v857 = vunpack.c.l.b16 %v445
    %v858 = vunpack.c.l.b16 %v446
    %v859 = vunpack.c.l.b16 %v447
    %v860 = vunpack.c.l.b16 %v448
    %v861 = vunpack.c.l.b16 %v449
    %v862 = vunpack.c.l.b16 %v450
    %v863 = vunpack.c.l.b16 %v451
    %v864 = vunpack.c.l.b16 %v452
    %v865 = vunpack.c.l.b16 %v453
    %v866 = vunpack.c.l.b16 %v454
    %v867 = vunpack.c.l.b16 %v455
    %v868 = vunpack.c.l.b16 %v456
    %v869 = vunpack.c.l.b16 %v457
    %v870 = vunpack.c.l.b16 %v458
    %v871 = vunpack.c.l.b16 %v459
    %v872 = vunpack.c.l.b16 %v460
    %v873 = vpack.c.b16 %v682, %v681
    %v874 = vpack.c.b16 %v684, %v683
    %v875 = vpack.c.b16 %v686, %v685
    %v876 = vpack.c.b16 %v688, %v687
    %v877 = vpack.c.b16 %v690, %v689
    %v878 = vpack.c.b16 %v692, %v691
    %v879 = vpack.c.b16 %v694, %v693
    %v880 = vpack.c.b16 %v696, %v695
    %v881 = vpack.c.b16 %v698, %v697
    %v882 = vpack.c.b16 %v700, %v699
    %v883 = vpack.c.b16 %v702, %v701
    %v884 = vpack.c.b16 %v704, %v703
    %v885 = vpack.c.b16 %v706, %v705
    %v886 = vpack.c.b16 %v708, %v707
    %v887 = vpack.c.b16 %v710, %v709
    %v888 = vpack.c.b16 %v712, %v711
    %v889 = vpack.c.b16 %v714, %v713
    %v890 = vpack.c.b16 %v716, %v715
    %v891 = vpack.c.b16 %v718, %v717
    %v892 = vpack.c.b16 %v720, %v719
    %v893 = vpack.c.b16 %v722, %v721
    %v894 = vpack.c.b16 %v724, %v723
    %v895 = vpack.c.b16 %v726, %v725
    %v896 = vpack.c.b16 %v728, %v727
    %v897 = vpack.c.b16 %v730, %v729
    %v898 = vpack.c.b16 %v732, %v731
    %v899 = vpack.c.b16 %v734, %v733
    %v900 = vpack.c.b16 %v736, %v735
    %v901 = vpack.c.b16 %v738, %v737
    %v902 = vpack.c.b16 %v740, %v739
    %v903 = vpack.c.b16 %v742, %v741
    %v904 = vpack.c.b16 %v744, %v743
    %v905 = vpack.c.b16 %v746, %v745
    %v906 = vpack.c.b16 %v748, %v747
    %v907 = vpack.c.b16 %v750, %v749
    %v908 = vpack.c.b16 %v752, %v751
    %v909 = vpack.c.b16 %v754, %v753
    %v910 = vpack.c.b16 %v756, %v755
    %v911 = vpack.c.b16 %v758, %v757
    %v912 = vpack.c.b16 %v760, %v759
    %v913 = vpack.c.b16 %v762, %v761
    %v914 = vpack.c.b16 %v764, %v763
    %v915 = vpack.c.b16 %v766, %v765
    %v916 = vpack.c.b16 %v768, %v767
    %v917 = vpack.c.b16 %v770, %v769
    %v918 = vpack.c.b16 %v772, %v771
    %v919 = vpack.c.b16 %v774, %v773
    %v920 = vpack.c.b16 %v776, %v775
    %v921 = vpack.c.b16 %v778, %v777
    %v922 = vpack.c.b16 %v780, %v779
    %v923 = vpack.c.b16 %v782, %v781
    %v924 = vpack.c.b16 %v784, %v783
    %v925 = vpack.c.b16 %v786, %v785
    %v926 = vpack.c.b16 %v788, %v787
    %v927 = vpack.c.b16 %v790, %v789
    %v928 = vpack.c.b16 %v792, %v791
    %v929 = vpack.c.b16 %v794, %v793
    %v930 = vpack.c.b16 %v796, %v795
    %v931 = vpack.c.b16 %v798, %v797
    %v932 = vpack.c.b16 %v800, %v799
    %v933 = vpack.c.b16 %v802, %v801
    %v934 = vpack.c.b16 %v804, %v803
    %v935 = vpack.c.b16 %v806, %v805
    %v936 = vpack.c.b16 %v808, %v807
    %v937 = vpack.c.b16 %v810, %v809
    %v938 = vpack.c.b16 %v812, %v811
    %v939 = vpack.c.b16 %v814, %v813
    %v940 = vpack.c.b16 %v816, %v815
    %v941 = vpack.c.b16 %v818, %v817
    %v942 = vpack.c.b16 %v820, %v819
    %v943 = vpack.c.b16 %v822, %v821
    %v944 = vpack.c.b16 %v824, %v823
    %v945 = vpack.c.b16 %v826, %v825
    %v946 = vpack.c.b16 %v828, %v827
    %v947 = vpack.c.b16 %v830, %v829
    %v948 = vpack.c.b16 %v832, %v831
    %v949 = vpack.c.b16 %v834, %v833
    %v950 = vpack.c.b16 %v836, %v835
    %v951 = vpack.c.b16 %v838, %v837
    %v952 = vpack.c.b16 %v840, %v839
    %v953 = vpack.c.b16 %v842, %v841
    %v954 = vpack.c.b16 %v844, %v843
    %v955 = vpack.c.b16 %v846, %v845
    %v956 = vpack.c.b16 %v848, %v847
    %v957 = vpack.c.b16 %v850, %v849
    %v958 = vpack.c.b16 %v852, %v851
    %v959 = vpack.c.b16 %v854, %v853
    %v960 = vpack.c.b16 %v856, %v855
    %v961 = vpack.c.b16 %v858, %v857
    %v962 = vpack.c.b16 %v860, %v859
    %v963 = vpack.c.b16 %v862, %v861
    %v964 = vpack.c.b16 %v864, %v863
    %v965 = vpack.c.b16 %v866, %v865
    %v966 = vpack.c.b16 %v868, %v867
    %v967 = vpack.c.b16 %v870, %v869
    %v968 = vpack.c.b16 %v872, %v871
    %1065 = vmatpush.bf16.msra.mxu0 %v880
    %1066 = vmatpush.bf16.msra.mxu0 %v879
    %1067 = vmatpush.bf16.msra.mxu0 %v878
    %1068 = vmatpush.bf16.msra.mxu0 %v877
    %1069 = vmatpush.bf16.msra.mxu0 %v876
    %1070 = vmatpush.bf16.msra.mxu0 %v875
    %1071 = vmatpush.bf16.msra.mxu0 %v874
    %1072 = vmatpush.bf16.msra.mxu0 %v873
    %1073 = vmatmul.bf16.gmra.mxu0 %v463
    %v1074 = vpop.f32.mrf.mxu0
    %v1075 = vadd.f32 0.0, %v1074
    %v1076 = vpop.f32.mrf.mxu0
    %1077 = vdwg.mxu0
    %1078 = vmatpush.bf16.msra.mxu0 %v888
    %1079 = vmatpush.bf16.msra.mxu0 %v887
    %1080 = vmatpush.bf16.msra.mxu0 %v886
    %1081 = vmatpush.bf16.msra.mxu0 %v885
    %1082 = vmatpush.bf16.msra.mxu0 %v884
    %1083 = vmatpush.bf16.msra.mxu0 %v883
    %1084 = vmatpush.bf16.msra.mxu0 %v882
    %1085 = vmatpush.bf16.msra.mxu0 %v881
    %1086 = vmatmul.bf16.gmra.mxu0 %v464
    %v1087 = vpop.f32.mrf.mxu0
    %v1088 = vadd.f32 %v1075, %v1087
    %v1089 = vpop.f32.mrf.mxu0
    %1090 = vdwg.mxu0
    %1091 = vmatpush.bf16.msra.mxu0 %v896
    %1092 = vmatpush.bf16.msra.mxu0 %v895
    %1093 = vmatpush.bf16.msra.mxu0 %v894
    %1094 = vmatpush.bf16.msra.mxu0 %v893
    %1095 = vmatpush.bf16.msra.mxu0 %v892
    %1096 = vmatpush.bf16.msra.mxu0 %v891
    %1097 = vmatpush.bf16.msra.mxu0 %v890
    %1098 = vmatpush.bf16.msra.mxu0 %v889
    %1099 = vmatmul.bf16.gmra.mxu0 %v465
    %v1100 = vpop.f32.mrf.mxu0
    %v1101 = vadd.f32 %v1088, %v1100
    %v1102 = vpop.f32.mrf.mxu0
    %1103 = vdwg.mxu0
    %1104 = vmatpush.bf16.msra.mxu0 %v904
    %1105 = vmatpush.bf16.msra.mxu0 %v903
    %1106 = vmatpush.bf16.msra.mxu0 %v902
    %1107 = vmatpush.bf16.msra.mxu0 %v901
    %1108 = vmatpush.bf16.msra.mxu0 %v900
    %1109 = vmatpush.bf16.msra.mxu0 %v899
    %1110 = vmatpush.bf16.msra.mxu0 %v898
    %1111 = vmatpush.bf16.msra.mxu0 %v897
    %1112 = vmatmul.bf16.gmra.mxu0 %v466
    %v1113 = vpop.f32.mrf.mxu0
    %v1114 = vadd.f32 %v1101, %v1113
    %v1115 = vpop.f32.mrf.mxu0
    %1116 = vdwg.mxu0
    %1117 = vmatpush.bf16.msra.mxu0 %v912
    %1118 = vmatpush.bf16.msra.mxu0 %v911
    %1119 = vmatpush.bf16.msra.mxu0 %v910
    %1120 = vmatpush.bf16.msra.mxu0 %v909
    %1121 = vmatpush.bf16.msra.mxu0 %v908
    %1122 = vmatpush.bf16.msra.mxu0 %v907
    %1123 = vmatpush.bf16.msra.mxu0 %v906
    %1124 = vmatpush.bf16.msra.mxu0 %v905
    %1125 = vmatmul.bf16.gmra.mxu0 %v467
    %v1126 = vpop.f32.mrf.mxu0
    %v1127 = vadd.f32 %v1114, %v1126
    %v1128 = vpop.f32.mrf.mxu0
    %1129 = vdwg.mxu0
    %1130 = vmatpush.bf16.msra.mxu0 %v920
    %1131 = vmatpush.bf16.msra.mxu0 %v919
    %1132 = vmatpush.bf16.msra.mxu0 %v918
    %1133 = vmatpush.bf16.msra.mxu0 %v917
    %1134 = vmatpush.bf16.msra.mxu0 %v916
    %1135 = vmatpush.bf16.msra.mxu0 %v915
    %1136 = vmatpush.bf16.msra.mxu0 %v914
    %1137 = vmatpush.bf16.msra.mxu0 %v913
    %1138 = vmatmul.bf16.gmra.mxu0 %v468
    %v1139 = vpop.f32.mrf.mxu0
    %v1140 = vadd.f32 %v1127, %v1139
    %v1141 = vpop.f32.mrf.mxu0
    %1142 = vdwg.mxu0
    %1143 = vmatpush.bf16.msra.mxu0 %v928
    %1144 = vmatpush.bf16.msra.mxu0 %v927
    %1145 = vmatpush.bf16.msra.mxu0 %v926
    %1146 = vmatpush.bf16.msra.mxu0 %v925
    %1147 = vmatpush.bf16.msra.mxu0 %v924
    %1148 = vmatpush.bf16.msra.mxu0 %v923
    %1149 = vmatpush.bf16.msra.mxu0 %v922
    %1150 = vmatpush.bf16.msra.mxu0 %v921
    %1151 = vmatmul.bf16.gmra.mxu0 %v469
    %v1152 = vpop.f32.mrf.mxu0
    %v1153 = vadd.f32 %v1140, %v1152
    %v1154 = vpop.f32.mrf.mxu0
    %1155 = vdwg.mxu0
    %1156 = vmatpush.bf16.msra.mxu0 %v936
    %1157 = vmatpush.bf16.msra.mxu0 %v935
    %1158 = vmatpush.bf16.msra.mxu0 %v934
    %1159 = vmatpush.bf16.msra.mxu0 %v933
    %1160 = vmatpush.bf16.msra.mxu0 %v932
    %1161 = vmatpush.bf16.msra.mxu0 %v931
    %1162 = vmatpush.bf16.msra.mxu0 %v930
    %1163 = vmatpush.bf16.msra.mxu0 %v929
    %1164 = vmatmul.bf16.gmra.mxu0 %v470
    %v1165 = vpop.f32.mrf.mxu0
    %v1166 = vadd.f32 %v1153, %v1165
    %v1167 = vpop.f32.mrf.mxu0
    %1168 = vdwg.mxu0
    %1169 = vmatpush.bf16.msra.mxu0 %v944
    %1170 = vmatpush.bf16.msra.mxu0 %v943
    %1171 = vmatpush.bf16.msra.mxu0 %v942
    %1172 = vmatpush.bf16.msra.mxu0 %v941
    %1173 = vmatpush.bf16.msra.mxu0 %v940
    %1174 = vmatpush.bf16.msra.mxu0 %v939
    %1175 = vmatpush.bf16.msra.mxu0 %v938
    %1176 = vmatpush.bf16.msra.mxu0 %v937
    %1177 = vmatmul.bf16.gmra.mxu0 %v473
    %v1178 = vpop.f32.mrf.mxu0
    %v1179 = vadd.f32 %v1166, %v1178
    %v1180 = vpop.f32.mrf.mxu0
    %1181 = vdwg.mxu0
    %1182 = vmatpush.bf16.msra.mxu0 %v952
    %1183 = vmatpush.bf16.msra.mxu0 %v951
    %1184 = vmatpush.bf16.msra.mxu0 %v950
    %1185 = vmatpush.bf16.msra.mxu0 %v949
    %1186 = vmatpush.bf16.msra.mxu0 %v948
    %1187 = vmatpush.bf16.msra.mxu0 %v947
    %1188 = vmatpush.bf16.msra.mxu0 %v946
    %1189 = vmatpush.bf16.msra.mxu0 %v945
    %1190 = vmatmul.bf16.gmra.mxu0 %v474
    %v1191 = vpop.f32.mrf.mxu0
    %v1192 = vadd.f32 %v1179, %v1191
    %v1193 = vpop.f32.mrf.mxu0
    %1194 = vdwg.mxu0
    %1195 = vmatpush.bf16.msra.mxu0 %v960
    %1196 = vmatpush.bf16.msra.mxu0 %v959
    %1197 = vmatpush.bf16.msra.mxu0 %v958
    %1198 = vmatpush.bf16.msra.mxu0 %v957
    %1199 = vmatpush.bf16.msra.mxu0 %v956
    %1200 = vmatpush.bf16.msra.mxu0 %v955
    %1201 = vmatpush.bf16.msra.mxu0 %v954
    %1202 = vmatpush.bf16.msra.mxu0 %v953
    %1203 = vmatmul.bf16.gmra.mxu0 %v475
    %v1204 = vpop.f32.mrf.mxu0
    %v1205 = vadd.f32 %v1192, %v1204
    %v1206 = vpop.f32.mrf.mxu0
    %1207 = vdwg.mxu0
    %1208 = vmatpush.bf16.msra.mxu0 %v968
    %1209 = vmatpush.bf16.msra.mxu0 %v967
    %1210 = vmatpush.bf16.msra.mxu0 %v966
    %1211 = vmatpush.bf16.msra.mxu0 %v965
    %1212 = vmatpush.bf16.msra.mxu0 %v964
    %1213 = vmatpush.bf16.msra.mxu0 %v963
    %1214 = vmatpush.bf16.msra.mxu0 %v962
    %1215 = vmatpush.bf16.msra.mxu0 %v961
    %1216 = vmatmul.bf16.gmra.mxu0 %v476
    %v1217 = vpop.f32.mrf.mxu0
    %v1218 = vadd.f32 %v1205, %v1217
    %v1219 = vpop.f32.mrf.mxu0
    %1220 = vdwg.mxu0
    %v1221 = vadd.f32 %v266, %v1218
    %1222 = vst [vmem:[#allocation2] sm:$0x3] %v1221
    // Predicated region
    $region154: #{tpu_custom_call.1} parent=1 // pred_check
      %p1223 = pneg %p261
    $region155: #{tpu_custom_call.1} parent=1 // pred_check_branch
      %1225 = sbr.rel (%p1223) target = $region157
    $region156: #{tpu_custom_call.1} parent=1 // pred_region
      %v1226 = vld [vmem:[#allocation2] sm:$0x3]
      %v1227 = vld [vmem:[#allocation9] sm:$0x1]
      %v1229 = vperm.slane %v1227, 0
      %v1231 = vadd.f32 %v1226, %v1229
      %v1232 = vld [vmem:[#allocation10] sm:$0x1]
      %v1233 = vld [vmem:[#allocation12] sm:$0x1]
      %vm1234 = vcmask 1041408
      %v1235 = vsel %vm1234, %v1231, 0.0
      %1236 = vadd.xlane.f32.xlu0 %v1235
      %v1237 = vpop.xlane.xlu0 %1236
      %v1238 = vrcp.pop 128.0
      %v1239 = vmul.f32 128.0, %v1238
      %v1240 = vsub.f32 1.0, %v1239
      %v1241 = vmul.f32 %v1238, %v1240
      %v1242 = vadd.f32 %v1238, %v1241
      %vm1243 = vweird.f32 %v1238
      %v1244 = vsel %vm1243, %v1238, %v1242
      %v1245 = vmul.f32 %v1237, %v1244
      %v1246 = vsub.f32 %v1231, %v1245
      %v1247 = vmul.f32 %v1246, %v1246
      %v1248 = vsel %vm1234, %v1247, 0.0
      %1249 = vadd.xlane.f32.xlu0 %v1248
      %v1250 = vpop.xlane.xlu0 %1249
      %v1251 = vmul.f32 %v1250, %v1244
      %v1252 = vadd.f32 %v1251, 1e-05
      %v1253 = vrsqrt.pop %v1252
      %v1254 = vmul.f32 %v1253, %v1252
      %v1255 = vmul.f32 %v1254, %v1253
      %v1256 = vmul.f32 0.5, %v1255
      %v1257 = vsub.f32 1.5, %v1256
      %v1258 = vmul.f32 %v1253, %v1257
      %vm1259 = vweird.f32 %v1252
      %vm1260 = vweird.f32 %v1253
      %vm1261 = vmor %vm1259, %vm1260
      %v1262 = vsel %vm1261, %v1253, %v1258
      %v1263 = vmul.f32 %v1246, %v1262
      %v1265 = vperm.slane %v1232, 0
      %v1267 = vmul.f32 %v1263, %v1265
      %v1269 = vperm.slane %v1233, 0
      %v1271 = vadd.f32 %v1267, %v1269
      %v1272 = vmul.f32 %v1271, 0.5
      %v1273 = vmul.f32 %v1271, 0.70710677
      %v1274 = vmul.f32 %v1273, %v1273
      %v1275 = vmin.f32 16.0, %v1274
      %v1276 = vmul.f32 %v1275, 2.1237322e-06
      %v1277 = vadd.f32 %v1276, 0.00028619796
      %v1278 = vmul.f32 %v1275, %v1277
      %v1279 = vadd.f32 %v1278, 0.0036580483
      %v1280 = vmul.f32 %v1275, %v1279
      %v1281 = vadd.f32 %v1280, 0.05243302
      %v1282 = vmul.f32 %v1275, %v1281
      %v1283 = vadd.f32 %v1282, 0.18741608
      %v1284 = vmul.f32 %v1275, %v1283
      %v1285 = vadd.f32 %v1284, 1.1283791
      %v1286 = vmul.f32 %v1273, %v1285
      %v1287 = vmul.f32 %v1275, 3.8918573e-05
      %v1288 = vadd.f32 %v1287, 0.001143296
      %v1289 = vmul.f32 %v1275, %v1288
      %v1290 = vadd.f32 %v1289, 0.014752088
      %v1291 = vmul.f32 %v1275, %v1290
      %v1292 = vadd.f32 %v1291, 0.112945676
      %v1293 = vmul.f32 %v1275, %v1292
      %v1294 = vadd.f32 %v1293, 0.4994258
      %v1295 = vmul.f32 %v1275, %v1294
      %v1296 = vadd.f32 %v1295, 1.0
      %v1297 = vrcp.pop %v1296
      %v1298 = vmul.f32 %v1296, %v1297
      %v1299 = vsub.f32 1.0, %v1298
      %v1300 = vmul.f32 %v1297, %v1299
      %v1301 = vadd.f32 %v1297, %v1300
      %vm1302 = vweird.f32 %v1296
      %vm1303 = vweird.f32 %v1297
      %vm1304 = vmor %vm1302, %vm1303
      %v1305 = vsel %vm1304, %v1297, %v1301
      %v1306 = vand.u32 2147483647, %v1296
      %vm1307 = vcmp.eq.f32.partialorder %v1306, 8.507059e+37
      %v1308 = vand.u32 %v1296, 2147483648
      %v1309 = vor.u32 1.1754944e-38, %v1308
      %v1310 = vsel %vm1307, %v1309, %v1305
      %v1311 = vmul.f32 %v1286, %v1310
      %v1312 = vmin.f32 %v1311, 1.0
      %v1313 = vmax.f32 %v1312, -1.0
      %v1314 = vadd.f32 %v1313, 1.0
      %v1315 = vmul.f32 %v1272, %v1314
      %v1316 = vlaneseq
      %v1317 = vshrl.u32 %v1316, 7
      %v1318 = vadd.s32 %v1317, 8
      %v1319 = vld [vmem:[#allocation13] sm:$0xff]
      %v1320 = vld [vmem:[#allocation13 + $0x8] sm:$0xff]
      %v1321 = vld [vmem:[#allocation13 + $0x10] sm:$0xff]
      %v1322 = vld [vmem:[#allocation13 + $0x18] sm:$0xff]
      %vm1323 = vcmp.eq.s32.totalorder %v1317, 0
      %vm1324 = vcmp.eq.s32.totalorder %v1318, 0
      %v1326 = vrot.slane %v1315, 1
      %v1327 = vsel %vm1323, 1, 0
      %v1328 = vsel %vm1324, 1, 0
      %vm1329 = vcmp.eq.s32.totalorder %v1327, 1
      %vm1330 = vcmp.eq.s32.totalorder %v1328, 1
      %v1331 = vperm.slane %v1315, 0
      %v1332 = vperm.slane %v1326, 0
      %v1335 = vsel %vm1329, %v1331, 0.0
      %v1336 = vsel %vm1330, %v1331, 0.0
      %v1337 = vsel %vm1329, %v1332, 0.0
      %v1338 = vsel %vm1330, %v1332, 0.0
      %v1339 = vadd.f32 %v1319, %v1335
      %v1340 = vadd.f32 %v1320, %v1336
      %v1341 = vadd.f32 %v1321, %v1337
      %v1342 = vadd.f32 %v1322, %v1338
      %v1343 = vld [vmem:[#allocation15] sm:$0x3]
      %v1344 = vpack.c.bf16 %v1340, %v1339
      %v1345 = vpack.c.bf16 %v1342, %v1341
      %v1346 = vld [vmem:[#allocation16] sm:$0xff]
      %v1347 = vld [vmem:[#allocation16 + $0x8] sm:$0xf]
      %v1348 = vld [vmem:[#allocation16 + $0xc] sm:$0xff]
      %v1349 = vld [vmem:[#allocation16 + $0x14] sm:$0xf]
      %v1350 = vld [vmem:[#allocation16 + $0x18] sm:$0xff]
      %v1351 = vld [vmem:[#allocation16 + $0x20] sm:$0xf]
      %v1352 = vld [vmem:[#allocation16 + $0x24] sm:$0xff]
      %v1353 = vld [vmem:[#allocation16 + $0x2c] sm:$0xf]
      %v1354 = vld [vmem:[#allocation16 + $0x30] sm:$0xff]
      %v1355 = vld [vmem:[#allocation16 + $0x38] sm:$0xf]
      %v1356 = vld [vmem:[#allocation16 + $0x3c] sm:$0xff]
      %v1357 = vld [vmem:[#allocation16 + $0x44] sm:$0xf]
      %v1358 = vld [vmem:[#allocation16 + $0x48] sm:$0xff]
      %v1359 = vld [vmem:[#allocation16 + $0x50] sm:$0xf]
      %v1360 = vld [vmem:[#allocation16 + $0x54] sm:$0xff]
      %v1361 = vld [vmem:[#allocation16 + $0x5c] sm:$0xf]
      %v1362 = vld [vmem:[#allocation16 + $0x60] sm:$0xff]
      %v1363 = vld [vmem:[#allocation16 + $0x68] sm:$0xf]
      %v1364 = vld [vmem:[#allocation16 + $0x6c] sm:$0xff]
      %v1365 = vld [vmem:[#allocation16 + $0x74] sm:$0xf]
      %v1366 = vld [vmem:[#allocation16 + $0x78] sm:$0xff]
      %v1367 = vld [vmem:[#allocation16 + $0x80] sm:$0xf]
      %v1368 = vld [vmem:[#allocation16 + $0x84] sm:$0xff]
      %v1369 = vld [vmem:[#allocation16 + $0x8c] sm:$0xf]
      %v1370 = vld [vmem:[#allocation16 + $0x90] sm:$0xff]
      %v1371 = vld [vmem:[#allocation16 + $0x98] sm:$0xf]
      %v1372 = vld [vmem:[#allocation16 + $0x9c] sm:$0xff]
      %v1373 = vld [vmem:[#allocation16 + $0xa4] sm:$0xf]
      %v1374 = vld [vmem:[#allocation16 + $0xa8] sm:$0xff]
      %v1375 = vld [vmem:[#allocation16 + $0xb0] sm:$0xf]
      %v1376 = vld [vmem:[#allocation16 + $0xb4] sm:$0xff]
      %v1377 = vld [vmem:[#allocation16 + $0xbc] sm:$0xf]
      %v1410 = vunpack.c.l.b16 %v1346
      %v1411 = vunpack.c.h.b16 %v1346
      %v1412 = vunpack.c.l.b16 %v1347
      %v1413 = vunpack.c.l.b16 %v1348
      %v1414 = vunpack.c.h.b16 %v1348
      %v1415 = vunpack.c.l.b16 %v1349
      %v1416 = vunpack.c.l.b16 %v1350
      %v1417 = vunpack.c.h.b16 %v1350
      %v1418 = vunpack.c.l.b16 %v1351
      %v1419 = vunpack.c.l.b16 %v1352
      %v1420 = vunpack.c.h.b16 %v1352
      %v1421 = vunpack.c.l.b16 %v1353
      %v1422 = vunpack.c.l.b16 %v1354
      %v1423 = vunpack.c.h.b16 %v1354
      %v1424 = vunpack.c.l.b16 %v1355
      %v1425 = vunpack.c.l.b16 %v1356
      %v1426 = vunpack.c.h.b16 %v1356
      %v1427 = vunpack.c.l.b16 %v1357
      %v1428 = vunpack.c.l.b16 %v1358
      %v1429 = vunpack.c.h.b16 %v1358
      %v1430 = vunpack.c.l.b16 %v1359
      %v1431 = vunpack.c.l.b16 %v1360
      %v1432 = vunpack.c.h.b16 %v1360
      %v1433 = vunpack.c.l.b16 %v1361
      %v1434 = vunpack.c.l.b16 %v1362
      %v1435 = vunpack.c.h.b16 %v1362
      %v1436 = vunpack.c.l.b16 %v1363
      %v1437 = vunpack.c.l.b16 %v1364
      %v1438 = vunpack.c.h.b16 %v1364
      %v1439 = vunpack.c.l.b16 %v1365
      %v1440 = vunpack.c.l.b16 %v1366
      %v1441 = vunpack.c.h.b16 %v1366
      %v1442 = vunpack.c.l.b16 %v1367
      %v1443 = vunpack.c.l.b16 %v1368
      %v1444 = vunpack.c.h.b16 %v1368
      %v1445 = vunpack.c.l.b16 %v1369
      %v1446 = vunpack.c.l.b16 %v1370
      %v1447 = vunpack.c.h.b16 %v1370
      %v1448 = vunpack.c.l.b16 %v1371
      %v1449 = vunpack.c.l.b16 %v1372
      %v1450 = vunpack.c.h.b16 %v1372
      %v1451 = vunpack.c.l.b16 %v1373
      %v1452 = vunpack.c.l.b16 %v1374
      %v1453 = vunpack.c.h.b16 %v1374
      %v1454 = vunpack.c.l.b16 %v1375
      %v1455 = vunpack.c.l.b16 %v1376
      %v1456 = vunpack.c.h.b16 %v1376
      %v1457 = vunpack.c.l.b16 %v1377
      %v1458 = vpack.c.b16 %v1413, %v1410
      %v1459 = vpack.c.b16 %v1414, %v1411
      %v1460 = vpack.c.b16 %v1415, %v1412
      %v1461 = vpack.c.b16 %v1419, %v1416
      %v1462 = vpack.c.b16 %v1420, %v1417
      %v1463 = vpack.c.b16 %v1421, %v1418
      %v1464 = vpack.c.b16 %v1425, %v1422
      %v1465 = vpack.c.b16 %v1426, %v1423
      %v1466 = vpack.c.b16 %v1427, %v1424
      %v1467 = vpack.c.b16 %v1431, %v1428
      %v1468 = vpack.c.b16 %v1432, %v1429
      %v1469 = vpack.c.b16 %v1433, %v1430
      %v1470 = vpack.c.b16 %v1437, %v1434
      %v1471 = vpack.c.b16 %v1438, %v1435
      %v1472 = vpack.c.b16 %v1439, %v1436
      %v1473 = vpack.c.b16 %v1443, %v1440
      %v1474 = vpack.c.b16 %v1444, %v1441
      %v1475 = vpack.c.b16 %v1445, %v1442
      %v1476 = vpack.c.b16 %v1449, %v1446
      %v1477 = vpack.c.b16 %v1450, %v1447
      %v1478 = vpack.c.b16 %v1451, %v1448
      %v1479 = vpack.c.b16 %v1455, %v1452
      %v1480 = vpack.c.b16 %v1456, %v1453
      %v1481 = vpack.c.b16 %v1457, %v1454
      %1506 = vmatpush.bf16.msra.mxu0 %v1479
      %1507 = vmatpush.bf16.msra.mxu0 %v1476
      %1508 = vmatpush.bf16.msra.mxu0 %v1473
      %1509 = vmatpush.bf16.msra.mxu0 %v1470
      %1510 = vmatpush.bf16.msra.mxu0 %v1467
      %1511 = vmatpush.bf16.msra.mxu0 %v1464
      %1512 = vmatpush.bf16.msra.mxu0 %v1461
      %1513 = vmatpush.bf16.msra.mxu0 %v1458
      %1514 = vmatmul.bf16.gmra.mxu0 %v1344
      %v1515 = vpop.f32.mrf.mxu0
      %v1516 = vadd.f32 0.0, %v1515
      %v1517 = vpop.f32.mrf.mxu0
      %v1518 = vadd.f32 0.0, %v1517
      %1519 = vmatmul.bf16.gmra.mxu0 %v1345
      %v1520 = vpop.f32.mrf.mxu0
      %v1521 = vadd.f32 0.0, %v1520
      %v1522 = vpop.f32.mrf.mxu0
      %v1523 = vadd.f32 0.0, %v1522
      %1524 = vdwg.mxu0
      %1525 = vmatpush.bf16.msra.mxu0 %v1480
      %1526 = vmatpush.bf16.msra.mxu0 %v1477
      %1527 = vmatpush.bf16.msra.mxu0 %v1474
      %1528 = vmatpush.bf16.msra.mxu0 %v1471
      %1529 = vmatpush.bf16.msra.mxu0 %v1468
      %1530 = vmatpush.bf16.msra.mxu0 %v1465
      %1531 = vmatpush.bf16.msra.mxu0 %v1462
      %1532 = vmatpush.bf16.msra.mxu0 %v1459
      %1533 = vmatmul.bf16.gmra.mxu0 %v1344
      %v1534 = vpop.f32.mrf.mxu0
      %v1535 = vadd.f32 0.0, %v1534
      %v1536 = vpop.f32.mrf.mxu0
      %v1537 = vadd.f32 0.0, %v1536
      %1538 = vmatmul.bf16.gmra.mxu0 %v1345
      %v1539 = vpop.f32.mrf.mxu0
      %v1540 = vadd.f32 0.0, %v1539
      %v1541 = vpop.f32.mrf.mxu0
      %v1542 = vadd.f32 0.0, %v1541
      %1543 = vdwg.mxu0
      %1544 = vmatpush.bf16.msra.mxu0 %v1481
      %1545 = vmatpush.bf16.msra.mxu0 %v1478
      %1546 = vmatpush.bf16.msra.mxu0 %v1475
      %1547 = vmatpush.bf16.msra.mxu0 %v1472
      %1548 = vmatpush.bf16.msra.mxu0 %v1469
      %1549 = vmatpush.bf16.msra.mxu0 %v1466
      %1550 = vmatpush.bf16.msra.mxu0 %v1463
      %1551 = vmatpush.bf16.msra.mxu0 %v1460
      %1552 = vmatmul.bf16.gmra.mxu0 %v1344
      %v1553 = vpop.f32.mrf.mxu0
      %v1554 = vadd.f32 0.0, %v1553
      %v1555 = vpop.f32.mrf.mxu0
      %v1556 = vadd.f32 0.0, %v1555
      %1557 = vmatmul.bf16.gmra.mxu0 %v1345
      %v1558 = vpop.f32.mrf.mxu0
      %v1559 = vadd.f32 0.0, %v1558
      %v1560 = vpop.f32.mrf.mxu0
      %v1561 = vadd.f32 0.0, %v1560
      %1562 = vdwg.mxu0
      %v1563 = vld [vmem:[%s8] sm:$0x7]
      %v1565 = vperm.slane %v1563, 0
      %v1566 = vperm.slane %v1563, 1
      %v1567 = vperm.slane %v1563, 2
      %v1571 = vadd.f32 %v1516, %v1565
      %v1572 = vadd.f32 %v1535, %v1566
      %v1573 = vadd.f32 %v1554, %v1567
      %v1574 = vadd.f32 %v1518, %v1565
      %v1575 = vadd.f32 %v1537, %v1566
      %v1576 = vadd.f32 %v1556, %v1567
      %v1577 = vadd.f32 %v1521, %v1565
      %v1578 = vadd.f32 %v1540, %v1566
      %v1579 = vadd.f32 %v1559, %v1567
      %v1580 = vadd.f32 %v1523, %v1565
      %v1581 = vadd.f32 %v1542, %v1566
      %v1582 = vadd.f32 %v1561, %v1567
      %v1583 = vpack.c.bf16 %v1571, %v1571
      %v1584 = vpack.c.bf16 %v1574, %v1574
      %v1585 = vpack.c.bf16 %v1577, %v1577
      %v1586 = vpack.c.bf16 %v1580, %v1580
      %v1587 = vpack.c.bf16 %v1572, %v1572
      %v1588 = vpack.c.bf16 %v1575, %v1575
      %v1589 = vpack.c.bf16 %v1578, %v1578
      %v1590 = vpack.c.bf16 %v1581, %v1581
      %v1593 = vunpack.c.l.b16 %v1583
      %v1594 = vunpack.c.l.b16 %v1584
      %v1595 = vpack.c.b16 %v1594, %v1593
      %v1599 = vunpack.c.l.b16 %v1587
      %v1600 = vunpack.c.l.b16 %v1588
      %v1601 = vpack.c.b16 %v1600, %v1599
      %1603 = vmatpush.bf16.xpose.msra.mxu0 0
      %1604 = vmatpush.bf16.xpose.msra.mxu0 0
      %1605 = vmatpush.bf16.xpose.msra.mxu0 0
      %1606 = vmatpush.bf16.xpose.msra.mxu0 0
      %1607 = vmatpush.bf16.xpose.msra.mxu0 0
      %1608 = vmatpush.bf16.xpose.msra.mxu0 0
      %1609 = vmatpush.bf16.xpose.msra.mxu0 0
      %1610 = vmatpush.bf16.xpose.msra.mxu0 %v1601
      %1611 = vmatmul.bf16.gmra.mxu0 %v1595
      %v1612 = vpop.f32.mrf.mxu0
      %v1613 = vadd.f32 0.0, %v1612
      %v1614 = vpop.f32.mrf.mxu0
      %v1615 = vadd.f32 0.0, %v1614
      %1616 = vdwg.mxu0
      %v1619 = vunpack.c.l.b16 %v1585
      %v1620 = vunpack.c.l.b16 %v1586
      %v1621 = vpack.c.b16 %v1620, %v1619
      %v1625 = vunpack.c.l.b16 %v1589
      %v1626 = vunpack.c.l.b16 %v1590
      %v1627 = vpack.c.b16 %v1626, %v1625
      %1629 = vmatpush.bf16.xpose.msra.mxu0 0
      %1630 = vmatpush.bf16.xpose.msra.mxu0 0
      %1631 = vmatpush.bf16.xpose.msra.mxu0 0
      %1632 = vmatpush.bf16.xpose.msra.mxu0 0
      %1633 = vmatpush.bf16.xpose.msra.mxu0 0
      %1634 = vmatpush.bf16.xpose.msra.mxu0 0
      %1635 = vmatpush.bf16.xpose.msra.mxu0 0
      %1636 = vmatpush.bf16.xpose.msra.mxu0 %v1627
      %1637 = vmatmul.bf16.gmra.mxu0 %v1621
      %v1638 = vpop.f32.mrf.mxu0
      %v1639 = vadd.f32 0.0, %v1638
      %v1640 = vpop.f32.mrf.mxu0
      %v1641 = vadd.f32 0.0, %v1640
      %1642 = vdwg.mxu0
      %v1643 = vmul.f32 %v1613, 0.088388346
      %v1644 = vmul.f32 %v1615, 0.088388346
      %v1645 = vmul.f32 %v1639, 0.088388346
      %v1646 = vmul.f32 %v1641, 0.088388346
      %v1648 = vrot.slane %v1343, 1
      %v1650 = vsub.f32 1.0, %v1343
      %v1651 = vsub.f32 1.0, %v1648
      %v1652 = vmul.f32 %v1650, -1e+09
      %v1653 = vmul.f32 %v1651, -1e+09
      %v1656 = vperm.slane %v1652, 0
      %v1657 = vperm.slane %v1653, 0
      %v1660 = vadd.f32 %v1643, %v1656
      %v1661 = vadd.f32 %v1644, %v1656
      %v1662 = vadd.f32 %v1645, %v1657
      %v1663 = vadd.f32 %v1646, %v1657
      %vm1664 = vcmask 130048
      %v1665 = vsel %vm1664, %v1660, -inf
      %1666 = vmax.xlane.f32.xlu0 %v1665
      %v1667 = vpop.xlane.xlu0 %1666
      %v1668 = vsel %vm1664, %v1661, -inf
      %1669 = vmax.xlane.f32.xlu0 %v1668
      %v1670 = vpop.xlane.xlu0 %1669
      %v1671 = vsel %vm1664, %v1662, -inf
      %1672 = vmax.xlane.f32.xlu0 %v1671
      %v1673 = vpop.xlane.xlu0 %1672
      %v1674 = vsel %vm1664, %v1663, -inf
      %1675 = vmax.xlane.f32.xlu0 %v1674
      %v1676 = vpop.xlane.xlu0 %1675
      %v1677 = vsub.f32 %v1660, %v1667
      %v1678 = vsub.f32 %v1661, %v1670
      %v1679 = vsub.f32 %v1662, %v1673
      %v1680 = vsub.f32 %v1663, %v1676
      %v1681 = vmul.f32 %v1677, 1.442695
      %v1682 = vpow.pop %v1681
      %v1683 = vmul.f32 %v1678, 1.442695
      %v1684 = vpow.pop %v1683
      %v1685 = vmul.f32 %v1679, 1.442695
      %v1686 = vpow.pop %v1685
      %v1687 = vmul.f32 %v1680, 1.442695
      %v1688 = vpow.pop %v1687
      %v1689 = vsel %vm1664, %v1682, 0.0
      %1690 = vadd.xlane.f32.xlu0 %v1689
      %v1691 = vpop.xlane.xlu0 %1690
      %v1692 = vsel %vm1664, %v1684, 0.0
      %1693 = vadd.xlane.f32.xlu0 %v1692
      %v1694 = vpop.xlane.xlu0 %1693
      %v1695 = vsel %vm1664, %v1686, 0.0
      %1696 = vadd.xlane.f32.xlu0 %v1695
      %v1697 = vpop.xlane.xlu0 %1696
      %v1698 = vsel %vm1664, %v1688, 0.0
      %1699 = vadd.xlane.f32.xlu0 %v1698
      %v1700 = vpop.xlane.xlu0 %1699
      %v1701 = vrcp.pop %v1691
      %v1702 = vrcp.pop %v1694
      %v1703 = vrcp.pop %v1697
      %v1704 = vrcp.pop %v1700
      %v1705 = vmul.f32 %v1682, %v1701
      %v1706 = vmul.f32 %v1684, %v1702
      %v1707 = vmul.f32 %v1686, %v1703
      %v1708 = vmul.f32 %v1688, %v1704
      %v1709 = vpack.c.bf16 %v1705, %v1705
      %v1710 = vpack.c.bf16 %v1706, %v1706
      %v1711 = vpack.c.bf16 %v1707, %v1707
      %v1712 = vpack.c.bf16 %v1708, %v1708
      %v1713 = vpack.c.bf16 %v1573, %v1573
      %v1714 = vpack.c.bf16 %v1576, %v1576
      %v1715 = vpack.c.bf16 %v1579, %v1579
      %v1716 = vpack.c.bf16 %v1582, %v1582
      %v1719 = vunpack.c.l.b16 %v1709
      %v1720 = vunpack.c.l.b16 %v1710
      %v1721 = vpack.c.b16 %v1720, %v1719
      %v1724 = vunpack.c.l.b16 %v1713
      %v1725 = vunpack.c.l.b16 %v1714
      %v1726 = vpack.c.b16 %v1725, %v1724
      %v1729 = vsel %vm1664, %v1721, 0
      %1731 = vmatpush.bf16.msra.mxu0 0
      %1732 = vmatpush.bf16.msra.mxu0 0
      %1733 = vmatpush.bf16.msra.mxu0 0
      %1734 = vmatpush.bf16.msra.mxu0 0
      %1735 = vmatpush.bf16.msra.mxu0 0
      %1736 = vmatpush.bf16.msra.mxu0 0
      %1737 = vmatpush.bf16.msra.mxu0 0
      %1738 = vmatpush.bf16.msra.mxu0 %v1726
      %1739 = vmatmul.bf16.gmra.mxu0 %v1729
      %v1740 = vpop.f32.mrf.mxu0
      %v1741 = vadd.f32 0.0, %v1740
      %v1742 = vpop.f32.mrf.mxu0
      %v1743 = vadd.f32 0.0, %v1742
      %1744 = vdwg.mxu0
      %v1747 = vunpack.c.l.b16 %v1711
      %v1748 = vunpack.c.l.b16 %v1712
      %v1749 = vpack.c.b16 %v1748, %v1747
      %v1752 = vunpack.c.l.b16 %v1715
      %v1753 = vunpack.c.l.b16 %v1716
      %v1754 = vpack.c.b16 %v1753, %v1752
      %v1757 = vsel %vm1664, %v1749, 0
      %1759 = vmatpush.bf16.msra.mxu0 0
      %1760 = vmatpush.bf16.msra.mxu0 0
      %1761 = vmatpush.bf16.msra.mxu0 0
      %1762 = vmatpush.bf16.msra.mxu0 0
      %1763 = vmatpush.bf16.msra.mxu0 0
      %1764 = vmatpush.bf16.msra.mxu0 0
      %1765 = vmatpush.bf16.msra.mxu0 0
      %1766 = vmatpush.bf16.msra.mxu0 %v1754
      %1767 = vmatmul.bf16.gmra.mxu0 %v1757
      %v1768 = vpop.f32.mrf.mxu0
      %v1769 = vadd.f32 0.0, %v1768
      %v1770 = vpop.f32.mrf.mxu0
      %v1771 = vadd.f32 0.0, %v1770
      %1772 = vdwg.mxu0
      %v1773 = vpack.c.bf16 %v1743, %v1741
      %v1774 = vpack.c.bf16 %v1771, %v1769
      %v1775 = vld [vmem:[#allocation18] sm:$0xf]
      %v1776 = vld [vmem:[#allocation18 + $0x4] sm:$0xf]
      %v1777 = vld [vmem:[#allocation18 + $0x8] sm:$0xf]
      %v1778 = vld [vmem:[#allocation18 + $0xc] sm:$0xf]
      %v1779 = vld [vmem:[#allocation18 + $0x10] sm:$0xf]
      %v1780 = vld [vmem:[#allocation18 + $0x14] sm:$0xf]
      %v1781 = vld [vmem:[#allocation18 + $0x18] sm:$0xf]
      %v1782 = vld [vmem:[#allocation18 + $0x1c] sm:$0xf]
      %v1783 = vld [vmem:[#allocation18 + $0x20] sm:$0xf]
      %v1784 = vld [vmem:[#allocation18 + $0x24] sm:$0xf]
      %v1785 = vld [vmem:[#allocation18 + $0x28] sm:$0xf]
      %v1786 = vld [vmem:[#allocation18 + $0x2c] sm:$0xf]
      %v1787 = vld [vmem:[#allocation18 + $0x30] sm:$0xf]
      %v1788 = vld [vmem:[#allocation18 + $0x34] sm:$0xf]
      %v1789 = vld [vmem:[#allocation18 + $0x38] sm:$0xf]
      %v1790 = vld [vmem:[#allocation18 + $0x3c] sm:$0xf]
      %v1807 = vunpack.c.l.b16 %v1775
      %v1808 = vunpack.c.l.b16 %v1776
      %v1809 = vunpack.c.l.b16 %v1777
      %v1810 = vunpack.c.l.b16 %v1778
      %v1811 = vunpack.c.l.b16 %v1779
      %v1812 = vunpack.c.l.b16 %v1780
      %v1813 = vunpack.c.l.b16 %v1781
      %v1814 = vunpack.c.l.b16 %v1782
      %v1815 = vunpack.c.l.b16 %v1783
      %v1816 = vunpack.c.l.b16 %v1784
      %v1817 = vunpack.c.l.b16 %v1785
      %v1818 = vunpack.c.l.b16 %v1786
      %v1819 = vunpack.c.l.b16 %v1787
      %v1820 = vunpack.c.l.b16 %v1788
      %v1821 = vunpack.c.l.b16 %v1789
      %v1822 = vunpack.c.l.b16 %v1790
      %v1823 = vpack.c.b16 %v1808, %v1807
      %v1824 = vpack.c.b16 %v1810, %v1809
      %v1825 = vpack.c.b16 %v1812, %v1811
      %v1826 = vpack.c.b16 %v1814, %v1813
      %v1827 = vpack.c.b16 %v1816, %v1815
      %v1828 = vpack.c.b16 %v1818, %v1817
      %v1829 = vpack.c.b16 %v1820, %v1819
      %v1830 = vpack.c.b16 %v1822, %v1821
      %1839 = vmatpush.bf16.msra.mxu0 %v1830
      %1840 = vmatpush.bf16.msra.mxu0 %v1829
      %1841 = vmatpush.bf16.msra.mxu0 %v1828
      %1842 = vmatpush.bf16.msra.mxu0 %v1827
      %1843 = vmatpush.bf16.msra.mxu0 %v1826
      %1844 = vmatpush.bf16.msra.mxu0 %v1825
      %1845 = vmatpush.bf16.msra.mxu0 %v1824
      %1846 = vmatpush.bf16.msra.mxu0 %v1823
      %1847 = vmatmul.bf16.gmra.mxu0 %v1773
      %v1848 = vpop.f32.mrf.mxu0
      %v1849 = vadd.f32 0.0, %v1848
      %v1850 = vpop.f32.mrf.mxu0
      %v1851 = vadd.f32 0.0, %v1850
      %1852 = vmatmul.bf16.gmra.mxu0 %v1774
      %v1853 = vpop.f32.mrf.mxu0
      %v1854 = vadd.f32 0.0, %v1853
      %v1855 = vpop.f32.mrf.mxu0
      %v1856 = vadd.f32 0.0, %v1855
      %1857 = vdwg.mxu0
      %v1858 = vld [vmem:[%s10] sm:$0x1]
      %v1860 = vperm.slane %v1858, 0
      %v1862 = vadd.f32 %v1849, %v1860
      %v1863 = vadd.f32 %v1851, %v1860
      %v1864 = vadd.f32 %v1854, %v1860
      %v1865 = vadd.f32 %v1856, %v1860
      %v1866 = vadd.f32 %v1339, %v1862
      %v1867 = vadd.f32 %v1340, %v1863
      %v1868 = vadd.f32 %v1341, %v1864
      %v1869 = vadd.f32 %v1342, %v1865
      %v1870 = vld [vmem:[%s11] sm:$0x1]
      %v1871 = vld [vmem:[%s12] sm:$0x1]
      %1872 = vadd.xlane.f32.xlu0 %v1866
      %v1873 = vpop.xlane.xlu0 %1872
      %1874 = vadd.xlane.f32.xlu0 %v1867
      %v1875 = vpop.xlane.xlu0 %1874
      %1876 = vadd.xlane.f32.xlu0 %v1868
      %v1877 = vpop.xlane.xlu0 %1876
      %1878 = vadd.xlane.f32.xlu0 %v1869
      %v1879 = vpop.xlane.xlu0 %1878
      %v1880 = vmul.f32 %v1873, %v1244
      %v1881 = vmul.f32 %v1875, %v1244
      %v1882 = vmul.f32 %v1877, %v1244
      %v1883 = vmul.f32 %v1879, %v1244
      %v1884 = vsub.f32 %v1866, %v1880
      %v1885 = vsub.f32 %v1867, %v1881
      %v1886 = vsub.f32 %v1868, %v1882
      %v1887 = vsub.f32 %v1869, %v1883
      %v1888 = vmul.f32 %v1884, %v1884
      %v1889 = vmul.f32 %v1885, %v1885
      %v1890 = vmul.f32 %v1886, %v1886
      %v1891 = vmul.f32 %v1887, %v1887
      %1892 = vadd.xlane.f32.xlu0 %v1888
      %v1893 = vpop.xlane.xlu0 %1892
      %1894 = vadd.xlane.f32.xlu0 %v1889
      %v1895 = vpop.xlane.xlu0 %1894
      %1896 = vadd.xlane.f32.xlu0 %v1890
      %v1897 = vpop.xlane.xlu0 %1896
      %1898 = vadd.xlane.f32.xlu0 %v1891
      %v1899 = vpop.xlane.xlu0 %1898
      %v1900 = vmul.f32 %v1893, %v1244
      %v1901 = vmul.f32 %v1895, %v1244
      %v1902 = vmul.f32 %v1897, %v1244
      %v1903 = vmul.f32 %v1899, %v1244
      %v1904 = vadd.f32 %v1900, 1e-05
      %v1905 = vadd.f32 %v1901, 1e-05
      %v1906 = vadd.f32 %v1902, 1e-05
      %v1907 = vadd.f32 %v1903, 1e-05
      %v1908 = vrsqrt.pop %v1904
      %v1909 = vmul.f32 %v1908, %v1904
      %v1910 = vmul.f32 %v1909, %v1908
      %v1911 = vmul.f32 0.5, %v1910
      %v1912 = vsub.f32 1.5, %v1911
      %v1913 = vmul.f32 %v1908, %v1912
      %vm1914 = vweird.f32 %v1904
      %vm1915 = vweird.f32 %v1908
      %vm1916 = vmor %vm1914, %vm1915
      %v1917 = vsel %vm1916, %v1908, %v1913
      %v1918 = vrsqrt.pop %v1905
      %v1919 = vmul.f32 %v1918, %v1905
      %v1920 = vmul.f32 %v1919, %v1918
      %v1921 = vmul.f32 0.5, %v1920
      %v1922 = vsub.f32 1.5, %v1921
      %v1923 = vmul.f32 %v1918, %v1922
      %vm1924 = vweird.f32 %v1905
      %vm1925 = vweird.f32 %v1918
      %vm1926 = vmor %vm1924, %vm1925
      %v1927 = vsel %vm1926, %v1918, %v1923
      %v1928 = vrsqrt.pop %v1906
      %v1929 = vmul.f32 %v1928, %v1906
      %v1930 = vmul.f32 %v1929, %v1928
      %v1931 = vmul.f32 0.5, %v1930
      %v1932 = vsub.f32 1.5, %v1931
      %v1933 = vmul.f32 %v1928, %v1932
      %vm1934 = vweird.f32 %v1906
      %vm1935 = vweird.f32 %v1928
      %vm1936 = vmor %vm1934, %vm1935
      %v1937 = vsel %vm1936, %v1928, %v1933
      %v1938 = vrsqrt.pop %v1907
      %v1939 = vmul.f32 %v1938, %v1907
      %v1940 = vmul.f32 %v1939, %v1938
      %v1941 = vmul.f32 0.5, %v1940
      %v1942 = vsub.f32 1.5, %v1941
      %v1943 = vmul.f32 %v1938, %v1942
      %vm1944 = vweird.f32 %v1907
      %vm1945 = vweird.f32 %v1938
      %vm1946 = vmor %vm1944, %vm1945
      %v1947 = vsel %vm1946, %v1938, %v1943
      %v1948 = vmul.f32 %v1884, %v1917
      %v1949 = vmul.f32 %v1885, %v1927
      %v1950 = vmul.f32 %v1886, %v1937
      %v1951 = vmul.f32 %v1887, %v1947
      %v1953 = vperm.slane %v1870, 0
      %v1955 = vmul.f32 %v1948, %v1953
      %v1956 = vmul.f32 %v1949, %v1953
      %v1957 = vmul.f32 %v1950, %v1953
      %v1958 = vmul.f32 %v1951, %v1953
      %v1960 = vperm.slane %v1871, 0
      %v1962 = vadd.f32 %v1955, %v1960
      %v1963 = vadd.f32 %v1956, %v1960
      %v1964 = vadd.f32 %v1957, %v1960
      %v1965 = vadd.f32 %v1958, %v1960
      %v1966 = vpack.c.bf16 %v1963, %v1962
      %v1967 = vpack.c.bf16 %v1965, %v1964
      %v1968 = vld [vmem:[#allocation19] sm:$0xff]
      %v1969 = vld [vmem:[#allocation19 + $0x8] sm:$0xff]
      %v1970 = vld [vmem:[#allocation19 + $0x10] sm:$0xff]
      %v1971 = vld [vmem:[#allocation19 + $0x18] sm:$0xff]
      %v1972 = vld [vmem:[#allocation19 + $0x20] sm:$0xff]
      %v1973 = vld [vmem:[#allocation19 + $0x28] sm:$0xff]
      %v1974 = vld [vmem:[#allocation19 + $0x30] sm:$0xff]
      %v1975 = vld [vmem:[#allocation19 + $0x38] sm:$0xff]
      %v1976 = vld [vmem:[#allocation19 + $0x40] sm:$0xff]
      %v1977 = vld [vmem:[#allocation19 + $0x48] sm:$0xff]
      %v1978 = vld [vmem:[#allocation19 + $0x50] sm:$0xff]
      %v1979 = vld [vmem:[#allocation19 + $0x58] sm:$0xff]
      %v1980 = vld [vmem:[#allocation19 + $0x60] sm:$0xff]
      %v1981 = vld [vmem:[#allocation19 + $0x68] sm:$0xff]
      %v1982 = vld [vmem:[#allocation19 + $0x70] sm:$0xff]
      %v1983 = vld [vmem:[#allocation19 + $0x78] sm:$0xff]
      %v1984 = vld [vmem:[#allocation19 + $0x80] sm:$0xff]
      %v1985 = vld [vmem:[#allocation19 + $0x88] sm:$0xff]
      %v1986 = vld [vmem:[#allocation19 + $0x90] sm:$0xff]
      %v1987 = vld [vmem:[#allocation19 + $0x98] sm:$0xff]
      %v1988 = vld [vmem:[#allocation19 + $0xa0] sm:$0xff]
      %v1989 = vld [vmem:[#allocation19 + $0xa8] sm:$0xff]
      %v1990 = vld [vmem:[#allocation19 + $0xb0] sm:$0xff]
      %v1991 = vld [vmem:[#allocation19 + $0xb8] sm:$0xff]
      %v1992 = vld [vmem:[#allocation19 + $0xc0] sm:$0xff]
      %v1993 = vld [vmem:[#allocation19 + $0xc8] sm:$0xff]
      %v1994 = vld [vmem:[#allocation19 + $0xd0] sm:$0xff]
      %v1995 = vld [vmem:[#allocation19 + $0xd8] sm:$0xff]
      %v1996 = vld [vmem:[#allocation19 + $0xe0] sm:$0xff]
      %v1997 = vld [vmem:[#allocation19 + $0xe8] sm:$0xff]
      %v1998 = vld [vmem:[#allocation19 + $0xf0] sm:$0xff]
      %v1999 = vld [vmem:[#allocation19 + $0xf8] sm:$0xff]
      %v2000 = vld [vmem:[%s14] sm:$0xf]
      %v2002 = vperm.slane %v2000, 0
      %v2003 = vperm.slane %v2000, 1
      %v2004 = vperm.slane %v2000, 2
      %v2005 = vperm.slane %v2000, 3
      %v2042 = vunpack.c.l.b16 %v1968
      %v2043 = vunpack.c.h.b16 %v1968
      %v2044 = vunpack.c.l.b16 %v1969
      %v2045 = vunpack.c.h.b16 %v1969
      %v2046 = vunpack.c.l.b16 %v1970
      %v2047 = vunpack.c.h.b16 %v1970
      %v2048 = vunpack.c.l.b16 %v1971
      %v2049 = vunpack.c.h.b16 %v1971
      %v2050 = vunpack.c.l.b16 %v1972
      %v2051 = vunpack.c.h.b16 %v1972
      %v2052 = vunpack.c.l.b16 %v1973
      %v2053 = vunpack.c.h.b16 %v1973
      %v2054 = vunpack.c.l.b16 %v1974
      %v2055 = vunpack.c.h.b16 %v1974
      %v2056 = vunpack.c.l.b16 %v1975
      %v2057 = vunpack.c.h.b16 %v1975
      %v2058 = vunpack.c.l.b16 %v1976
      %v2059 = vunpack.c.h.b16 %v1976
      %v2060 = vunpack.c.l.b16 %v1977
      %v2061 = vunpack.c.h.b16 %v1977
      %v2062 = vunpack.c.l.b16 %v1978
      %v2063 = vunpack.c.h.b16 %v1978
      %v2064 = vunpack.c.l.b16 %v1979
      %v2065 = vunpack.c.h.b16 %v1979
      %v2066 = vunpack.c.l.b16 %v1980
      %v2067 = vunpack.c.h.b16 %v1980
      %v2068 = vunpack.c.l.b16 %v1981
      %v2069 = vunpack.c.h.b16 %v1981
      %v2070 = vunpack.c.l.b16 %v1982
      %v2071 = vunpack.c.h.b16 %v1982
      %v2072 = vunpack.c.l.b16 %v1983
      %v2073 = vunpack.c.h.b16 %v1983
      %v2074 = vunpack.c.l.b16 %v1984
      %v2075 = vunpack.c.h.b16 %v1984
      %v2076 = vunpack.c.l.b16 %v1985
      %v2077 = vunpack.c.h.b16 %v1985
      %v2078 = vunpack.c.l.b16 %v1986
      %v2079 = vunpack.c.h.b16 %v1986
      %v2080 = vunpack.c.l.b16 %v1987
      %v2081 = vunpack.c.h.b16 %v1987
      %v2082 = vunpack.c.l.b16 %v1988
      %v2083 = vunpack.c.h.b16 %v1988
      %v2084 = vunpack.c.l.b16 %v1989
      %v2085 = vunpack.c.h.b16 %v1989
      %v2086 = vunpack.c.l.b16 %v1990
      %v2087 = vunpack.c.h.b16 %v1990
      %v2088 = vunpack.c.l.b16 %v1991
      %v2089 = vunpack.c.h.b16 %v1991
      %v2090 = vunpack.c.l.b16 %v1992
      %v2091 = vunpack.c.h.b16 %v1992
      %v2092 = vunpack.c.l.b16 %v1993
      %v2093 = vunpack.c.h.b16 %v1993
      %v2094 = vunpack.c.l.b16 %v1994
      %v2095 = vunpack.c.h.b16 %v1994
      %v2096 = vunpack.c.l.b16 %v1995
      %v2097 = vunpack.c.h.b16 %v1995
      %v2098 = vunpack.c.l.b16 %v1996
      %v2099 = vunpack.c.h.b16 %v1996
      %v2100 = vunpack.c.l.b16 %v1997
      %v2101 = vunpack.c.h.b16 %v1997
      %v2102 = vunpack.c.l.b16 %v1998
      %v2103 = vunpack.c.h.b16 %v1998
      %v2104 = vunpack.c.l.b16 %v1999
      %v2105 = vunpack.c.h.b16 %v1999
      %v2106 = vpack.c.b16 %v2046, %v2042
      %v2107 = vpack.c.b16 %v2047, %v2043
      %v2108 = vpack.c.b16 %v2048, %v2044
      %v2109 = vpack.c.b16 %v2049, %v2045
      %v2110 = vpack.c.b16 %v2054, %v2050
      %v2111 = vpack.c.b16 %v2055, %v2051
      %v2112 = vpack.c.b16 %v2056, %v2052
      %v2113 = vpack.c.b16 %v2057, %v2053
      %v2114 = vpack.c.b16 %v2062, %v2058
      %v2115 = vpack.c.b16 %v2063, %v2059
      %v2116 = vpack.c.b16 %v2064, %v2060
      %v2117 = vpack.c.b16 %v2065, %v2061
      %v2118 = vpack.c.b16 %v2070, %v2066
      %v2119 = vpack.c.b16 %v2071, %v2067
      %v2120 = vpack.c.b16 %v2072, %v2068
      %v2121 = vpack.c.b16 %v2073, %v2069
      %v2122 = vpack.c.b16 %v2078, %v2074
      %v2123 = vpack.c.b16 %v2079, %v2075
      %v2124 = vpack.c.b16 %v2080, %v2076
      %v2125 = vpack.c.b16 %v2081, %v2077
      %v2126 = vpack.c.b16 %v2086, %v2082
      %v2127 = vpack.c.b16 %v2087, %v2083
      %v2128 = vpack.c.b16 %v2088, %v2084
      %v2129 = vpack.c.b16 %v2089, %v2085
      %v2130 = vpack.c.b16 %v2094, %v2090
      %v2131 = vpack.c.b16 %v2095, %v2091
      %v2132 = vpack.c.b16 %v2096, %v2092
      %v2133 = vpack.c.b16 %v2097, %v2093
      %v2134 = vpack.c.b16 %v2102, %v2098
      %v2135 = vpack.c.b16 %v2103, %v2099
      %v2136 = vpack.c.b16 %v2104, %v2100
      %v2137 = vpack.c.b16 %v2105, %v2101
      %2170 = vmatpush.bf16.msra.mxu0 %v2134
      %2171 = vmatpush.bf16.msra.mxu0 %v2130
      %2172 = vmatpush.bf16.msra.mxu0 %v2126
      %2173 = vmatpush.bf16.msra.mxu0 %v2122
      %2174 = vmatpush.bf16.msra.mxu0 %v2118
      %2175 = vmatpush.bf16.msra.mxu0 %v2114
      %2176 = vmatpush.bf16.msra.mxu0 %v2110
      %2177 = vmatpush.bf16.msra.mxu0 %v2106
      %2178 = vmatmul.bf16.gmra.mxu0 %v1966
      %v2179 = vpop.f32.mrf.mxu0
      %v2180 = vadd.f32 %v2002, %v2179
      %v2181 = vpop.f32.mrf.mxu0
      %v2182 = vadd.f32 %v2002, %v2181
      %2183 = vmatmul.bf16.gmra.mxu0 %v1967
      %v2184 = vpop.f32.mrf.mxu0
      %v2185 = vadd.f32 %v2002, %v2184
      %v2186 = vpop.f32.mrf.mxu0
      %v2187 = vadd.f32 %v2002, %v2186
      %2188 = vdwg.mxu0
      %2189 = vmatpush.bf16.msra.mxu0 %v2135
      %2190 = vmatpush.bf16.msra.mxu0 %v2131
      %2191 = vmatpush.bf16.msra.mxu0 %v2127
      %2192 = vmatpush.bf16.msra.mxu0 %v2123
      %2193 = vmatpush.bf16.msra.mxu0 %v2119
      %2194 = vmatpush.bf16.msra.mxu0 %v2115
      %2195 = vmatpush.bf16.msra.mxu0 %v2111
      %2196 = vmatpush.bf16.msra.mxu0 %v2107
      %2197 = vmatmul.bf16.gmra.mxu0 %v1966
      %v2198 = vpop.f32.mrf.mxu0
      %v2199 = vadd.f32 %v2003, %v2198
      %v2200 = vpop.f32.mrf.mxu0
      %v2201 = vadd.f32 %v2003, %v2200
      %2202 = vmatmul.bf16.gmra.mxu0 %v1967
      %v2203 = vpop.f32.mrf.mxu0
      %v2204 = vadd.f32 %v2003, %v2203
      %v2205 = vpop.f32.mrf.mxu0
      %v2206 = vadd.f32 %v2003, %v2205
      %2207 = vdwg.mxu0
      %2208 = vmatpush.bf16.msra.mxu0 %v2136
      %2209 = vmatpush.bf16.msra.mxu0 %v2132
      %2210 = vmatpush.bf16.msra.mxu0 %v2128
      %2211 = vmatpush.bf16.msra.mxu0 %v2124
      %2212 = vmatpush.bf16.msra.mxu0 %v2120
      %2213 = vmatpush.bf16.msra.mxu0 %v2116
      %2214 = vmatpush.bf16.msra.mxu0 %v2112
      %2215 = vmatpush.bf16.msra.mxu0 %v2108
      %2216 = vmatmul.bf16.gmra.mxu0 %v1966
      %v2217 = vpop.f32.mrf.mxu0
      %v2218 = vadd.f32 %v2004, %v2217
      %v2219 = vpop.f32.mrf.mxu0
      %v2220 = vadd.f32 %v2004, %v2219
      %2221 = vmatmul.bf16.gmra.mxu0 %v1967
      %v2222 = vpop.f32.mrf.mxu0
      %v2223 = vadd.f32 %v2004, %v2222
      %v2224 = vpop.f32.mrf.mxu0
      %v2225 = vadd.f32 %v2004, %v2224
      %2226 = vdwg.mxu0
      %2227 = vmatpush.bf16.msra.mxu0 %v2137
      %2228 = vmatpush.bf16.msra.mxu0 %v2133
      %2229 = vmatpush.bf16.msra.mxu0 %v2129
      %2230 = vmatpush.bf16.msra.mxu0 %v2125
      %2231 = vmatpush.bf16.msra.mxu0 %v2121
      %2232 = vmatpush.bf16.msra.mxu0 %v2117
      %2233 = vmatpush.bf16.msra.mxu0 %v2113
      %2234 = vmatpush.bf16.msra.mxu0 %v2109
      %2235 = vmatmul.bf16.gmra.mxu0 %v1966
      %v2236 = vpop.f32.mrf.mxu0
      %v2237 = vadd.f32 %v2005, %v2236
      %v2238 = vpop.f32.mrf.mxu0
      %v2239 = vadd.f32 %v2005, %v2238
      %2240 = vmatmul.bf16.gmra.mxu0 %v1967
      %v2241 = vpop.f32.mrf.mxu0
      %v2242 = vadd.f32 %v2005, %v2241
      %v2243 = vpop.f32.mrf.mxu0
      %v2244 = vadd.f32 %v2005, %v2243
      %2245 = vdwg.mxu0
      %v2246 = vmul.f32 %v2180, 0.5
      %v2247 = vmul.f32 %v2199, 0.5
      %v2248 = vmul.f32 %v2218, 0.5
      %v2249 = vmul.f32 %v2237, 0.5
      %v2250 = vmul.f32 %v2182, 0.5
      %v2251 = vmul.f32 %v2201, 0.5
      %v2252 = vmul.f32 %v2220, 0.5
      %v2253 = vmul.f32 %v2239, 0.5
      %v2254 = vmul.f32 %v2185, 0.5
      %v2255 = vmul.f32 %v2204, 0.5
      %v2256 = vmul.f32 %v2223, 0.5
      %v2257 = vmul.f32 %v2242, 0.5
      %v2258 = vmul.f32 %v2187, 0.5
      %v2259 = vmul.f32 %v2206, 0.5
      %v2260 = vmul.f32 %v2225, 0.5
      %v2261 = vmul.f32 %v2244, 0.5
      %v2262 = vmul.f32 %v2180, 0.70710677
      %v2263 = vmul.f32 %v2199, 0.70710677
      %v2264 = vmul.f32 %v2218, 0.70710677
      %v2265 = vmul.f32 %v2237, 0.70710677
      %v2266 = vmul.f32 %v2182, 0.70710677
      %v2267 = vmul.f32 %v2201, 0.70710677
      %v2268 = vmul.f32 %v2220, 0.70710677
      %v2269 = vmul.f32 %v2239, 0.70710677
      %v2270 = vmul.f32 %v2185, 0.70710677
      %v2271 = vmul.f32 %v2204, 0.70710677
      %v2272 = vmul.f32 %v2223, 0.70710677
      %v2273 = vmul.f32 %v2242, 0.70710677
      %v2274 = vmul.f32 %v2187, 0.70710677
      %v2275 = vmul.f32 %v2206, 0.70710677
      %v2276 = vmul.f32 %v2225, 0.70710677
      %v2277 = vmul.f32 %v2244, 0.70710677
      %v2278 = vmul.f32 %v2262, %v2262
      %v2279 = vmin.f32 16.0, %v2278
      %v2280 = vmul.f32 %v2279, 2.1237322e-06
      %v2281 = vadd.f32 %v2280, 0.00028619796
      %v2282 = vmul.f32 %v2279, %v2281
      %v2283 = vadd.f32 %v2282, 0.0036580483
      %v2284 = vmul.f32 %v2279, %v2283
      %v2285 = vadd.f32 %v2284, 0.05243302
      %v2286 = vmul.f32 %v2279, %v2285
      %v2287 = vadd.f32 %v2286, 0.18741608
      %v2288 = vmul.f32 %v2279, %v2287
      %v2289 = vadd.f32 %v2288, 1.1283791
      %v2290 = vmul.f32 %v2262, %v2289
      %v2291 = vmul.f32 %v2279, 3.8918573e-05
      %v2292 = vadd.f32 %v2291, 0.001143296
      %v2293 = vmul.f32 %v2279, %v2292
      %v2294 = vadd.f32 %v2293, 0.014752088
      %v2295 = vmul.f32 %v2279, %v2294
      %v2296 = vadd.f32 %v2295, 0.112945676
      %v2297 = vmul.f32 %v2279, %v2296
      %v2298 = vadd.f32 %v2297, 0.4994258
      %v2299 = vmul.f32 %v2279, %v2298
      %v2300 = vadd.f32 %v2299, 1.0
      %v2301 = vrcp.pop %v2300
      %v2302 = vmul.f32 %v2300, %v2301
      %v2303 = vsub.f32 1.0, %v2302
      %v2304 = vmul.f32 %v2301, %v2303
      %v2305 = vadd.f32 %v2301, %v2304
      %vm2306 = vweird.f32 %v2300
      %vm2307 = vweird.f32 %v2301
      %vm2308 = vmor %vm2306, %vm2307
      %v2309 = vsel %vm2308, %v2301, %v2305
      %v2310 = vand.u32 2147483647, %v2300
      %vm2311 = vcmp.eq.f32.partialorder %v2310, 8.507059e+37
      %v2312 = vand.u32 %v2300, 2147483648
      %v2313 = vor.u32 1.1754944e-38, %v2312
      %v2314 = vsel %vm2311, %v2313, %v2309
      %v2315 = vmul.f32 %v2290, %v2314
      %v2316 = vmin.f32 %v2315, 1.0
      %v2317 = vmax.f32 %v2316, -1.0
      %v2318 = vmul.f32 %v2263, %v2263
      %v2319 = vmin.f32 16.0, %v2318
      %v2320 = vmul.f32 %v2319, 2.1237322e-06
      %v2321 = vadd.f32 %v2320, 0.00028619796
      %v2322 = vmul.f32 %v2319, %v2321
      %v2323 = vadd.f32 %v2322, 0.0036580483
      %v2324 = vmul.f32 %v2319, %v2323
      %v2325 = vadd.f32 %v2324, 0.05243302
      %v2326 = vmul.f32 %v2319, %v2325
      %v2327 = vadd.f32 %v2326, 0.18741608
      %v2328 = vmul.f32 %v2319, %v2327
      %v2329 = vadd.f32 %v2328, 1.1283791
      %v2330 = vmul.f32 %v2263, %v2329
      %v2331 = vmul.f32 %v2319, 3.8918573e-05
      %v2332 = vadd.f32 %v2331, 0.001143296
      %v2333 = vmul.f32 %v2319, %v2332
      %v2334 = vadd.f32 %v2333, 0.014752088
      %v2335 = vmul.f32 %v2319, %v2334
      %v2336 = vadd.f32 %v2335, 0.112945676
      %v2337 = vmul.f32 %v2319, %v2336
      %v2338 = vadd.f32 %v2337, 0.4994258
      %v2339 = vmul.f32 %v2319, %v2338
      %v2340 = vadd.f32 %v2339, 1.0
      %v2341 = vrcp.pop %v2340
      %v2342 = vmul.f32 %v2340, %v2341
      %v2343 = vsub.f32 1.0, %v2342
      %v2344 = vmul.f32 %v2341, %v2343
      %v2345 = vadd.f32 %v2341, %v2344
      %vm2346 = vweird.f32 %v2340
      %vm2347 = vweird.f32 %v2341
      %vm2348 = vmor %vm2346, %vm2347
      %v2349 = vsel %vm2348, %v2341, %v2345
      %v2350 = vand.u32 2147483647, %v2340
      %vm2351 = vcmp.eq.f32.partialorder %v2350, 8.507059e+37
      %v2352 = vand.u32 %v2340, 2147483648
      %v2353 = vor.u32 1.1754944e-38, %v2352
      %v2354 = vsel %vm2351, %v2353, %v2349
      %v2355 = vmul.f32 %v2330, %v2354
      %v2356 = vmin.f32 %v2355, 1.0
      %v2357 = vmax.f32 %v2356, -1.0
      %v2358 = vmul.f32 %v2264, %v2264
      %v2359 = vmin.f32 16.0, %v2358
      %v2360 = vmul.f32 %v2359, 2.1237322e-06
      %v2361 = vadd.f32 %v2360, 0.00028619796
      %v2362 = vmul.f32 %v2359, %v2361
      %v2363 = vadd.f32 %v2362, 0.0036580483
      %v2364 = vmul.f32 %v2359, %v2363
      %v2365 = vadd.f32 %v2364, 0.05243302
      %v2366 = vmul.f32 %v2359, %v2365
      %v2367 = vadd.f32 %v2366, 0.18741608
      %v2368 = vmul.f32 %v2359, %v2367
      %v2369 = vadd.f32 %v2368, 1.1283791
      %v2370 = vmul.f32 %v2264, %v2369
      %v2371 = vmul.f32 %v2359, 3.8918573e-05
      %v2372 = vadd.f32 %v2371, 0.001143296
      %v2373 = vmul.f32 %v2359, %v2372
      %v2374 = vadd.f32 %v2373, 0.014752088
      %v2375 = vmul.f32 %v2359, %v2374
      %v2376 = vadd.f32 %v2375, 0.112945676
      %v2377 = vmul.f32 %v2359, %v2376
      %v2378 = vadd.f32 %v2377, 0.4994258
      %v2379 = vmul.f32 %v2359, %v2378
      %v2380 = vadd.f32 %v2379, 1.0
      %v2381 = vrcp.pop %v2380
      %v2382 = vmul.f32 %v2380, %v2381
      %v2383 = vsub.f32 1.0, %v2382
      %v2384 = vmul.f32 %v2381, %v2383
      %v2385 = vadd.f32 %v2381, %v2384
      %vm2386 = vweird.f32 %v2380
      %vm2387 = vweird.f32 %v2381
      %vm2388 = vmor %vm2386, %vm2387
      %v2389 = vsel %vm2388, %v2381, %v2385
      %v2390 = vand.u32 2147483647, %v2380
      %vm2391 = vcmp.eq.f32.partialorder %v2390, 8.507059e+37
      %v2392 = vand.u32 %v2380, 2147483648
      %v2393 = vor.u32 1.1754944e-38, %v2392
      %v2394 = vsel %vm2391, %v2393, %v2389
      %v2395 = vmul.f32 %v2370, %v2394
      %v2396 = vmin.f32 %v2395, 1.0
      %v2397 = vmax.f32 %v2396, -1.0
      %v2398 = vmul.f32 %v2265, %v2265
      %v2399 = vmin.f32 16.0, %v2398
      %v2400 = vmul.f32 %v2399, 2.1237322e-06
      %v2401 = vadd.f32 %v2400, 0.00028619796
      %v2402 = vmul.f32 %v2399, %v2401
      %v2403 = vadd.f32 %v2402, 0.0036580483
      %v2404 = vmul.f32 %v2399, %v2403
      %v2405 = vadd.f32 %v2404, 0.05243302
      %v2406 = vmul.f32 %v2399, %v2405
      %v2407 = vadd.f32 %v2406, 0.18741608
      %v2408 = vmul.f32 %v2399, %v2407
      %v2409 = vadd.f32 %v2408, 1.1283791
      %v2410 = vmul.f32 %v2265, %v2409
      %v2411 = vmul.f32 %v2399, 3.8918573e-05
      %v2412 = vadd.f32 %v2411, 0.001143296
      %v2413 = vmul.f32 %v2399, %v2412
      %v2414 = vadd.f32 %v2413, 0.014752088
      %v2415 = vmul.f32 %v2399, %v2414
      %v2416 = vadd.f32 %v2415, 0.112945676
      %v2417 = vmul.f32 %v2399, %v2416
      %v2418 = vadd.f32 %v2417, 0.4994258
      %v2419 = vmul.f32 %v2399, %v2418
      %v2420 = vadd.f32 %v2419, 1.0
      %v2421 = vrcp.pop %v2420
      %v2422 = vmul.f32 %v2420, %v2421
      %v2423 = vsub.f32 1.0, %v2422
      %v2424 = vmul.f32 %v2421, %v2423
      %v2425 = vadd.f32 %v2421, %v2424
      %vm2426 = vweird.f32 %v2420
      %vm2427 = vweird.f32 %v2421
      %vm2428 = vmor %vm2426, %vm2427
      %v2429 = vsel %vm2428, %v2421, %v2425
      %v2430 = vand.u32 2147483647, %v2420
      %vm2431 = vcmp.eq.f32.partialorder %v2430, 8.507059e+37
      %v2432 = vand.u32 %v2420, 2147483648
      %v2433 = vor.u32 1.1754944e-38, %v2432
      %v2434 = vsel %vm2431, %v2433, %v2429
      %v2435 = vmul.f32 %v2410, %v2434
      %v2436 = vmin.f32 %v2435, 1.0
      %v2437 = vmax.f32 %v2436, -1.0
      %v2438 = vmul.f32 %v2266, %v2266
      %v2439 = vmin.f32 16.0, %v2438
      %v2440 = vmul.f32 %v2439, 2.1237322e-06
      %v2441 = vadd.f32 %v2440, 0.00028619796
      %v2442 = vmul.f32 %v2439, %v2441
      %v2443 = vadd.f32 %v2442, 0.0036580483
      %v2444 = vmul.f32 %v2439, %v2443
      %v2445 = vadd.f32 %v2444, 0.05243302
      %v2446 = vmul.f32 %v2439, %v2445
      %v2447 = vadd.f32 %v2446, 0.18741608
      %v2448 = vmul.f32 %v2439, %v2447
      %v2449 = vadd.f32 %v2448, 1.1283791
      %v2450 = vmul.f32 %v2266, %v2449
      %v2451 = vmul.f32 %v2439, 3.8918573e-05
      %v2452 = vadd.f32 %v2451, 0.001143296
      %v2453 = vmul.f32 %v2439, %v2452
      %v2454 = vadd.f32 %v2453, 0.014752088
      %v2455 = vmul.f32 %v2439, %v2454
      %v2456 = vadd.f32 %v2455, 0.112945676
      %v2457 = vmul.f32 %v2439, %v2456
      %v2458 = vadd.f32 %v2457, 0.4994258
      %v2459 = vmul.f32 %v2439, %v2458
      %v2460 = vadd.f32 %v2459, 1.0
      %v2461 = vrcp.pop %v2460
      %v2462 = vmul.f32 %v2460, %v2461
      %v2463 = vsub.f32 1.0, %v2462
      %v2464 = vmul.f32 %v2461, %v2463
      %v2465 = vadd.f32 %v2461, %v2464
      %vm2466 = vweird.f32 %v2460
      %vm2467 = vweird.f32 %v2461
      %vm2468 = vmor %vm2466, %vm2467
      %v2469 = vsel %vm2468, %v2461, %v2465
      %v2470 = vand.u32 2147483647, %v2460
      %vm2471 = vcmp.eq.f32.partialorder %v2470, 8.507059e+37
      %v2472 = vand.u32 %v2460, 2147483648
      %v2473 = vor.u32 1.1754944e-38, %v2472
      %v2474 = vsel %vm2471, %v2473, %v2469
      %v2475 = vmul.f32 %v2450, %v2474
      %v2476 = vmin.f32 %v2475, 1.0
      %v2477 = vmax.f32 %v2476, -1.0
      %v2478 = vmul.f32 %v2267, %v2267
      %v2479 = vmin.f32 16.0, %v2478
      %v2480 = vmul.f32 %v2479, 2.1237322e-06
      %v2481 = vadd.f32 %v2480, 0.00028619796
      %v2482 = vmul.f32 %v2479, %v2481
      %v2483 = vadd.f32 %v2482, 0.0036580483
      %v2484 = vmul.f32 %v2479, %v2483
      %v2485 = vadd.f32 %v2484, 0.05243302
      %v2486 = vmul.f32 %v2479, %v2485
      %v2487 = vadd.f32 %v2486, 0.18741608
      %v2488 = vmul.f32 %v2479, %v2487
      %v2489 = vadd.f32 %v2488, 1.1283791
      %v2490 = vmul.f32 %v2267, %v2489
      %v2491 = vmul.f32 %v2479, 3.8918573e-05
      %v2492 = vadd.f32 %v2491, 0.001143296
      %v2493 = vmul.f32 %v2479, %v2492
      %v2494 = vadd.f32 %v2493, 0.014752088
      %v2495 = vmul.f32 %v2479, %v2494
      %v2496 = vadd.f32 %v2495, 0.112945676
      %v2497 = vmul.f32 %v2479, %v2496
      %v2498 = vadd.f32 %v2497, 0.4994258
      %v2499 = vmul.f32 %v2479, %v2498
      %v2500 = vadd.f32 %v2499, 1.0
      %v2501 = vrcp.pop %v2500
      %v2502 = vmul.f32 %v2500, %v2501
      %v2503 = vsub.f32 1.0, %v2502
      %v2504 = vmul.f32 %v2501, %v2503
      %v2505 = vadd.f32 %v2501, %v2504
      %vm2506 = vweird.f32 %v2500
      %vm2507 = vweird.f32 %v2501
      %vm2508 = vmor %vm2506, %vm2507
      %v2509 = vsel %vm2508, %v2501, %v2505
      %v2510 = vand.u32 2147483647, %v2500
      %vm2511 = vcmp.eq.f32.partialorder %v2510, 8.507059e+37
      %v2512 = vand.u32 %v2500, 2147483648
      %v2513 = vor.u32 1.1754944e-38, %v2512
      %v2514 = vsel %vm2511, %v2513, %v2509
      %v2515 = vmul.f32 %v2490, %v2514
      %v2516 = vmin.f32 %v2515, 1.0
      %v2517 = vmax.f32 %v2516, -1.0
      %v2518 = vmul.f32 %v2268, %v2268
      %v2519 = vmin.f32 16.0, %v2518
      %v2520 = vmul.f32 %v2519, 2.1237322e-06
      %v2521 = vadd.f32 %v2520, 0.00028619796
      %v2522 = vmul.f32 %v2519, %v2521
      %v2523 = vadd.f32 %v2522, 0.0036580483
      %v2524 = vmul.f32 %v2519, %v2523
      %v2525 = vadd.f32 %v2524, 0.05243302
      %v2526 = vmul.f32 %v2519, %v2525
      %v2527 = vadd.f32 %v2526, 0.18741608
      %v2528 = vmul.f32 %v2519, %v2527
      %v2529 = vadd.f32 %v2528, 1.1283791
      %v2530 = vmul.f32 %v2268, %v2529
      %v2531 = vmul.f32 %v2519, 3.8918573e-05
      %v2532 = vadd.f32 %v2531, 0.001143296
      %v2533 = vmul.f32 %v2519, %v2532
      %v2534 = vadd.f32 %v2533, 0.014752088
      %v2535 = vmul.f32 %v2519, %v2534
      %v2536 = vadd.f32 %v2535, 0.112945676
      %v2537 = vmul.f32 %v2519, %v2536
      %v2538 = vadd.f32 %v2537, 0.4994258
      %v2539 = vmul.f32 %v2519, %v2538
      %v2540 = vadd.f32 %v2539, 1.0
      %v2541 = vrcp.pop %v2540
      %v2542 = vmul.f32 %v2540, %v2541
      %v2543 = vsub.f32 1.0, %v2542
      %v2544 = vmul.f32 %v2541, %v2543
      %v2545 = vadd.f32 %v2541, %v2544
      %vm2546 = vweird.f32 %v2540
      %vm2547 = vweird.f32 %v2541
      %vm2548 = vmor %vm2546, %vm2547
      %v2549 = vsel %vm2548, %v2541, %v2545
      %v2550 = vand.u32 2147483647, %v2540
      %vm2551 = vcmp.eq.f32.partialorder %v2550, 8.507059e+37
      %v2552 = vand.u32 %v2540, 2147483648
      %v2553 = vor.u32 1.1754944e-38, %v2552
      %v2554 = vsel %vm2551, %v2553, %v2549
      %v2555 = vmul.f32 %v2530, %v2554
      %v2556 = vmin.f32 %v2555, 1.0
      %v2557 = vmax.f32 %v2556, -1.0
      %v2558 = vmul.f32 %v2269, %v2269
      %v2559 = vmin.f32 16.0, %v2558
      %v2560 = vmul.f32 %v2559, 2.1237322e-06
      %v2561 = vadd.f32 %v2560, 0.00028619796
      %v2562 = vmul.f32 %v2559, %v2561
      %v2563 = vadd.f32 %v2562, 0.0036580483
      %v2564 = vmul.f32 %v2559, %v2563
      %v2565 = vadd.f32 %v2564, 0.05243302
      %v2566 = vmul.f32 %v2559, %v2565
      %v2567 = vadd.f32 %v2566, 0.18741608
      %v2568 = vmul.f32 %v2559, %v2567
      %v2569 = vadd.f32 %v2568, 1.1283791
      %v2570 = vmul.f32 %v2269, %v2569
      %v2571 = vmul.f32 %v2559, 3.8918573e-05
      %v2572 = vadd.f32 %v2571, 0.001143296
      %v2573 = vmul.f32 %v2559, %v2572
      %v2574 = vadd.f32 %v2573, 0.014752088
      %v2575 = vmul.f32 %v2559, %v2574
      %v2576 = vadd.f32 %v2575, 0.112945676
      %v2577 = vmul.f32 %v2559, %v2576
      %v2578 = vadd.f32 %v2577, 0.4994258
      %v2579 = vmul.f32 %v2559, %v2578
      %v2580 = vadd.f32 %v2579, 1.0
      %v2581 = vrcp.pop %v2580
      %v2582 = vmul.f32 %v2580, %v2581
      %v2583 = vsub.f32 1.0, %v2582
      %v2584 = vmul.f32 %v2581, %v2583
      %v2585 = vadd.f32 %v2581, %v2584
      %vm2586 = vweird.f32 %v2580
      %vm2587 = vweird.f32 %v2581
      %vm2588 = vmor %vm2586, %vm2587
      %v2589 = vsel %vm2588, %v2581, %v2585
      %v2590 = vand.u32 2147483647, %v2580
      %vm2591 = vcmp.eq.f32.partialorder %v2590, 8.507059e+37
      %v2592 = vand.u32 %v2580, 2147483648
      %v2593 = vor.u32 1.1754944e-38, %v2592
      %v2594 = vsel %vm2591, %v2593, %v2589
      %v2595 = vmul.f32 %v2570, %v2594
      %v2596 = vmin.f32 %v2595, 1.0
      %v2597 = vmax.f32 %v2596, -1.0
      %v2598 = vmul.f32 %v2270, %v2270
      %v2599 = vmin.f32 16.0, %v2598
      %v2600 = vmul.f32 %v2599, 2.1237322e-06
      %v2601 = vadd.f32 %v2600, 0.00028619796
      %v2602 = vmul.f32 %v2599, %v2601
      %v2603 = vadd.f32 %v2602, 0.0036580483
      %v2604 = vmul.f32 %v2599, %v2603
      %v2605 = vadd.f32 %v2604, 0.05243302
      %v2606 = vmul.f32 %v2599, %v2605
      %v2607 = vadd.f32 %v2606, 0.18741608
      %v2608 = vmul.f32 %v2599, %v2607
      %v2609 = vadd.f32 %v2608, 1.1283791
      %v2610 = vmul.f32 %v2270, %v2609
      %v2611 = vmul.f32 %v2599, 3.8918573e-05
      %v2612 = vadd.f32 %v2611, 0.001143296
      %v2613 = vmul.f32 %v2599, %v2612
      %v2614 = vadd.f32 %v2613, 0.014752088
      %v2615 = vmul.f32 %v2599, %v2614
      %v2616 = vadd.f32 %v2615, 0.112945676
      %v2617 = vmul.f32 %v2599, %v2616
      %v2618 = vadd.f32 %v2617, 0.4994258
      %v2619 = vmul.f32 %v2599, %v2618
      %v2620 = vadd.f32 %v2619, 1.0
      %v2621 = vrcp.pop %v2620
      %v2622 = vmul.f32 %v2620, %v2621
      %v2623 = vsub.f32 1.0, %v2622
      %v2624 = vmul.f32 %v2621, %v2623
      %v2625 = vadd.f32 %v2621, %v2624
      %vm2626 = vweird.f32 %v2620
      %vm2627 = vweird.f32 %v2621
      %vm2628 = vmor %vm2626, %vm2627
      %v2629 = vsel %vm2628, %v2621, %v2625
      %v2630 = vand.u32 2147483647, %v2620
      %vm2631 = vcmp.eq.f32.partialorder %v2630, 8.507059e+37
      %v2632 = vand.u32 %v2620, 2147483648
      %v2633 = vor.u32 1.1754944e-38, %v2632
      %v2634 = vsel %vm2631, %v2633, %v2629
      %v2635 = vmul.f32 %v2610, %v2634
      %v2636 = vmin.f32 %v2635, 1.0
      %v2637 = vmax.f32 %v2636, -1.0
      %v2638 = vmul.f32 %v2271, %v2271
      %v2639 = vmin.f32 16.0, %v2638
      %v2640 = vmul.f32 %v2639, 2.1237322e-06
      %v2641 = vadd.f32 %v2640, 0.00028619796
      %v2642 = vmul.f32 %v2639, %v2641
      %v2643 = vadd.f32 %v2642, 0.0036580483
      %v2644 = vmul.f32 %v2639, %v2643
      %v2645 = vadd.f32 %v2644, 0.05243302
      %v2646 = vmul.f32 %v2639, %v2645
      %v2647 = vadd.f32 %v2646, 0.18741608
      %v2648 = vmul.f32 %v2639, %v2647
      %v2649 = vadd.f32 %v2648, 1.1283791
      %v2650 = vmul.f32 %v2271, %v2649
      %v2651 = vmul.f32 %v2639, 3.8918573e-05
      %v2652 = vadd.f32 %v2651, 0.001143296
      %v2653 = vmul.f32 %v2639, %v2652
      %v2654 = vadd.f32 %v2653, 0.014752088
      %v2655 = vmul.f32 %v2639, %v2654
      %v2656 = vadd.f32 %v2655, 0.112945676
      %v2657 = vmul.f32 %v2639, %v2656
      %v2658 = vadd.f32 %v2657, 0.4994258
      %v2659 = vmul.f32 %v2639, %v2658
      %v2660 = vadd.f32 %v2659, 1.0
      %v2661 = vrcp.pop %v2660
      %v2662 = vmul.f32 %v2660, %v2661
      %v2663 = vsub.f32 1.0, %v2662
      %v2664 = vmul.f32 %v2661, %v2663
      %v2665 = vadd.f32 %v2661, %v2664
      %vm2666 = vweird.f32 %v2660
      %vm2667 = vweird.f32 %v2661
      %vm2668 = vmor %vm2666, %vm2667
      %v2669 = vsel %vm2668, %v2661, %v2665
      %v2670 = vand.u32 2147483647, %v2660
      %vm2671 = vcmp.eq.f32.partialorder %v2670, 8.507059e+37
      %v2672 = vand.u32 %v2660, 2147483648
      %v2673 = vor.u32 1.1754944e-38, %v2672
      %v2674 = vsel %vm2671, %v2673, %v2669
      %v2675 = vmul.f32 %v2650, %v2674
      %v2676 = vmin.f32 %v2675, 1.0
      %v2677 = vmax.f32 %v2676, -1.0
      %v2678 = vmul.f32 %v2272, %v2272
      %v2679 = vmin.f32 16.0, %v2678
      %v2680 = vmul.f32 %v2679, 2.1237322e-06
      %v2681 = vadd.f32 %v2680, 0.00028619796
      %v2682 = vmul.f32 %v2679, %v2681
      %v2683 = vadd.f32 %v2682, 0.0036580483
      %v2684 = vmul.f32 %v2679, %v2683
      %v2685 = vadd.f32 %v2684, 0.05243302
      %v2686 = vmul.f32 %v2679, %v2685
      %v2687 = vadd.f32 %v2686, 0.18741608
      %v2688 = vmul.f32 %v2679, %v2687
      %v2689 = vadd.f32 %v2688, 1.1283791
      %v2690 = vmul.f32 %v2272, %v2689
      %v2691 = vmul.f32 %v2679, 3.8918573e-05
      %v2692 = vadd.f32 %v2691, 0.001143296
      %v2693 = vmul.f32 %v2679, %v2692
      %v2694 = vadd.f32 %v2693, 0.014752088
      %v2695 = vmul.f32 %v2679, %v2694
      %v2696 = vadd.f32 %v2695, 0.112945676
      %v2697 = vmul.f32 %v2679, %v2696
      %v2698 = vadd.f32 %v2697, 0.4994258
      %v2699 = vmul.f32 %v2679, %v2698
      %v2700 = vadd.f32 %v2699, 1.0
      %v2701 = vrcp.pop %v2700
      %v2702 = vmul.f32 %v2700, %v2701
      %v2703 = vsub.f32 1.0, %v2702
      %v2704 = vmul.f32 %v2701, %v2703
      %v2705 = vadd.f32 %v2701, %v2704
      %vm2706 = vweird.f32 %v2700
      %vm2707 = vweird.f32 %v2701
      %vm2708 = vmor %vm2706, %vm2707
      %v2709 = vsel %vm2708, %v2701, %v2705
      %v2710 = vand.u32 2147483647, %v2700
      %vm2711 = vcmp.eq.f32.partialorder %v2710, 8.507059e+37
      %v2712 = vand.u32 %v2700, 2147483648
      %v2713 = vor.u32 1.1754944e-38, %v2712
      %v2714 = vsel %vm2711, %v2713, %v2709
      %v2715 = vmul.f32 %v2690, %v2714
      %v2716 = vmin.f32 %v2715, 1.0
      %v2717 = vmax.f32 %v2716, -1.0
      %v2718 = vmul.f32 %v2273, %v2273
      %v2719 = vmin.f32 16.0, %v2718
      %v2720 = vmul.f32 %v2719, 2.1237322e-06
      %v2721 = vadd.f32 %v2720, 0.00028619796
      %v2722 = vmul.f32 %v2719, %v2721
      %v2723 = vadd.f32 %v2722, 0.0036580483
      %v2724 = vmul.f32 %v2719, %v2723
      %v2725 = vadd.f32 %v2724, 0.05243302
      %v2726 = vmul.f32 %v2719, %v2725
      %v2727 = vadd.f32 %v2726, 0.18741608
      %v2728 = vmul.f32 %v2719, %v2727
      %v2729 = vadd.f32 %v2728, 1.1283791
      %v2730 = vmul.f32 %v2273, %v2729
      %v2731 = vmul.f32 %v2719, 3.8918573e-05
      %v2732 = vadd.f32 %v2731, 0.001143296
      %v2733 = vmul.f32 %v2719, %v2732
      %v2734 = vadd.f32 %v2733, 0.014752088
      %v2735 = vmul.f32 %v2719, %v2734
      %v2736 = vadd.f32 %v2735, 0.112945676
      %v2737 = vmul.f32 %v2719, %v2736
      %v2738 = vadd.f32 %v2737, 0.4994258
      %v2739 = vmul.f32 %v2719, %v2738
      %v2740 = vadd.f32 %v2739, 1.0
      %v2741 = vrcp.pop %v2740
      %v2742 = vmul.f32 %v2740, %v2741
      %v2743 = vsub.f32 1.0, %v2742
      %v2744 = vmul.f32 %v2741, %v2743
      %v2745 = vadd.f32 %v2741, %v2744
      %vm2746 = vweird.f32 %v2740
      %vm2747 = vweird.f32 %v2741
      %vm2748 = vmor %vm2746, %vm2747
      %v2749 = vsel %vm2748, %v2741, %v2745
      %v2750 = vand.u32 2147483647, %v2740
      %vm2751 = vcmp.eq.f32.partialorder %v2750, 8.507059e+37
      %v2752 = vand.u32 %v2740, 2147483648
      %v2753 = vor.u32 1.1754944e-38, %v2752
      %v2754 = vsel %vm2751, %v2753, %v2749
      %v2755 = vmul.f32 %v2730, %v2754
      %v2756 = vmin.f32 %v2755, 1.0
      %v2757 = vmax.f32 %v2756, -1.0
      %v2758 = vmul.f32 %v2274, %v2274
      %v2759 = vmin.f32 16.0, %v2758
      %v2760 = vmul.f32 %v2759, 2.1237322e-06
      %v2761 = vadd.f32 %v2760, 0.00028619796
      %v2762 = vmul.f32 %v2759, %v2761
      %v2763 = vadd.f32 %v2762, 0.0036580483
      %v2764 = vmul.f32 %v2759, %v2763
      %v2765 = vadd.f32 %v2764, 0.05243302
      %v2766 = vmul.f32 %v2759, %v2765
      %v2767 = vadd.f32 %v2766, 0.18741608
      %v2768 = vmul.f32 %v2759, %v2767
      %v2769 = vadd.f32 %v2768, 1.1283791
      %v2770 = vmul.f32 %v2274, %v2769
      %v2771 = vmul.f32 %v2759, 3.8918573e-05
      %v2772 = vadd.f32 %v2771, 0.001143296
      %v2773 = vmul.f32 %v2759, %v2772
      %v2774 = vadd.f32 %v2773, 0.014752088
      %v2775 = vmul.f32 %v2759, %v2774
      %v2776 = vadd.f32 %v2775, 0.112945676
      %v2777 = vmul.f32 %v2759, %v2776
      %v2778 = vadd.f32 %v2777, 0.4994258
      %v2779 = vmul.f32 %v2759, %v2778
      %v2780 = vadd.f32 %v2779, 1.0
      %v2781 = vrcp.pop %v2780
      %v2782 = vmul.f32 %v2780, %v2781
      %v2783 = vsub.f32 1.0, %v2782
      %v2784 = vmul.f32 %v2781, %v2783
      %v2785 = vadd.f32 %v2781, %v2784
      %vm2786 = vweird.f32 %v2780
      %vm2787 = vweird.f32 %v2781
      %vm2788 = vmor %vm2786, %vm2787
      %v2789 = vsel %vm2788, %v2781, %v2785
      %v2790 = vand.u32 2147483647, %v2780
      %vm2791 = vcmp.eq.f32.partialorder %v2790, 8.507059e+37
      %v2792 = vand.u32 %v2780, 2147483648
      %v2793 = vor.u32 1.1754944e-38, %v2792
      %v2794 = vsel %vm2791, %v2793, %v2789
      %v2795 = vmul.f32 %v2770, %v2794
      %v2796 = vmin.f32 %v2795, 1.0
      %v2797 = vmax.f32 %v2796, -1.0
      %v2798 = vmul.f32 %v2275, %v2275
      %v2799 = vmin.f32 16.0, %v2798
      %v2800 = vmul.f32 %v2799, 2.1237322e-06
      %v2801 = vadd.f32 %v2800, 0.00028619796
      %v2802 = vmul.f32 %v2799, %v2801
      %v2803 = vadd.f32 %v2802, 0.0036580483
      %v2804 = vmul.f32 %v2799, %v2803
      %v2805 = vadd.f32 %v2804, 0.05243302
      %v2806 = vmul.f32 %v2799, %v2805
      %v2807 = vadd.f32 %v2806, 0.18741608
      %v2808 = vmul.f32 %v2799, %v2807
      %v2809 = vadd.f32 %v2808, 1.1283791
      %v2810 = vmul.f32 %v2275, %v2809
      %v2811 = vmul.f32 %v2799, 3.8918573e-05
      %v2812 = vadd.f32 %v2811, 0.001143296
      %v2813 = vmul.f32 %v2799, %v2812
      %v2814 = vadd.f32 %v2813, 0.014752088
      %v2815 = vmul.f32 %v2799, %v2814
      %v2816 = vadd.f32 %v2815, 0.112945676
      %v2817 = vmul.f32 %v2799, %v2816
      %v2818 = vadd.f32 %v2817, 0.4994258
      %v2819 = vmul.f32 %v2799, %v2818
      %v2820 = vadd.f32 %v2819, 1.0
      %v2821 = vrcp.pop %v2820
      %v2822 = vmul.f32 %v2820, %v2821
      %v2823 = vsub.f32 1.0, %v2822
      %v2824 = vmul.f32 %v2821, %v2823
      %v2825 = vadd.f32 %v2821, %v2824
      %vm2826 = vweird.f32 %v2820
      %vm2827 = vweird.f32 %v2821
      %vm2828 = vmor %vm2826, %vm2827
      %v2829 = vsel %vm2828, %v2821, %v2825
      %v2830 = vand.u32 2147483647, %v2820
      %vm2831 = vcmp.eq.f32.partialorder %v2830, 8.507059e+37
      %v2832 = vand.u32 %v2820, 2147483648
      %v2833 = vor.u32 1.1754944e-38, %v2832
      %v2834 = vsel %vm2831, %v2833, %v2829
      %v2835 = vmul.f32 %v2810, %v2834
      %v2836 = vmin.f32 %v2835, 1.0
      %v2837 = vmax.f32 %v2836, -1.0
      %v2838 = vmul.f32 %v2276, %v2276
      %v2839 = vmin.f32 16.0, %v2838
      %v2840 = vmul.f32 %v2839, 2.1237322e-06
      %v2841 = vadd.f32 %v2840, 0.00028619796
      %v2842 = vmul.f32 %v2839, %v2841
      %v2843 = vadd.f32 %v2842, 0.0036580483
      %v2844 = vmul.f32 %v2839, %v2843
      %v2845 = vadd.f32 %v2844, 0.05243302
      %v2846 = vmul.f32 %v2839, %v2845
      %v2847 = vadd.f32 %v2846, 0.18741608
      %v2848 = vmul.f32 %v2839, %v2847
      %v2849 = vadd.f32 %v2848, 1.1283791
      %v2850 = vmul.f32 %v2276, %v2849
      %v2851 = vmul.f32 %v2839, 3.8918573e-05
      %v2852 = vadd.f32 %v2851, 0.001143296
      %v2853 = vmul.f32 %v2839, %v2852
      %v2854 = vadd.f32 %v2853, 0.014752088
      %v2855 = vmul.f32 %v2839, %v2854
      %v2856 = vadd.f32 %v2855, 0.112945676
      %v2857 = vmul.f32 %v2839, %v2856
      %v2858 = vadd.f32 %v2857, 0.4994258
      %v2859 = vmul.f32 %v2839, %v2858
      %v2860 = vadd.f32 %v2859, 1.0
      %v2861 = vrcp.pop %v2860
      %v2862 = vmul.f32 %v2860, %v2861
      %v2863 = vsub.f32 1.0, %v2862
      %v2864 = vmul.f32 %v2861, %v2863
      %v2865 = vadd.f32 %v2861, %v2864
      %vm2866 = vweird.f32 %v2860
      %vm2867 = vweird.f32 %v2861
      %vm2868 = vmor %vm2866, %vm2867
      %v2869 = vsel %vm2868, %v2861, %v2865
      %v2870 = vand.u32 2147483647, %v2860
      %vm2871 = vcmp.eq.f32.partialorder %v2870, 8.507059e+37
      %v2872 = vand.u32 %v2860, 2147483648
      %v2873 = vor.u32 1.1754944e-38, %v2872
      %v2874 = vsel %vm2871, %v2873, %v2869
      %v2875 = vmul.f32 %v2850, %v2874
      %v2876 = vmin.f32 %v2875, 1.0
      %v2877 = vmax.f32 %v2876, -1.0
      %v2878 = vmul.f32 %v2277, %v2277
      %v2879 = vmin.f32 16.0, %v2878
      %v2880 = vmul.f32 %v2879, 2.1237322e-06
      %v2881 = vadd.f32 %v2880, 0.00028619796
      %v2882 = vmul.f32 %v2879, %v2881
      %v2883 = vadd.f32 %v2882, 0.0036580483
      %v2884 = vmul.f32 %v2879, %v2883
      %v2885 = vadd.f32 %v2884, 0.05243302
      %v2886 = vmul.f32 %v2879, %v2885
      %v2887 = vadd.f32 %v2886, 0.18741608
      %v2888 = vmul.f32 %v2879, %v2887
      %v2889 = vadd.f32 %v2888, 1.1283791
      %v2890 = vmul.f32 %v2277, %v2889
      %v2891 = vmul.f32 %v2879, 3.8918573e-05
      %v2892 = vadd.f32 %v2891, 0.001143296
      %v2893 = vmul.f32 %v2879, %v2892
      %v2894 = vadd.f32 %v2893, 0.014752088
      %v2895 = vmul.f32 %v2879, %v2894
      %v2896 = vadd.f32 %v2895, 0.112945676
      %v2897 = vmul.f32 %v2879, %v2896
      %v2898 = vadd.f32 %v2897, 0.4994258
      %v2899 = vmul.f32 %v2879, %v2898
      %v2900 = vadd.f32 %v2899, 1.0
      %v2901 = vrcp.pop %v2900
      %v2902 = vmul.f32 %v2900, %v2901
      %v2903 = vsub.f32 1.0, %v2902
      %v2904 = vmul.f32 %v2901, %v2903
      %v2905 = vadd.f32 %v2901, %v2904
      %vm2906 = vweird.f32 %v2900
      %vm2907 = vweird.f32 %v2901
      %vm2908 = vmor %vm2906, %vm2907
      %v2909 = vsel %vm2908, %v2901, %v2905
      %v2910 = vand.u32 2147483647, %v2900
      %vm2911 = vcmp.eq.f32.partialorder %v2910, 8.507059e+37
      %v2912 = vand.u32 %v2900, 2147483648
      %v2913 = vor.u32 1.1754944e-38, %v2912
      %v2914 = vsel %vm2911, %v2913, %v2909
      %v2915 = vmul.f32 %v2890, %v2914
      %v2916 = vmin.f32 %v2915, 1.0
      %v2917 = vmax.f32 %v2916, -1.0
      %v2918 = vadd.f32 %v2317, 1.0
      %v2919 = vadd.f32 %v2357, 1.0
      %v2920 = vadd.f32 %v2397, 1.0
      %v2921 = vadd.f32 %v2437, 1.0
      %v2922 = vadd.f32 %v2477, 1.0
      %v2923 = vadd.f32 %v2517, 1.0
      %v2924 = vadd.f32 %v2557, 1.0
      %v2925 = vadd.f32 %v2597, 1.0
      %v2926 = vadd.f32 %v2637, 1.0
      %v2927 = vadd.f32 %v2677, 1.0
      %v2928 = vadd.f32 %v2717, 1.0
      %v2929 = vadd.f32 %v2757, 1.0
      %v2930 = vadd.f32 %v2797, 1.0
      %v2931 = vadd.f32 %v2837, 1.0
      %v2932 = vadd.f32 %v2877, 1.0
      %v2933 = vadd.f32 %v2917, 1.0
      %v2934 = vmul.f32 %v2246, %v2918
      %v2935 = vmul.f32 %v2247, %v2919
      %v2936 = vmul.f32 %v2248, %v2920
      %v2937 = vmul.f32 %v2249, %v2921
      %v2938 = vmul.f32 %v2250, %v2922
      %v2939 = vmul.f32 %v2251, %v2923
      %v2940 = vmul.f32 %v2252, %v2924
      %v2941 = vmul.f32 %v2253, %v2925
      %v2942 = vmul.f32 %v2254, %v2926
      %v2943 = vmul.f32 %v2255, %v2927
      %v2944 = vmul.f32 %v2256, %v2928
      %v2945 = vmul.f32 %v2257, %v2929
      %v2946 = vmul.f32 %v2258, %v2930
      %v2947 = vmul.f32 %v2259, %v2931
      %v2948 = vmul.f32 %v2260, %v2932
      %v2949 = vmul.f32 %v2261, %v2933
      %v2950 = vpack.c.bf16 %v2938, %v2934
      %v2951 = vpack.c.bf16 %v2939, %v2935
      %v2952 = vpack.c.bf16 %v2940, %v2936
      %v2953 = vpack.c.bf16 %v2941, %v2937
      %v2954 = vpack.c.bf16 %v2946, %v2942
      %v2955 = vpack.c.bf16 %v2947, %v2943
      %v2956 = vpack.c.bf16 %v2948, %v2944
      %v2957 = vpack.c.bf16 %v2949, %v2945
      %v2958 = vld [vmem:[#allocation21] sm:$0xf]
      %v2959 = vld [vmem:[#allocation21 + $0x4] sm:$0xf]
      %v2960 = vld [vmem:[#allocation21 + $0x8] sm:$0xf]
      %v2961 = vld [vmem:[#allocation21 + $0xc] sm:$0xf]
      %v2962 = vld [vmem:[#allocation21 + $0x10] sm:$0xf]
      %v2963 = vld [vmem:[#allocation21 + $0x14] sm:$0xf]
      %v2964 = vld [vmem:[#allocation21 + $0x18] sm:$0xf]
      %v2965 = vld [vmem:[#allocation21 + $0x1c] sm:$0xf]
      %v2966 = vld [vmem:[#allocation21 + $0x20] sm:$0xf]
      %v2967 = vld [vmem:[#allocation21 + $0x24] sm:$0xf]
      %v2968 = vld [vmem:[#allocation21 + $0x28] sm:$0xf]
      %v2969 = vld [vmem:[#allocation21 + $0x2c] sm:$0xf]
      %v2970 = vld [vmem:[#allocation21 + $0x30] sm:$0xf]
      %v2971 = vld [vmem:[#allocation21 + $0x34] sm:$0xf]
      %v2972 = vld [vmem:[#allocation21 + $0x38] sm:$0xf]
      %v2973 = vld [vmem:[#allocation21 + $0x3c] sm:$0xf]
      %v2974 = vld [vmem:[#allocation21 + $0x40] sm:$0xf]
      %v2975 = vld [vmem:[#allocation21 + $0x44] sm:$0xf]
      %v2976 = vld [vmem:[#allocation21 + $0x48] sm:$0xf]
      %v2977 = vld [vmem:[#allocation21 + $0x4c] sm:$0xf]
      %v2978 = vld [vmem:[#allocation21 + $0x50] sm:$0xf]
      %v2979 = vld [vmem:[#allocation21 + $0x54] sm:$0xf]
      %v2980 = vld [vmem:[#allocation21 + $0x58] sm:$0xf]
      %v2981 = vld [vmem:[#allocation21 + $0x5c] sm:$0xf]
      %v2982 = vld [vmem:[#allocation21 + $0x60] sm:$0xf]
      %v2983 = vld [vmem:[#allocation21 + $0x64] sm:$0xf]
      %v2984 = vld [vmem:[#allocation21 + $0x68] sm:$0xf]
      %v2985 = vld [vmem:[#allocation21 + $0x6c] sm:$0xf]
      %v2986 = vld [vmem:[#allocation21 + $0x70] sm:$0xf]
      %v2987 = vld [vmem:[#allocation21 + $0x74] sm:$0xf]
      %v2988 = vld [vmem:[#allocation21 + $0x78] sm:$0xf]
      %v2989 = vld [vmem:[#allocation21 + $0x7c] sm:$0xf]
      %v2990 = vld [vmem:[#allocation21 + $0x80] sm:$0xf]
      %v2991 = vld [vmem:[#allocation21 + $0x84] sm:$0xf]
      %v2992 = vld [vmem:[#allocation21 + $0x88] sm:$0xf]
      %v2993 = vld [vmem:[#allocation21 + $0x8c] sm:$0xf]
      %v2994 = vld [vmem:[#allocation21 + $0x90] sm:$0xf]
      %v2995 = vld [vmem:[#allocation21 + $0x94] sm:$0xf]
      %v2996 = vld [vmem:[#allocation21 + $0x98] sm:$0xf]
      %v2997 = vld [vmem:[#allocation21 + $0x9c] sm:$0xf]
      %v2998 = vld [vmem:[#allocation21 + $0xa0] sm:$0xf]
      %v2999 = vld [vmem:[#allocation21 + $0xa4] sm:$0xf]
      %v3000 = vld [vmem:[#allocation21 + $0xa8] sm:$0xf]
      %v3001 = vld [vmem:[#allocation21 + $0xac] sm:$0xf]
      %v3002 = vld [vmem:[#allocation21 + $0xb0] sm:$0xf]
      %v3003 = vld [vmem:[#allocation21 + $0xb4] sm:$0xf]
      %v3004 = vld [vmem:[#allocation21 + $0xb8] sm:$0xf]
      %v3005 = vld [vmem:[#allocation21 + $0xbc] sm:$0xf]
      %v3006 = vld [vmem:[#allocation21 + $0xc0] sm:$0xf]
      %v3007 = vld [vmem:[#allocation21 + $0xc4] sm:$0xf]
      %v3008 = vld [vmem:[#allocation21 + $0xc8] sm:$0xf]
      %v3009 = vld [vmem:[#allocation21 + $0xcc] sm:$0xf]
      %v3010 = vld [vmem:[#allocation21 + $0xd0] sm:$0xf]
      %v3011 = vld [vmem:[#allocation21 + $0xd4] sm:$0xf]
      %v3012 = vld [vmem:[#allocation21 + $0xd8] sm:$0xf]
      %v3013 = vld [vmem:[#allocation21 + $0xdc] sm:$0xf]
      %v3014 = vld [vmem:[#allocation21 + $0xe0] sm:$0xf]
      %v3015 = vld [vmem:[#allocation21 + $0xe4] sm:$0xf]
      %v3016 = vld [vmem:[#allocation21 + $0xe8] sm:$0xf]
      %v3017 = vld [vmem:[#allocation21 + $0xec] sm:$0xf]
      %v3018 = vld [vmem:[#allocation21 + $0xf0] sm:$0xf]
      %v3019 = vld [vmem:[#allocation21 + $0xf4] sm:$0xf]
      %v3020 = vld [vmem:[#allocation21 + $0xf8] sm:$0xf]
      %v3021 = vld [vmem:[#allocation21 + $0xfc] sm:$0xf]
      %v3086 = vunpack.c.l.b16 %v2958
      %v3087 = vunpack.c.l.b16 %v2959
      %v3088 = vunpack.c.l.b16 %v2960
      %v3089 = vunpack.c.l.b16 %v2961
      %v3090 = vunpack.c.l.b16 %v2962
      %v3091 = vunpack.c.l.b16 %v2963
      %v3092 = vunpack.c.l.b16 %v2964
      %v3093 = vunpack.c.l.b16 %v2965
      %v3094 = vunpack.c.l.b16 %v2966
      %v3095 = vunpack.c.l.b16 %v2967
      %v3096 = vunpack.c.l.b16 %v2968
      %v3097 = vunpack.c.l.b16 %v2969
      %v3098 = vunpack.c.l.b16 %v2970
      %v3099 = vunpack.c.l.b16 %v2971
      %v3100 = vunpack.c.l.b16 %v2972
      %v3101 = vunpack.c.l.b16 %v2973
      %v3102 = vunpack.c.l.b16 %v2974
      %v3103 = vunpack.c.l.b16 %v2975
      %v3104 = vunpack.c.l.b16 %v2976
      %v3105 = vunpack.c.l.b16 %v2977
      %v3106 = vunpack.c.l.b16 %v2978
      %v3107 = vunpack.c.l.b16 %v2979
      %v3108 = vunpack.c.l.b16 %v2980
      %v3109 = vunpack.c.l.b16 %v2981
      %v3110 = vunpack.c.l.b16 %v2982
      %v3111 = vunpack.c.l.b16 %v2983
      %v3112 = vunpack.c.l.b16 %v2984
      %v3113 = vunpack.c.l.b16 %v2985
      %v3114 = vunpack.c.l.b16 %v2986
      %v3115 = vunpack.c.l.b16 %v2987
      %v3116 = vunpack.c.l.b16 %v2988
      %v3117 = vunpack.c.l.b16 %v2989
      %v3118 = vunpack.c.l.b16 %v2990
      %v3119 = vunpack.c.l.b16 %v2991
      %v3120 = vunpack.c.l.b16 %v2992
      %v3121 = vunpack.c.l.b16 %v2993
      %v3122 = vunpack.c.l.b16 %v2994
      %v3123 = vunpack.c.l.b16 %v2995
      %v3124 = vunpack.c.l.b16 %v2996
      %v3125 = vunpack.c.l.b16 %v2997
      %v3126 = vunpack.c.l.b16 %v2998
      %v3127 = vunpack.c.l.b16 %v2999
      %v3128 = vunpack.c.l.b16 %v3000
      %v3129 = vunpack.c.l.b16 %v3001
      %v3130 = vunpack.c.l.b16 %v3002
      %v3131 = vunpack.c.l.b16 %v3003
      %v3132 = vunpack.c.l.b16 %v3004
      %v3133 = vunpack.c.l.b16 %v3005
      %v3134 = vunpack.c.l.b16 %v3006
      %v3135 = vunpack.c.l.b16 %v3007
      %v3136 = vunpack.c.l.b16 %v3008
      %v3137 = vunpack.c.l.b16 %v3009
      %v3138 = vunpack.c.l.b16 %v3010
      %v3139 = vunpack.c.l.b16 %v3011
      %v3140 = vunpack.c.l.b16 %v3012
      %v3141 = vunpack.c.l.b16 %v3013
      %v3142 = vunpack.c.l.b16 %v3014
      %v3143 = vunpack.c.l.b16 %v3015
      %v3144 = vunpack.c.l.b16 %v3016
      %v3145 = vunpack.c.l.b16 %v3017
      %v3146 = vunpack.c.l.b16 %v3018
      %v3147 = vunpack.c.l.b16 %v3019
      %v3148 = vunpack.c.l.b16 %v3020
      %v3149 = vunpack.c.l.b16 %v3021
      %v3150 = vpack.c.b16 %v3087, %v3086
      %v3151 = vpack.c.b16 %v3089, %v3088
      %v3152 = vpack.c.b16 %v3091, %v3090
      %v3153 = vpack.c.b16 %v3093, %v3092
      %v3154 = vpack.c.b16 %v3095, %v3094
      %v3155 = vpack.c.b16 %v3097, %v3096
      %v3156 = vpack.c.b16 %v3099, %v3098
      %v3157 = vpack.c.b16 %v3101, %v3100
      %v3158 = vpack.c.b16 %v3103, %v3102
      %v3159 = vpack.c.b16 %v3105, %v3104
      %v3160 = vpack.c.b16 %v3107, %v3106
      %v3161 = vpack.c.b16 %v3109, %v3108
      %v3162 = vpack.c.b16 %v3111, %v3110
      %v3163 = vpack.c.b16 %v3113, %v3112
      %v3164 = vpack.c.b16 %v3115, %v3114
      %v3165 = vpack.c.b16 %v3117, %v3116
      %v3166 = vpack.c.b16 %v3119, %v3118
      %v3167 = vpack.c.b16 %v3121, %v3120
      %v3168 = vpack.c.b16 %v3123, %v3122
      %v3169 = vpack.c.b16 %v3125, %v3124
      %v3170 = vpack.c.b16 %v3127, %v3126
      %v3171 = vpack.c.b16 %v3129, %v3128
      %v3172 = vpack.c.b16 %v3131, %v3130
      %v3173 = vpack.c.b16 %v3133, %v3132
      %v3174 = vpack.c.b16 %v3135, %v3134
      %v3175 = vpack.c.b16 %v3137, %v3136
      %v3176 = vpack.c.b16 %v3139, %v3138
      %v3177 = vpack.c.b16 %v3141, %v3140
      %v3178 = vpack.c.b16 %v3143, %v3142
      %v3179 = vpack.c.b16 %v3145, %v3144
      %v3180 = vpack.c.b16 %v3147, %v3146
      %v3181 = vpack.c.b16 %v3149, %v3148
      %3214 = vmatpush.bf16.msra.mxu0 %v3157
      %3215 = vmatpush.bf16.msra.mxu0 %v3156
      %3216 = vmatpush.bf16.msra.mxu0 %v3155
      %3217 = vmatpush.bf16.msra.mxu0 %v3154
      %3218 = vmatpush.bf16.msra.mxu0 %v3153
      %3219 = vmatpush.bf16.msra.mxu0 %v3152
      %3220 = vmatpush.bf16.msra.mxu0 %v3151
      %3221 = vmatpush.bf16.msra.mxu0 %v3150
      %3222 = vmatmul.bf16.gmra.mxu0 %v2950
      %v3223 = vpop.f32.mrf.mxu0
      %v3224 = vadd.f32 0.0, %v3223
      %v3225 = vpop.f32.mrf.mxu0
      %3226 = vmatmul.bf16.gmra.mxu0 %v2954
      %v3227 = vpop.f32.mrf.mxu0
      %v3228 = vadd.f32 0.0, %v3227
      %v3229 = vpop.f32.mrf.mxu0
      %3230 = vdwg.mxu0
      %3231 = vmatpush.bf16.msra.mxu0 %v3165
      %3232 = vmatpush.bf16.msra.mxu0 %v3164
      %3233 = vmatpush.bf16.msra.mxu0 %v3163
      %3234 = vmatpush.bf16.msra.mxu0 %v3162
      %3235 = vmatpush.bf16.msra.mxu0 %v3161
      %3236 = vmatpush.bf16.msra.mxu0 %v3160
      %3237 = vmatpush.bf16.msra.mxu0 %v3159
      %3238 = vmatpush.bf16.msra.mxu0 %v3158
      %3239 = vmatmul.bf16.gmra.mxu0 %v2951
      %v3240 = vpop.f32.mrf.mxu0
      %v3241 = vadd.f32 %v3224, %v3240
      %v3242 = vpop.f32.mrf.mxu0
      %3243 = vmatmul.bf16.gmra.mxu0 %v2955
      %v3244 = vpop.f32.mrf.mxu0
      %v3245 = vadd.f32 %v3228, %v3244
      %v3246 = vpop.f32.mrf.mxu0
      %3247 = vdwg.mxu0
      %3248 = vmatpush.bf16.msra.mxu0 %v3173
      %3249 = vmatpush.bf16.msra.mxu0 %v3172
      %3250 = vmatpush.bf16.msra.mxu0 %v3171
      %3251 = vmatpush.bf16.msra.mxu0 %v3170
      %3252 = vmatpush.bf16.msra.mxu0 %v3169
      %3253 = vmatpush.bf16.msra.mxu0 %v3168
      %3254 = vmatpush.bf16.msra.mxu0 %v3167
      %3255 = vmatpush.bf16.msra.mxu0 %v3166
      %3256 = vmatmul.bf16.gmra.mxu0 %v2952
      %v3257 = vpop.f32.mrf.mxu0
      %v3258 = vadd.f32 %v3241, %v3257
      %v3259 = vpop.f32.mrf.mxu0
      %3260 = vmatmul.bf16.gmra.mxu0 %v2956
      %v3261 = vpop.f32.mrf.mxu0
      %v3262 = vadd.f32 %v3245, %v3261
      %v3263 = vpop.f32.mrf.mxu0
      %3264 = vdwg.mxu0
      %3265 = vmatpush.bf16.msra.mxu0 %v3181
      %3266 = vmatpush.bf16.msra.mxu0 %v3180
      %3267 = vmatpush.bf16.msra.mxu0 %v3179
      %3268 = vmatpush.bf16.msra.mxu0 %v3178
      %3269 = vmatpush.bf16.msra.mxu0 %v3177
      %3270 = vmatpush.bf16.msra.mxu0 %v3176
      %3271 = vmatpush.bf16.msra.mxu0 %v3175
      %3272 = vmatpush.bf16.msra.mxu0 %v3174
      %3273 = vmatmul.bf16.gmra.mxu0 %v2953
      %v3274 = vpop.f32.mrf.mxu0
      %v3275 = vadd.f32 %v3258, %v3274
      %v3276 = vpop.f32.mrf.mxu0
      %3277 = vmatmul.bf16.gmra.mxu0 %v2957
      %v3278 = vpop.f32.mrf.mxu0
      %v3279 = vadd.f32 %v3262, %v3278
      %v3280 = vpop.f32.mrf.mxu0
      %3281 = vdwg.mxu0
      %v3282 = vld [vmem:[%s16] sm:$0x1]
      %v3284 = vperm.slane %v3282, 0
      %v3286 = vadd.f32 %v3275, %v3284
      %v3287 = vadd.f32 %v3279, %v3284
      %v3288 = vadd.f32 %v1962, %v3286
      %v3289 = vadd.f32 %v1964, %v3287
      %v3290 = vld [vmem:[%s17] sm:$0x1]
      %v3291 = vld [vmem:[%s18] sm:$0x1]
      %3292 = vadd.xlane.f32.xlu0 %v3288
      %v3293 = vpop.xlane.xlu0 %3292
      %3294 = vadd.xlane.f32.xlu0 %v3289
      %v3295 = vpop.xlane.xlu0 %3294
      %v3296 = vmul.f32 %v3293, %v1244
      %v3297 = vmul.f32 %v3295, %v1244
      %v3298 = vsub.f32 %v3288, %v3296
      %v3299 = vsub.f32 %v3289, %v3297
      %v3300 = vmul.f32 %v3298, %v3298
      %v3301 = vmul.f32 %v3299, %v3299
      %3302 = vadd.xlane.f32.xlu0 %v3300
      %v3303 = vpop.xlane.xlu0 %3302
      %3304 = vadd.xlane.f32.xlu0 %v3301
      %v3305 = vpop.xlane.xlu0 %3304
      %v3306 = vmul.f32 %v3303, %v1244
      %v3307 = vmul.f32 %v3305, %v1244
      %v3308 = vadd.f32 %v3306, 1e-05
      %v3309 = vadd.f32 %v3307, 1e-05
      %v3310 = vrsqrt.pop %v3308
      %v3311 = vmul.f32 %v3310, %v3308
      %v3312 = vmul.f32 %v3311, %v3310
      %v3313 = vmul.f32 0.5, %v3312
      %v3314 = vsub.f32 1.5, %v3313
      %v3315 = vmul.f32 %v3310, %v3314
      %vm3316 = vweird.f32 %v3308
      %vm3317 = vweird.f32 %v3310
      %vm3318 = vmor %vm3316, %vm3317
      %v3319 = vsel %vm3318, %v3310, %v3315
      %v3320 = vrsqrt.pop %v3309
      %v3321 = vmul.f32 %v3320, %v3309
      %v3322 = vmul.f32 %v3321, %v3320
      %v3323 = vmul.f32 0.5, %v3322
      %v3324 = vsub.f32 1.5, %v3323
      %v3325 = vmul.f32 %v3320, %v3324
      %vm3326 = vweird.f32 %v3309
      %vm3327 = vweird.f32 %v3320
      %vm3328 = vmor %vm3326, %vm3327
      %v3329 = vsel %vm3328, %v3320, %v3325
      %v3330 = vmul.f32 %v3298, %v3319
      %v3331 = vmul.f32 %v3299, %v3329
      %v3333 = vperm.slane %v3290, 0
      %v3335 = vmul.f32 %v3330, %v3333
      %v3336 = vmul.f32 %v3331, %v3333
      %v3338 = vperm.slane %v3291, 0
      %v3340 = vadd.f32 %v3335, %v3338
      %v3341 = vadd.f32 %v3336, %v3338
      %v3342 = vpack.c.bf16 %v3340, %v3340
      %v3343 = vpack.c.bf16 %v3341, %v3341
      %v3344 = vld [vmem:[#allocation22] sm:$0xf]
      %v3345 = vld [vmem:[#allocation22 + $0x4] sm:$0xf]
      %v3346 = vld [vmem:[#allocation22 + $0x8] sm:$0xf]
      %v3347 = vld [vmem:[#allocation22 + $0xc] sm:$0xf]
      %v3348 = vld [vmem:[#allocation22 + $0x10] sm:$0xf]
      %v3349 = vld [vmem:[#allocation22 + $0x14] sm:$0xf]
      %v3350 = vld [vmem:[#allocation22 + $0x18] sm:$0xf]
      %v3351 = vld [vmem:[#allocation22 + $0x1c] sm:$0xf]
      %v3352 = vld [vmem:[#allocation22 + $0x20] sm:$0xf]
      %v3353 = vld [vmem:[#allocation22 + $0x24] sm:$0xf]
      %v3354 = vld [vmem:[#allocation22 + $0x28] sm:$0xf]
      %v3355 = vld [vmem:[#allocation22 + $0x2c] sm:$0xf]
      %v3356 = vld [vmem:[#allocation22 + $0x30] sm:$0xf]
      %v3357 = vld [vmem:[#allocation22 + $0x34] sm:$0xf]
      %v3358 = vld [vmem:[#allocation22 + $0x38] sm:$0xf]
      %v3359 = vld [vmem:[#allocation22 + $0x3c] sm:$0xf]
      %v3360 = vld [vmem:[%s20] sm:$0x1]
      %v3362 = vperm.slane %v3360, 0
      %v3366 = vunpack.c.l.b16 %v3342
      %v3367 = vunpack.c.l.b16 %v3343
      %v3368 = vrot.slane %v3367, 7
      %vm3369 = vcmask 1041409
      %v3370 = vsel %vm3369, %v3368, %v3366
      %v3371 = vpack.c.b16 %v3370, %v3370
      %v3389 = vunpack.c.l.b16 %v3344
      %v3390 = vunpack.c.l.b16 %v3345
      %v3391 = vunpack.c.l.b16 %v3346
      %v3392 = vunpack.c.l.b16 %v3347
      %v3393 = vunpack.c.l.b16 %v3348
      %v3394 = vunpack.c.l.b16 %v3349
      %v3395 = vunpack.c.l.b16 %v3350
      %v3396 = vunpack.c.l.b16 %v3351
      %v3397 = vunpack.c.l.b16 %v3352
      %v3398 = vunpack.c.l.b16 %v3353
      %v3399 = vunpack.c.l.b16 %v3354
      %v3400 = vunpack.c.l.b16 %v3355
      %v3401 = vunpack.c.l.b16 %v3356
      %v3402 = vunpack.c.l.b16 %v3357
      %v3403 = vunpack.c.l.b16 %v3358
      %v3404 = vunpack.c.l.b16 %v3359
      %v3405 = vpack.c.b16 %v3390, %v3389
      %v3406 = vpack.c.b16 %v3392, %v3391
      %v3407 = vpack.c.b16 %v3394, %v3393
      %v3408 = vpack.c.b16 %v3396, %v3395
      %v3409 = vpack.c.b16 %v3398, %v3397
      %v3410 = vpack.c.b16 %v3400, %v3399
      %v3411 = vpack.c.b16 %v3402, %v3401
      %v3412 = vpack.c.b16 %v3404, %v3403
      %3421 = vmatpush.bf16.msra.mxu0 %v3412
      %3422 = vmatpush.bf16.msra.mxu0 %v3411
      %3423 = vmatpush.bf16.msra.mxu0 %v3410
      %3424 = vmatpush.bf16.msra.mxu0 %v3409
      %3425 = vmatpush.bf16.msra.mxu0 %v3408
      %3426 = vmatpush.bf16.msra.mxu0 %v3407
      %3427 = vmatpush.bf16.msra.mxu0 %v3406
      %3428 = vmatpush.bf16.msra.mxu0 %v3405
      %3429 = vmatmul.bf16.gmra.mxu0 %v3371
      %v3430 = vpop.f32.mrf.mxu0
      %v3431 = vadd.f32 %v3362, %v3430
      %v3432 = vpop.f32.mrf.mxu0
      %3433 = vdwg.mxu0
      %v3434 = vld [vmem:[%s21] sm:$0x1]
      %v3435 = vld [vmem:[%s22] sm:$0x1]
      %v3436 = vsel %vm1234, %v3431, 0.0
      %3437 = vadd.xlane.f32.xlu0 %v3436
      %v3438 = vpop.xlane.xlu0 %3437
      %v3439 = vmul.f32 %v3438, %v1244
      %v3440 = vsub.f32 %v3431, %v3439
      %v3441 = vmul.f32 %v3440, %v3440
      %v3442 = vsel %vm1234, %v3441, 0.0
      %3443 = vadd.xlane.f32.xlu0 %v3442
      %v3444 = vpop.xlane.xlu0 %3443
      %v3445 = vmul.f32 %v3444, %v1244
      %v3446 = vadd.f32 %v3445, 1e-05
      %v3447 = vrsqrt.pop %v3446
      %v3448 = vmul.f32 %v3447, %v3446
      %v3449 = vmul.f32 %v3448, %v3447
      %v3450 = vmul.f32 0.5, %v3449
      %v3451 = vsub.f32 1.5, %v3450
      %v3452 = vmul.f32 %v3447, %v3451
      %vm3453 = vweird.f32 %v3446
      %vm3454 = vweird.f32 %v3447
      %vm3455 = vmor %vm3453, %vm3454
      %v3456 = vsel %vm3455, %v3447, %v3452
      %v3457 = vmul.f32 %v3440, %v3456
      %v3459 = vperm.slane %v3434, 0
      %v3461 = vmul.f32 %v3457, %v3459
      %v3463 = vperm.slane %v3435, 0
      %v3465 = vadd.f32 %v3461, %v3463
      %v3466 = vmax.f32 %v3465, 0.0
      %v3467 = vld [vmem:[%s23] sm:$0x1]
      %v3469 = vperm.slane %v3467, 0
      %v3471 = vmul.f32 %v3466, %v3469
      %v3472 = vsel %vm1234, %v3471, 0.0
      %3473 = vadd.xlane.f32.xlu0 %v3472
      %v3474 = vpop.xlane.xlu0 %3473
      %v3475 = vld [vmem:[#allocation3] sm:$0x1]
      %v3477 = vperm.slane %v3475, 0
      %v3479 = vadd.f32 %v3474, %v3477
      %3481 = vset.pattern.permute.xlu0 0
      %3482 = vperm.xlu0 %3481, %v3479
      %v3483 = vpop.permute.xlu0 %3482
      %3485 = vst [vmem:[#allocation24] sm:$0x3] %v3483
    $region157: #{tpu_custom_call.1} parent=1 // pred_fallthru
      _
    // Predicated region
    $region158: #{tpu_custom_call.1} parent=1 // pred_check
      _
    $region159: #{tpu_custom_call.1} parent=1 // pred_check_branch
      %3487 = sbr.rel (0) target = $region161
    $region160: #{tpu_custom_call.1} parent=1 // pred_region
      %3489 = vsyncadd [#allocation6], 0
      %s3491 = sshll.u32 [#allocation24], 4
      %s3492 = int_to_ptr.vmem [resolvable:$true] %s3491
      %s3493 = sshll.u32 %s25, 4
      %s3494 = int_to_ptr.hbm [resolvable:$true] %s3493
      %3496 = dma.vmem_to_hbm [thread:$0]  %s3492, 32, %s3494, [#allocation6]
    $region161: #{tpu_custom_call.1} parent=1 // pred_fallthru
      _
    // Predicated region
    $region162: #{tpu_custom_call.1} parent=1 // pred_check
      _
    $region163: #{tpu_custom_call.1} parent=1 // pred_check_branch
      %3498 = sbr.rel (0) target = $region165
    $region164: #{tpu_custom_call.1} parent=1 // pred_region
      %3500 = dma.done [#allocation6], 32
    $region165: #{tpu_custom_call.1} parent=1 // pred_fallthru
      _
    %3501 = vsyncpa [#allocation5], 1
    %3502 = vsyncpa [#allocation8], 1
    %3503 = vsyncpa [#allocation11], 1
    %3504 = vsyncpa [#allocation14], 1
    %3505 = vsyncpa [#allocation17], 1
    %3506 = vsyncpa [#allocation20], 1
    %3507 = vsyncpa [#allocation23], 1
    %3508 = vsyncpa [#allocation6], 1

</llo_original>
